<compile_context>
chip_gen: v7x
topology: tpu7x:2x2x1
jax: 0.10.0
libtpu: 0.0.40
codegen_flags: <defaults>
</compile_context>

<pallas_src>
import functools

import jax
import jax.numpy as jnp
from jax.experimental import pallas as pl
from jax.experimental.pallas import tpu as pltpu


_VMEM_LIMIT = 48 << 20  # < v7x 64 MiB physical VMEM; plenty of headroom on v5e/v6e (128 MiB).

# --------------------------------------------------------------------------- #
# 4-phase decomposition of ConvTranspose2d(kernel=4, stride=2, padding=1)
#
# out[2m+ry, 2n+rx, co] = sum_{taps, ci} xp[m+dy, n+dx, ci] * w[ci, co, ky, kx]
# where xp is the input zero-padded by 1 on each spatial side and, per phase
# (ry, rx), exactly 4 taps (dy, dx, ky, kx) contribute.
# --------------------------------------------------------------------------- #
_PHASE_TAPS = (
    ((1, 1, 1, 1), (1, 0, 1, 3), (0, 1, 3, 1), (0, 0, 3, 3)),  # (even row, even col)
    ((1, 2, 1, 0), (1, 1, 1, 2), (0, 2, 3, 0), (0, 1, 3, 2)),  # (even row, odd  col)
    ((2, 1, 0, 1), (2, 0, 0, 3), (1, 1, 2, 1), (1, 0, 2, 3)),  # (odd  row, even col)
    ((2, 2, 0, 0), (2, 1, 0, 2), (1, 2, 2, 0), (1, 1, 2, 2)),  # (odd  row, odd  col)
)


# --------------------------------------------------------------------------- #
# Tile helpers (always return divisors -> grids always cover exactly)
# --------------------------------------------------------------------------- #
def _largest_divisor_leq(n, cap):
    cap = max(1, min(n, cap))
    for t in range(cap, 0, -1):
        if n % t == 0:
            return t
    return 1


def _pick_lane_tile(n, cap):
    if n <= cap:
        return n
    for t in range(cap, 127, -1):
        if n % t == 0 and t % 128 == 0:
            return t
    return n


# --------------------------------------------------------------------------- #
# Pallas kernels
# --------------------------------------------------------------------------- #
def _convt_kernel(x_ref, w_ref, b_ref, o_ref, *stats_refs, activation):
    """Fused 4-phase ConvTranspose2d(4,2,1) (+bias, +optional tanh, +optional BN partial stats).

    x_ref : (tb, H+2, W+2, Cin)  bf16   once-zero-padded NHWC input tile
    w_ref : (4, 4, Cin, Cout)    bf16   per-(phase, tap) weight matrices
    b_ref : (1, Cout)            f32
    o_ref : (4, tb, H, W, Cout)         phase-major conv output tile
    stats : (1, 2, Cout)         f32    per-tile [sum; sumsq] over all phases (optional)
    """
    tb = x_ref.shape[0]
    cin = x_ref.shape[-1]
    _, _, H, W, cout = o_ref.shape
    rows = tb * H * W
    with_stats = len(stats_refs) > 0

    bias = b_ref[...]                                        # (1, Cout) f32
    if with_stats:
        s = jnp.zeros((1, cout), jnp.float32)
        ss = jnp.zeros((1, cout), jnp.float32)

    for p, taps in enumerate(_PHASE_TAPS):
        acc = None
        for t, (dy, dx, _, _) in enumerate(taps):
            # Shifted window of the padded input, gathered straight from VMEM (no HBM slab).
            a = x_ref[:, dy:dy + H, dx:dx + W, :].reshape(rows, cin)
            d = jnp.dot(a, w_ref[p, t], preferred_element_type=jnp.float32)
            acc = d if acc is None else acc + d
        y = acc + bias                                       # (rows, Cout) f32
        if activation == "tanh":
            y = jnp.tanh(y)
        if with_stats:
            # BN2d partial stats on the exact f32 conv output (pre bf16 store).
            s = s + jnp.sum(y, axis=0, keepdims=True)
            ss = ss + jnp.sum(y * y, axis=0, keepdims=True)
        o_ref[p] = y.reshape(tb, H, W, cout).astype(o_ref.dtype)

    if with_stats:
        st = stats_refs[0]
        st[0, 0:1, :] = s
        st[0, 1:2, :] = ss


def _bn_finalize_kernel(stats_ref, g_ref, b_ref, scale_ref, shift_ref, *, eps, inv_n):
    """Reduce per-tile BN partials -> per-channel (scale, shift) with gamma/beta folded in."""
    st = stats_ref[...]                                      # (T, 2, C) f32
    s = jnp.sum(st[:, 0, :], axis=0, keepdims=True)          # (1, C)
    ss = jnp.sum(st[:, 1, :], axis=0, keepdims=True)
    mean = s * inv_n
    var = jnp.maximum(ss * inv_n - mean * mean, 0.0)         # biased (training-mode) variance
    scale = g_ref[...] * jax.lax.rsqrt(var + eps)
    scale_ref[...] = scale
    shift_ref[...] = b_ref[...] - mean * scale


def _bn_apply_assemble_kernel(x_ref, scale_ref, shift_ref, o_ref):
    """y = x*scale + shift, ReLU; stored directly into the sub-pixel interleaved NHWC layout."""
    y = x_ref[0].astype(jnp.float32) * scale_ref[...] + shift_ref[...]
    y = jnp.maximum(y, 0.0)
    o_ref[:, :, 0, :, :] = y.astype(o_ref.dtype)


def _fc_bn_leaky_kernel(x_ref, w_ref, b_ref, g_ref, bt_ref, o_ref, *, eps, slope):
    """Linear + training-mode BatchNorm1d + LeakyReLU(0.2), fully fused (whole batch in tile)."""
    y = jnp.dot(x_ref[...], w_ref[...], preferred_element_type=jnp.float32) + b_ref[...]
    mean = jnp.mean(y, axis=0, keepdims=True)
    var = jnp.mean(jnp.square(y - mean), axis=0, keepdims=True)
    y = (y - mean) * jax.lax.rsqrt(var + eps) * g_ref[...] + bt_ref[...]
    y = jnp.where(y > 0, y, slope * y)
    o_ref[...] = y.astype(o_ref.dtype)


# --------------------------------------------------------------------------- #
# Pallas wrappers
# --------------------------------------------------------------------------- #
def pallas_conv_transpose_phase(xp, w_pp, bias, *, with_stats, activation,
                                out_dtype, tb):
    """ConvTranspose2d(4,2,1) on a padded NHWC input.

    xp   : (B, H+2, W+2, Cin) bf16
    w_pp : (4, 4, Cin, Cout)  bf16
    bias : (1, Cout)          f32
    Returns (4, B, H, W, Cout) [, (B//tb, 2, Cout) partial BN stats].
    """
    B, Hp, Wp, Cin = xp.shape
    H, W = Hp - 2, Wp - 2
    Cout = w_pp.shape[-1]
    n_mtiles = B // tb

    in_specs = [
        pl.BlockSpec((tb, Hp, Wp, Cin), lambda m: (m, 0, 0, 0)),
        pl.BlockSpec((4, 4, Cin, Cout), lambda m: (0, 0, 0, 0)),
        pl.BlockSpec((1, Cout), lambda m: (0, 0)),
    ]
    out_shape = jax.ShapeDtypeStruct((4, B, H, W, Cout), out_dtype)
    out_spec = pl.BlockSpec((4, tb, H, W, Cout), lambda m: (0, m, 0, 0, 0))
    if with_stats:
        out_shape = (out_shape,
                     jax.ShapeDtypeStruct((n_mtiles, 2, Cout), jnp.float32))
        out_spec = (out_spec,
                    pl.BlockSpec((1, 2, Cout), lambda m: (m, 0, 0)))

    return pl.pallas_call(
        functools.partial(_convt_kernel, activation=activation),
        out_shape=out_shape,
        grid=(n_mtiles,),
        in_specs=in_specs,
        out_specs=out_spec,
        compiler_params=pltpu.CompilerParams(
            dimension_semantics=("parallel",),
            vmem_limit_bytes=_VMEM_LIMIT),
    )(xp, w_pp, bias)


def pallas_bn_finalize(stats, gamma, beta, *, n, eps=1e-5):
    """Per-channel (scale, shift) from BN partial stats; gamma/beta folded in."""
    T, _, C = stats.shape
    g2 = gamma.reshape(1, C).astype(jnp.float32)
    b2 = beta.reshape(1, C).astype(jnp.float32)
    return pl.pallas_call(
        functools.partial(_bn_finalize_kernel, eps=eps, inv_n=1.0 / n),
        out_shape=(jax.ShapeDtypeStruct((1, C), jnp.float32),
                   jax.ShapeDtypeStruct((1, C), jnp.float32)),
        grid=(1,),
        in_specs=[pl.BlockSpec((T, 2, C), lambda i: (0, 0, 0)),
                  pl.BlockSpec((1, C), lambda i: (0, 0)),
                  pl.BlockSpec((1, C), lambda i: (0, 0))],
        out_specs=(pl.BlockSpec((1, C), lambda i: (0, 0)),
                   pl.BlockSpec((1, C), lambda i: (0, 0))),
        compiler_params=pltpu.CompilerParams(
            dimension_semantics=("arbitrary",),
            vmem_limit_bytes=_VMEM_LIMIT),
    )(stats, g2, b2)


def pallas_bn_relu_assemble(conv_out, scale, shift, *, tb):
    """BN-apply + ReLU, stored directly in the sub-pixel-interleaved NHWC layout.

    conv_out : (4, B, H, W, C) bf16 (phase-major)
    Returns  : (B, 2H, 2W, C)  bf16 (NHWC)
    """
    _, B, H, W, C = conv_out.shape
    out = pl.pallas_call(
        _bn_apply_assemble_kernel,
        out_shape=jax.ShapeDtypeStruct((B, H, 2, W, 2 * C), conv_out.dtype),
        grid=(4, B // tb),
        in_specs=[pl.BlockSpec((1, tb, H, W, C), lambda p, m: (p, m, 0, 0, 0)),
                  pl.BlockSpec((1, C), lambda p, m: (0, 0)),
                  pl.BlockSpec((1, C), lambda p, m: (0, 0))],
        out_specs=pl.BlockSpec((tb, H, 1, W, C),
                               lambda p, m: (m, 0, p // 2, 0, p % 2)),
        compiler_params=pltpu.CompilerParams(
            dimension_semantics=("parallel", "parallel"),
            vmem_limit_bytes=_VMEM_LIMIT),
    )(conv_out, scale, shift)
    # (B, H, 2, W, 2C) -> (B, 2H, 2W, C): adjacent-dim merge, metadata-only reshape.
    return out.reshape(B, 2 * H, 2 * W, C)


def pallas_fc_bn_leaky(x, w, bias, gamma, beta, *, eps=1e-5,
                       out_dtype=jnp.bfloat16, tn_cap=2048):
    """Linear -> BatchNorm1d(batch stats) -> LeakyReLU(0.2), fully fused."""
    B, K = x.shape
    N = w.shape[1]
    assert B <= 1024, "fused BatchNorm1d epilogue needs the whole batch in one M tile"
    tn = _pick_lane_tile(N, tn_cap)
    return pl.pallas_call(
        functools.partial(_fc_bn_leaky_kernel, eps=eps, slope=0.2),
        out_shape=jax.ShapeDtypeStruct((B, N), out_dtype),
        grid=(N // tn,),
        in_specs=[pl.BlockSpec((B, K), lambda j: (0, 0)),
                  pl.BlockSpec((K, tn), lambda j: (0, j)),
                  pl.BlockSpec((1, tn), lambda j: (0, j)),
                  pl.BlockSpec((1, tn), lambda j: (0, j)),
                  pl.BlockSpec((1, tn), lambda j: (0, j))],
        out_specs=pl.BlockSpec((B, tn), lambda j: (0, j)),
        compiler_params=pltpu.CompilerParams(
            dimension_semantics=("parallel",),
            vmem_limit_bytes=_VMEM_LIMIT),
    )(x, w, bias, gamma, beta)


# --------------------------------------------------------------------------- #
# Layer blocks
# --------------------------------------------------------------------------- #
def _conv_batch_tile(B, HW):
    # Target ~256 M rows per grid step (one MXU pass on v6e/v7x), keep VMEM modest.
    return _largest_divisor_leq(B, max(1, 256 // HW))


def _convt_bn_relu_block(h, w_pp, bias, gamma, beta, *, eps=1e-5):
    """ConvT(4,2,1) -> BatchNorm2d(batch stats) -> ReLU.  h: (B, H, W, Cin) NHWC bf16."""
    B, H, W, _ = h.shape
    # TODO(synk): the 1-pixel zero pad is still an XLA slab pass; it could be folded into the
    # previous layer's store (strided out_spec) or masked in-kernel.
    xp = jnp.pad(h, ((0, 0), (1, 1), (1, 1), (0, 0)))
    tb = _conv_batch_tile(B, H * W)
    conv, stats = pallas_conv_transpose_phase(
        xp, w_pp, bias, with_stats=True, activation=None,
        out_dtype=jnp.bfloat16, tb=tb)
    scale, shift = pallas_bn_finalize(stats, gamma, beta, n=B * 4 * H * W, eps=eps)
    tb2 = _largest_divisor_leq(B, max(1, 4096 // (H * W)))
    return pallas_bn_relu_assemble(conv, scale, shift, tb=tb2)   # (B, 2H, 2W, Cout)


# --------------------------------------------------------------------------- #
# Parameters
# --------------------------------------------------------------------------- #
def init_params(key, latent_dim=100, img_channels=3, num_classes=2, embedding_dim=28):
    """PyTorch-equivalent parameter set (fc_w stored as (in, out))."""
    init_size = 4
    fc_out = 1024 * init_size ** 2
    ks = jax.random.split(key, 6)
    s = 0.02
    return {
        "emb":   jax.random.normal(ks[0], (num_classes, embedding_dim), jnp.float32),
        "fc_w":  s * jax.random.normal(ks[1], (latent_dim + embedding_dim, fc_out), jnp.float32),
        "fc_b":  jnp.zeros((fc_out,), jnp.float32),
        "bn0_g": jnp.ones((fc_out,), jnp.float32),
        "bn0_b": jnp.zeros((fc_out,), jnp.float32),
        "ct1_w": s * jax.random.normal(ks[2], (1024, 512, 4, 4), jnp.float32),
        "ct1_b": jnp.zeros((512,), jnp.float32),
        "bn1_g": jnp.ones((512,), jnp.float32),
        "bn1_b": jnp.zeros((512,), jnp.float32),
        "ct2_w": s * jax.random.normal(ks[3], (512, 256, 4, 4), jnp.float32),
        "ct2_b": jnp.zeros((256,), jnp.float32),
        "bn2_g": jnp.ones((256,), jnp.float32),
        "bn2_b": jnp.zeros((256,), jnp.float32),
        "ct3_w": s * jax.random.normal(ks[4], (256, 128, 4, 4), jnp.float32),
        "ct3_b": jnp.zeros((128,), jnp.float32),
        "bn3_g": jnp.ones((128,), jnp.float32),
        "bn3_b": jnp.zeros((128,), jnp.float32),
        "ct4_w": s * jax.random.normal(ks[5], (128, img_channels, 4, 4), jnp.float32),
        "ct4_b": jnp.zeros((img_channels,), jnp.float32),
    }


def _phase_tap_weights(w):
    """PyTorch weight (Cin, Cout, 4, 4) -> per-(phase, tap) matrices (4, 4, Cin, Cout)."""
    return jnp.stack(
        [jnp.stack([w[:, :, ky, kx] for (_, _, ky, kx) in taps], axis=0)
         for taps in _PHASE_TAPS], axis=0)


def prepare_params(p):
    """One-time re-layout of PyTorch-layout params: bf16 matmul weights, per-(phase,tap)
    conv weights, fc columns permuted to NHWC feature order, last-layer Cout padded 3 -> 8.
    NOTE: contains only arrays (safe to pass through jit)."""
    def perm_fc_cols(w):   # columns (c, h, w)-major -> (h, w, c)-major
        i = w.shape[0]
        return w.reshape(i, 1024, 4, 4).transpose(0, 2, 3, 1).reshape(i, 16384)

    def perm_vec(v):
        return v.reshape(1024, 4, 4).transpose(1, 2, 0).reshape(1, 16384)

    q = {"emb": p["emb"],
         "fc_w": perm_fc_cols(p["fc_w"]).astype(jnp.bfloat16),
         "fc_b": perm_vec(p["fc_b"]).astype(jnp.float32),
         "bn0_g": perm_vec(p["bn0_g"]).astype(jnp.float32),
         "bn0_b": perm_vec(p["bn0_b"]).astype(jnp.float32)}
    for i in (1, 2, 3, 4):
        w, b = p[f"ct{i}_w"], p[f"ct{i}_b"]
        if i == 4:  # pad 3 output channels to 8 (sliced off after the kernel)
            cout = w.shape[1]
            w = jnp.pad(w, ((0, 0), (0, 8 - cout), (0, 0), (0, 0)))
            b = jnp.pad(b, (0, 8 - cout))
        q[f"ct{i}_w"] = _phase_tap_weights(w).astype(jnp.bfloat16)   # (4, 4, Cin, Cout)
        q[f"ct{i}_b"] = b.reshape(1, -1).astype(jnp.float32)
        if i < 4:
            q[f"bn{i}_g"] = p[f"bn{i}_g"].astype(jnp.float32)
            q[f"bn{i}_b"] = p[f"bn{i}_b"].astype(jnp.float32)
    return q


# --------------------------------------------------------------------------- #
# Forward pass
# --------------------------------------------------------------------------- #
def generator_conditional_forward(params, z, labels, *, img_channels=3):
    # NOTE: BatchNorm uses training-mode (per-call, biased) batch statistics, matching the
    # PyTorch module in .train() mode.  Stats are computed in f32 on the pre-quantized conv
    # output; the normalized values are applied to the bf16-stored activations.
    B = z.shape[0]

    # label embedding (gather) + concat -- glue
    emb = jnp.take(params["emb"], labels, axis=0)                        # (B, 28)
    x = jnp.concatenate([z, emb], axis=1).astype(jnp.bfloat16)           # (B, 128)

    # fc: Linear + BatchNorm1d + LeakyReLU(0.2), fused; columns pre-permuted so the result
    # reshapes straight to NHWC.
    y = pallas_fc_bn_leaky(x, params["fc_w"], params["fc_b"],
                           params["bn0_g"], params["bn0_b"])             # (B, 16384) bf16
    h = y.reshape(B, 4, 4, 1024)                                         # NHWC

    # ConvT(1024->512) / ConvT(512->256) / ConvT(256->128), each -> BN2d -> ReLU
    for i in (1, 2, 3):
        h = _convt_bn_relu_block(h, params[f"ct{i}_w"], params[f"ct{i}_b"],
                                 params[f"bn{i}_g"], params[f"bn{i}_b"])

    # Final ConvT(128->3) + Tanh (tanh fused in the epilogue; Cout padded to 8)
    Bh, H, W, _ = h.shape
    xp = jnp.pad(h, ((0, 0), (1, 1), (1, 1), (0, 0)))
    tb = _conv_batch_tile(B, H * W)
    ph = pallas_conv_transpose_phase(xp, params["ct4_w"], params["ct4_b"],
                                     with_stats=False, activation="tanh",
                                     out_dtype=jnp.float32, tb=tb)       # (4, B, 32, 32, 8)

    # TODO(synk): ct4's 8-lane store and this phase-major -> NCHW transpose are still
    # lane-sparse XLA glue; a transposed (M-on-lanes) final matmul would make it lane-dense.
    a = ph.reshape(2, 2, B, H, W, ph.shape[-1])[..., :img_channels]      # static slice
    img = a.transpose(2, 5, 3, 0, 4, 1).reshape(B, img_channels, 2 * H, 2 * W)
    return img


# --------------------------------------------------------------------------- #
# Reference for the single-layer self-check (plain XLA, f32)
# --------------------------------------------------------------------------- #
def _ref_conv_transpose(x_nhwc, w, b):
    """PyTorch ConvTranspose2d(4,2,1): zero-dilate(2) + pad(2) + flipped 4x4 conv."""
    w_ref = jnp.transpose(w[:, :, ::-1, ::-1], (2, 3, 0, 1))   # (4,4,Cin,Cout) HWIO
    y = jax.lax.conv_general_dilated(
        x_nhwc, w_ref, window_strides=(1, 1), padding=((2, 2), (2, 2)),
        lhs_dilation=(2, 2), dimension_numbers=("NHWC", "HWIO", "NHWC"))
    return y + b


# --------------------------------------------------------------------------- #
if __name__ == "__main__":
    key = jax.random.PRNGKey(0)
    pkey, zkey, ckey = jax.random.split(key, 3)

    # --- quick numerical check of the in-kernel phase-window ConvTranspose ----
    ck1, ck2 = jax.random.split(ckey)
    Bc, Hc, Wc, Ci, Co = 2, 3, 5, 16, 32
    xc = jax.random.normal(ck1, (Bc, Hc, Wc, Ci), jnp.float32)
    wc = 0.05 * jax.random.normal(ck2, (Ci, Co, 4, 4), jnp.float32)
    bc = 0.1 * jnp.arange(Co, dtype=jnp.float32)

    @jax.jit
    def _phase_ct(xc, wc, bc):
        wp = _phase_tap_weights(wc).astype(jnp.bfloat16)
        xp = jnp.pad(xc.astype(jnp.bfloat16), ((0, 0), (1, 1), (1, 1), (0, 0)))
        ph = pallas_conv_transpose_phase(xp, wp, bc.reshape(1, -1).astype(jnp.float32),
                                         with_stats=False, activation=None,
                                         out_dtype=jnp.float32, tb=Bc)
        a = ph.reshape(2, 2, Bc, Hc, Wc, Co)                   # (ry, rx, B, H, W, C)
        return a.transpose(2, 3, 0, 4, 1, 5).reshape(Bc, 2 * Hc, 2 * Wc, Co)

    got = _phase_ct(xc, wc, bc)
    ref = _ref_conv_transpose(xc, wc, bc)
    err = float(jnp.max(jnp.abs(got - ref)))
    assert err < 0.06, f"phase conv-transpose mismatch: max abs err {err}"

    # --- full generator forward -------------------------------------------------
    params = prepare_params(init_params(pkey))

    B, latent_dim = 2, 100
    z = jax.random.normal(zkey, (B, latent_dim), jnp.float32)
    labels = jnp.array([0, 1], dtype=jnp.int32)

    fwd = jax.jit(functools.partial(generator_conditional_forward, img_channels=3))
    img = fwd(params, z, labels)
    jax.block_until_ready(img)

    assert img.shape == (B, 3, 64, 64), img.shape
    assert img.dtype == jnp.float32
    assert bool(jnp.all(jnp.isfinite(img)))
    assert bool(jnp.all(jnp.abs(img) <= 1.0 + 1e-3))
    print("KERNEL_OK")
</pallas_src>

<mosaic_0001>
module attributes {stable_mosaic.version = 11 : i64} {
  func.func @_convt_kernel(%arg0: i32, %arg1: memref<2x5x7x16xbf16, #tpu.memory_space<vmem>>, %arg2: memref<4x4x16x32xbf16, #tpu.memory_space<vmem>>, %arg3: memref<1x32xf32, #tpu.memory_space<vmem>>, %arg4: memref<4x2x3x5x32xf32, #tpu.memory_space<vmem>>) attributes {dimension_semantics = [#tpu.dimension_semantics<parallel>], iteration_bounds = array<i64: 1>, scalar_prefetch = 0 : i64, scratch_operands = 0 : i64, tpu.core_type = #tpu.core_type<tc>, window_params = [{transform_indices = @transform_0, window_bounds = array<i64: 2, 5, 7, 16>}, {pipeline_mode = #tpu.pipeline_mode<synchronous>, transform_indices = @transform_1, window_bounds = array<i64: 4, 4, 16, 32>}, {pipeline_mode = #tpu.pipeline_mode<synchronous>, transform_indices = @transform_2, window_bounds = array<i64: 1, 32>}, {transform_indices = @transform_3, window_bounds = array<i64: 4, 2, 3, 5, 32>}]} {
    %c0 = arith.constant 0 : index
    %c0_0 = arith.constant 0 : index
    %0 = vector.load %arg3[%c0, %c0_0] : memref<1x32xf32, #tpu.memory_space<vmem>>, vector<1x32xf32>
    %c0_1 = arith.constant 0 : index
    %c1 = arith.constant 1 : index
    %c1_2 = arith.constant 1 : index
    %c0_3 = arith.constant 0 : index
    %1 = vector.load %arg1[%c0_1, %c1, %c1_2, %c0_3] : memref<2x5x7x16xbf16, #tpu.memory_space<vmem>>, vector<2x3x5x16xbf16>
    %2 = vector.shape_cast %1 : vector<2x3x5x16xbf16> to vector<30x16xbf16>
    %c0_4 = arith.constant 0 : index
    %c0_5 = arith.constant 0 : index
    %c0_6 = arith.constant 0 : index
    %c0_7 = arith.constant 0 : index
    %3 = vector.load %arg2[%c0_4, %c0_5, %c0_6, %c0_7] : memref<4x4x16x32xbf16, #tpu.memory_space<vmem>>, vector<1x1x16x32xbf16>
    %4 = vector.shape_cast %3 : vector<1x1x16x32xbf16> to vector<16x32xbf16>
    %cst = arith.constant dense<0.000000e+00> : vector<30x32xf32>
    %5 = tpu.matmul %2, %4, %cst {dimension_numbers = #tpu.dot_dimension_numbers<[1], [0], [0], [1], [0, 0, 1, 1], [], []>} : vector<30x16xbf16>, vector<16x32xbf16>, vector<30x32xf32> -> vector<30x32xf32>
    %c0_8 = arith.constant 0 : index
    %c1_9 = arith.constant 1 : index
    %c0_10 = arith.constant 0 : index
    %c0_11 = arith.constant 0 : index
    %6 = vector.load %arg1[%c0_8, %c1_9, %c0_10, %c0_11] : memref<2x5x7x16xbf16, #tpu.memory_space<vmem>>, vector<2x3x5x16xbf16>
    %7 = vector.shape_cast %6 : vector<2x3x5x16xbf16> to vector<30x16xbf16>
    %c0_12 = arith.constant 0 : index
    %c1_13 = arith.constant 1 : index
    %c0_14 = arith.constant 0 : index
    %c0_15 = arith.constant 0 : index
    %8 = vector.load %arg2[%c0_12, %c1_13, %c0_14, %c0_15] : memref<4x4x16x32xbf16, #tpu.memory_space<vmem>>, vector<1x1x16x32xbf16>
    %9 = vector.shape_cast %8 : vector<1x1x16x32xbf16> to vector<16x32xbf16>
    %cst_16 = arith.constant dense<0.000000e+00> : vector<30x32xf32>
    %10 = tpu.matmul %7, %9, %cst_16 {dimension_numbers = #tpu.dot_dimension_numbers<[1], [0], [0], [1], [0, 0, 1, 1], [], []>} : vector<30x16xbf16>, vector<16x32xbf16>, vector<30x32xf32> -> vector<30x32xf32>
    %11 = arith.addf %5, %10 : vector<30x32xf32>
    %c0_17 = arith.constant 0 : index
    %c0_18 = arith.constant 0 : index
    %c1_19 = arith.constant 1 : index
    %c0_20 = arith.constant 0 : index
    %12 = vector.load %arg1[%c0_17, %c0_18, %c1_19, %c0_20] : memref<2x5x7x16xbf16, #tpu.memory_space<vmem>>, vector<2x3x5x16xbf16>
    %13 = vector.shape_cast %12 : vector<2x3x5x16xbf16> to vector<30x16xbf16>
    %c0_21 = arith.constant 0 : index
    %c2 = arith.constant 2 : index
    %c0_22 = arith.constant 0 : index
    %c0_23 = arith.constant 0 : index
    %14 = vector.load %arg2[%c0_21, %c2, %c0_22, %c0_23] : memref<4x4x16x32xbf16, #tpu.memory_space<vmem>>, vector<1x1x16x32xbf16>
    %15 = vector.shape_cast %14 : vector<1x1x16x32xbf16> to vector<16x32xbf16>
    %cst_24 = arith.constant dense<0.000000e+00> : vector<30x32xf32>
    %16 = tpu.matmul %13, %15, %cst_24 {dimension_numbers = #tpu.dot_dimension_numbers<[1], [0], [0], [1], [0, 0, 1, 1], [], []>} : vector<30x16xbf16>, vector<16x32xbf16>, vector<30x32xf32> -> vector<30x32xf32>
    %17 = arith.addf %11, %16 : vector<30x32xf32>
    %c0_25 = arith.constant 0 : index
    %c0_26 = arith.constant 0 : index
    %c0_27 = arith.constant 0 : index
    %c0_28 = arith.constant 0 : index
    %18 = vector.load %arg1[%c0_25, %c0_26, %c0_27, %c0_28] : memref<2x5x7x16xbf16, #tpu.memory_space<vmem>>, vector<2x3x5x16xbf16>
    %19 = vector.shape_cast %18 : vector<2x3x5x16xbf16> to vector<30x16xbf16>
    %c0_29 = arith.constant 0 : index
    %c3 = arith.constant 3 : index
    %c0_30 = arith.constant 0 : index
    %c0_31 = arith.constant 0 : index
    %20 = vector.load %arg2[%c0_29, %c3, %c0_30, %c0_31] : memref<4x4x16x32xbf16, #tpu.memory_space<vmem>>, vector<1x1x16x32xbf16>
    %21 = vector.shape_cast %20 : vector<1x1x16x32xbf16> to vector<16x32xbf16>
    %cst_32 = arith.constant dense<0.000000e+00> : vector<30x32xf32>
    %22 = tpu.matmul %19, %21, %cst_32 {dimension_numbers = #tpu.dot_dimension_numbers<[1], [0], [0], [1], [0, 0, 1, 1], [], []>} : vector<30x16xbf16>, vector<16x32xbf16>, vector<30x32xf32> -> vector<30x32xf32>
    %23 = arith.addf %17, %22 : vector<30x32xf32>
    %24 = vector.broadcast %0 : vector<1x32xf32> to vector<30x32xf32>
    %25 = arith.addf %23, %24 : vector<30x32xf32>
    %26 = vector.shape_cast %25 : vector<30x32xf32> to vector<2x3x5x32xf32>
    %c0_33 = arith.constant 0 : index
    %c0_34 = arith.constant 0 : index
    %c0_35 = arith.constant 0 : index
    %c0_36 = arith.constant 0 : index
    %c0_37 = arith.constant 0 : index
    %27 = vector.load %arg4[%c0_33, %c0_34, %c0_35, %c0_36, %c0_37] : memref<4x2x3x5x32xf32, #tpu.memory_space<vmem>>, vector<1x2x3x5x32xf32>
    %28 = vector.shape_cast %27 : vector<1x2x3x5x32xf32> to vector<2x3x5x32xf32>
    %29 = vector.shape_cast %26 : vector<2x3x5x32xf32> to vector<1x2x3x5x32xf32>
    tpu.vector_store %arg4[%c0_33, %c0_34, %c0_35, %c0_36, %c0_37], %29 {strides = array<i32>} : memref<4x2x3x5x32xf32, #tpu.memory_space<vmem>>, vector<1x2x3x5x32xf32>,
    %c0_38 = arith.constant 0 : index
    %c1_39 = arith.constant 1 : index
    %c2_40 = arith.constant 2 : index
    %c0_41 = arith.constant 0 : index
    %30 = vector.load %arg1[%c0_38, %c1_39, %c2_40, %c0_41] : memref<2x5x7x16xbf16, #tpu.memory_space<vmem>>, vector<2x3x5x16xbf16>
    %31 = vector.shape_cast %30 : vector<2x3x5x16xbf16> to vector<30x16xbf16>
    %c1_42 = arith.constant 1 : index
    %c0_43 = arith.constant 0 : index
    %c0_44 = arith.constant 0 : index
    %c0_45 = arith.constant 0 : index
    %32 = vector.load %arg2[%c1_42, %c0_43, %c0_44, %c0_45] : memref<4x4x16x32xbf16, #tpu.memory_space<vmem>>, vector<1x1x16x32xbf16>
    %33 = vector.shape_cast %32 : vector<1x1x16x32xbf16> to vector<16x32xbf16>
    %cst_46 = arith.constant dense<0.000000e+00> : vector<30x32xf32>
    %34 = tpu.matmul %31, %33, %cst_46 {dimension_numbers = #tpu.dot_dimension_numbers<[1], [0], [0], [1], [0, 0, 1, 1], [], []>} : vector<30x16xbf16>, vector<16x32xbf16>, vector<30x32xf32> -> vector<30x32xf32>
    %c0_47 = arith.constant 0 : index
    %c1_48 = arith.constant 1 : index
    %c1_49 = arith.constant 1 : index
    %c0_50 = arith.constant 0 : index
    %35 = vector.load %arg1[%c0_47, %c1_48, %c1_49, %c0_50] : memref<2x5x7x16xbf16, #tpu.memory_space<vmem>>, vector<2x3x5x16xbf16>
    %36 = vector.shape_cast %35 : vector<2x3x5x16xbf16> to vector<30x16xbf16>
    %c1_51 = arith.constant 1 : index
    %c1_52 = arith.constant 1 : index
    %c0_53 = arith.constant 0 : index
    %c0_54 = arith.constant 0 : index
    %37 = vector.load %arg2[%c1_51, %c1_52, %c0_53, %c0_54] : memref<4x4x16x32xbf16, #tpu.memory_space<vmem>>, vector<1x1x16x32xbf16>
    %38 = vector.shape_cast %37 : vector<1x1x16x32xbf16> to vector<16x32xbf16>
    %cst_55 = arith.constant dense<0.000000e+00> : vector<30x32xf32>
    %39 = tpu.matmul %36, %38, %cst_55 {dimension_numbers = #tpu.dot_dimension_numbers<[1], [0], [0], [1], [0, 0, 1, 1], [], []>} : vector<30x16xbf16>, vector<16x32xbf16>, vector<30x32xf32> -> vector<30x32xf32>
    %40 = arith.addf %34, %39 : vector<30x32xf32>
    %c0_56 = arith.constant 0 : index
    %c0_57 = arith.constant 0 : index
    %c2_58 = arith.constant 2 : index
    %c0_59 = arith.constant 0 : index
    %41 = vector.load %arg1[%c0_56, %c0_57, %c2_58, %c0_59] : memref<2x5x7x16xbf16, #tpu.memory_space<vmem>>, vector<2x3x5x16xbf16>
    %42 = vector.shape_cast %41 : vector<2x3x5x16xbf16> to vector<30x16xbf16>
    %c1_60 = arith.constant 1 : index
    %c2_61 = arith.constant 2 : index
    %c0_62 = arith.constant 0 : index
    %c0_63 = arith.constant 0 : index
    %43 = vector.load %arg2[%c1_60, %c2_61, %c0_62, %c0_63] : memref<4x4x16x32xbf16, #tpu.memory_space<vmem>>, vector<1x1x16x32xbf16>
    %44 = vector.shape_cast %43 : vector<1x1x16x32xbf16> to vector<16x32xbf16>
    %cst_64 = arith.constant dense<0.000000e+00> : vector<30x32xf32>
    %45 = tpu.matmul %42, %44, %cst_64 {dimension_numbers = #tpu.dot_dimension_numbers<[1], [0], [0], [1], [0, 0, 1, 1], [], []>} : vector<30x16xbf16>, vector<16x32xbf16>, vector<30x32xf32> -> vector<30x32xf32>
    %46 = arith.addf %40, %45 : vector<30x32xf32>
    %c0_65 = arith.constant 0 : index
    %c0_66 = arith.constant 0 : index
    %c1_67 = arith.constant 1 : index
    %c0_68 = arith.constant 0 : index
    %47 = vector.load %arg1[%c0_65, %c0_66, %c1_67, %c0_68] : memref<2x5x7x16xbf16, #tpu.memory_space<vmem>>, vector<2x3x5x16xbf16>
    %48 = vector.shape_cast %47 : vector<2x3x5x16xbf16> to vector<30x16xbf16>
    %c1_69 = arith.constant 1 : index
    %c3_70 = arith.constant 3 : index
    %c0_71 = arith.constant 0 : index
    %c0_72 = arith.constant 0 : index
    %49 = vector.load %arg2[%c1_69, %c3_70, %c0_71, %c0_72] : memref<4x4x16x32xbf16, #tpu.memory_space<vmem>>, vector<1x1x16x32xbf16>
    %50 = vector.shape_cast %49 : vector<1x1x16x32xbf16> to vector<16x32xbf16>
    %cst_73 = arith.constant dense<0.000000e+00> : vector<30x32xf32>
    %51 = tpu.matmul %48, %50, %cst_73 {dimension_numbers = #tpu.dot_dimension_numbers<[1], [0], [0], [1], [0, 0, 1, 1], [], []>} : vector<30x16xbf16>, vector<16x32xbf16>, vector<30x32xf32> -> vector<30x32xf32>
    %52 = arith.addf %46, %51 : vector<30x32xf32>
    %53 = vector.broadcast %0 : vector<1x32xf32> to vector<30x32xf32>
    %54 = arith.addf %52, %53 : vector<30x32xf32>
    %55 = vector.shape_cast %54 : vector<30x32xf32> to vector<2x3x5x32xf32>
    %c1_74 = arith.constant 1 : index
    %c0_75 = arith.constant 0 : index
    %c0_76 = arith.constant 0 : index
    %c0_77 = arith.constant 0 : index
    %c0_78 = arith.constant 0 : index
    %56 = vector.load %arg4[%c1_74, %c0_75, %c0_76, %c0_77, %c0_78] : memref<4x2x3x5x32xf32, #tpu.memory_space<vmem>>, vector<1x2x3x5x32xf32>
    %57 = vector.shape_cast %56 : vector<1x2x3x5x32xf32> to vector<2x3x5x32xf32>
    %58 = vector.shape_cast %55 : vector<2x3x5x32xf32> to vector<1x2x3x5x32xf32>
    tpu.vector_store %arg4[%c1_74, %c0_75, %c0_76, %c0_77, %c0_78], %58 {strides = array<i32>} : memref<4x2x3x5x32xf32, #tpu.memory_space<vmem>>, vector<1x2x3x5x32xf32>,
    %c0_79 = arith.constant 0 : index
    %c2_80 = arith.constant 2 : index
    %c1_81 = arith.constant 1 : index
    %c0_82 = arith.constant 0 : index
    %59 = vector.load %arg1[%c0_79, %c2_80, %c1_81, %c0_82] : memref<2x5x7x16xbf16, #tpu.memory_space<vmem>>, vector<2x3x5x16xbf16>
    %60 = vector.shape_cast %59 : vector<2x3x5x16xbf16> to vector<30x16xbf16>
    %c2_83 = arith.constant 2 : index
    %c0_84 = arith.constant 0 : index
    %c0_85 = arith.constant 0 : index
    %c0_86 = arith.constant 0 : index
    %61 = vector.load %arg2[%c2_83, %c0_84, %c0_85, %c0_86] : memref<4x4x16x32xbf16, #tpu.memory_space<vmem>>, vector<1x1x16x32xbf16>
    %62 = vector.shape_cast %61 : vector<1x1x16x32xbf16> to vector<16x32xbf16>
    %cst_87 = arith.constant dense<0.000000e+00> : vector<30x32xf32>
    %63 = tpu.matmul %60, %62, %cst_87 {dimension_numbers = #tpu.dot_dimension_numbers<[1], [0], [0], [1], [0, 0, 1, 1], [], []>} : vector<30x16xbf16>, vector<16x32xbf16>, vector<30x32xf32> -> vector<30x32xf32>
    %c0_88 = arith.constant 0 : index
    %c2_89 = arith.constant 2 : index
    %c0_90 = arith.constant 0 : index
    %c0_91 = arith.constant 0 : index
    %64 = vector.load %arg1[%c0_88, %c2_89, %c0_90, %c0_91] : memref<2x5x7x16xbf16, #tpu.memory_space<vmem>>, vector<2x3x5x16xbf16>
    %65 = vector.shape_cast %64 : vector<2x3x5x16xbf16> to vector<30x16xbf16>
    %c2_92 = arith.constant 2 : index
    %c1_93 = arith.constant 1 : index
    %c0_94 = arith.constant 0 : index
    %c0_95 = arith.constant 0 : index
    %66 = vector.load %arg2[%c2_92, %c1_93, %c0_94, %c0_95] : memref<4x4x16x32xbf16, #tpu.memory_space<vmem>>, vector<1x1x16x32xbf16>
    %67 = vector.shape_cast %66 : vector<1x1x16x32xbf16> to vector<16x32xbf16>
    %cst_96 = arith.constant dense<0.000000e+00> : vector<30x32xf32>
    %68 = tpu.matmul %65, %67, %cst_96 {dimension_numbers = #tpu.dot_dimension_numbers<[1], [0], [0], [1], [0, 0, 1, 1], [], []>} : vector<30x16xbf16>, vector<16x32xbf16>, vector<30x32xf32> -> vector<30x32xf32>
    %69 = arith.addf %63, %68 : vector<30x32xf32>
    %c0_97 = arith.constant 0 : index
    %c1_98 = arith.constant 1 : index
    %c1_99 = arith.constant 1 : index
    %c0_100 = arith.constant 0 : index
    %70 = vector.load %arg1[%c0_97, %c1_98, %c1_99, %c0_100] : memref<2x5x7x16xbf16, #tpu.memory_space<vmem>>, vector<2x3x5x16xbf16>
    %71 = vector.shape_cast %70 : vector<2x3x5x16xbf16> to vector<30x16xbf16>
    %c2_101 = arith.constant 2 : index
    %c2_102 = arith.constant 2 : index
    %c0_103 = arith.constant 0 : index
    %c0_104 = arith.constant 0 : index
    %72 = vector.load %arg2[%c2_101, %c2_102, %c0_103, %c0_104] : memref<4x4x16x32xbf16, #tpu.memory_space<vmem>>, vector<1x1x16x32xbf16>
    %73 = vector.shape_cast %72 : vector<1x1x16x32xbf16> to vector<16x32xbf16>
    %cst_105 = arith.constant dense<0.000000e+00> : vector<30x32xf32>
    %74 = tpu.matmul %71, %73, %cst_105 {dimension_numbers = #tpu.dot_dimension_numbers<[1], [0], [0], [1], [0, 0, 1, 1], [], []>} : vector<30x16xbf16>, vector<16x32xbf16>, vector<30x32xf32> -> vector<30x32xf32>
    %75 = arith.addf %69, %74 : vector<30x32xf32>
    %c0_106 = arith.constant 0 : index
    %c1_107 = arith.constant 1 : index
    %c0_108 = arith.constant 0 : index
    %c0_109 = arith.constant 0 : index
    %76 = vector.load %arg1[%c0_106, %c1_107, %c0_108, %c0_109] : memref<2x5x7x16xbf16, #tpu.memory_space<vmem>>, vector<2x3x5x16xbf16>
    %77 = vector.shape_cast %76 : vector<2x3x5x16xbf16> to vector<30x16xbf16>
    %c2_110 = arith.constant 2 : index
    %c3_111 = arith.constant 3 : index
    %c0_112 = arith.constant 0 : index
    %c0_113 = arith.constant 0 : index
    %78 = vector.load %arg2[%c2_110, %c3_111, %c0_112, %c0_113] : memref<4x4x16x32xbf16, #tpu.memory_space<vmem>>, vector<1x1x16x32xbf16>
    %79 = vector.shape_cast %78 : vector<1x1x16x32xbf16> to vector<16x32xbf16>
    %cst_114 = arith.constant dense<0.000000e+00> : vector<30x32xf32>
    %80 = tpu.matmul %77, %79, %cst_114 {dimension_numbers = #tpu.dot_dimension_numbers<[1], [0], [0], [1], [0, 0, 1, 1], [], []>} : vector<30x16xbf16>, vector<16x32xbf16>, vector<30x32xf32> -> vector<30x32xf32>
    %81 = arith.addf %75, %80 : vector<30x32xf32>
    %82 = vector.broadcast %0 : vector<1x32xf32> to vector<30x32xf32>
    %83 = arith.addf %81, %82 : vector<30x32xf32>
    %84 = vector.shape_cast %83 : vector<30x32xf32> to vector<2x3x5x32xf32>
    %c2_115 = arith.constant 2 : index
    %c0_116 = arith.constant 0 : index
    %c0_117 = arith.constant 0 : index
    %c0_118 = arith.constant 0 : index
    %c0_119 = arith.constant 0 : index
    %85 = vector.load %arg4[%c2_115, %c0_116, %c0_117, %c0_118, %c0_119] : memref<4x2x3x5x32xf32, #tpu.memory_space<vmem>>, vector<1x2x3x5x32xf32>
    %86 = vector.shape_cast %85 : vector<1x2x3x5x32xf32> to vector<2x3x5x32xf32>
    %87 = vector.shape_cast %84 : vector<2x3x5x32xf32> to vector<1x2x3x5x32xf32>
    tpu.vector_store %arg4[%c2_115, %c0_116, %c0_117, %c0_118, %c0_119], %87 {strides = array<i32>} : memref<4x2x3x5x32xf32, #tpu.memory_space<vmem>>, vector<1x2x3x5x32xf32>,
    %c0_120 = arith.constant 0 : index
    %c2_121 = arith.constant 2 : index
    %c2_122 = arith.constant 2 : index
    %c0_123 = arith.constant 0 : index
    %88 = vector.load %arg1[%c0_120, %c2_121, %c2_122, %c0_123] : memref<2x5x7x16xbf16, #tpu.memory_space<vmem>>, vector<2x3x5x16xbf16>
    %89 = vector.shape_cast %88 : vector<2x3x5x16xbf16> to vector<30x16xbf16>
    %c3_124 = arith.constant 3 : index
    %c0_125 = arith.constant 0 : index
    %c0_126 = arith.constant 0 : index
    %c0_127 = arith.constant 0 : index
    %90 = vector.load %arg2[%c3_124, %c0_125, %c0_126, %c0_127] : memref<4x4x16x32xbf16, #tpu.memory_space<vmem>>, vector<1x1x16x32xbf16>
    %91 = vector.shape_cast %90 : vector<1x1x16x32xbf16> to vector<16x32xbf16>
    %cst_128 = arith.constant dense<0.000000e+00> : vector<30x32xf32>
    %92 = tpu.matmul %89, %91, %cst_128 {dimension_numbers = #tpu.dot_dimension_numbers<[1], [0], [0], [1], [0, 0, 1, 1], [], []>} : vector<30x16xbf16>, vector<16x32xbf16>, vector<30x32xf32> -> vector<30x32xf32>
    %c0_129 = arith.constant 0 : index
    %c2_130 = arith.constant 2 : index
    %c1_131 = arith.constant 1 : index
    %c0_132 = arith.constant 0 : index
    %93 = vector.load %arg1[%c0_129, %c2_130, %c1_131, %c0_132] : memref<2x5x7x16xbf16, #tpu.memory_space<vmem>>, vector<2x3x5x16xbf16>
    %94 = vector.shape_cast %93 : vector<2x3x5x16xbf16> to vector<30x16xbf16>
    %c3_133 = arith.constant 3 : index
    %c1_134 = arith.constant 1 : index
    %c0_135 = arith.constant 0 : index
    %c0_136 = arith.constant 0 : index
    %95 = vector.load %arg2[%c3_133, %c1_134, %c0_135, %c0_136] : memref<4x4x16x32xbf16, #tpu.memory_space<vmem>>, vector<1x1x16x32xbf16>
    %96 = vector.shape_cast %95 : vector<1x1x16x32xbf16> to vector<16x32xbf16>
    %cst_137 = arith.constant dense<0.000000e+00> : vector<30x32xf32>
    %97 = tpu.matmul %94, %96, %cst_137 {dimension_numbers = #tpu.dot_dimension_numbers<[1], [0], [0], [1], [0, 0, 1, 1], [], []>} : vector<30x16xbf16>, vector<16x32xbf16>, vector<30x32xf32> -> vector<30x32xf32>
    %98 = arith.addf %92, %97 : vector<30x32xf32>
    %c0_138 = arith.constant 0 : index
    %c1_139 = arith.constant 1 : index
    %c2_140 = arith.constant 2 : index
    %c0_141 = arith.constant 0 : index
    %99 = vector.load %arg1[%c0_138, %c1_139, %c2_140, %c0_141] : memref<2x5x7x16xbf16, #tpu.memory_space<vmem>>, vector<2x3x5x16xbf16>
    %100 = vector.shape_cast %99 : vector<2x3x5x16xbf16> to vector<30x16xbf16>
    %c3_142 = arith.constant 3 : index
    %c2_143 = arith.constant 2 : index
    %c0_144 = arith.constant 0 : index
    %c0_145 = arith.constant 0 : index
    %101 = vector.load %arg2[%c3_142, %c2_143, %c0_144, %c0_145] : memref<4x4x16x32xbf16, #tpu.memory_space<vmem>>, vector<1x1x16x32xbf16>
    %102 = vector.shape_cast %101 : vector<1x1x16x32xbf16> to vector<16x32xbf16>
    %cst_146 = arith.constant dense<0.000000e+00> : vector<30x32xf32>
    %103 = tpu.matmul %100, %102, %cst_146 {dimension_numbers = #tpu.dot_dimension_numbers<[1], [0], [0], [1], [0, 0, 1, 1], [], []>} : vector<30x16xbf16>, vector<16x32xbf16>, vector<30x32xf32> -> vector<30x32xf32>
    %104 = arith.addf %98, %103 : vector<30x32xf32>
    %c0_147 = arith.constant 0 : index
    %c1_148 = arith.constant 1 : index
    %c1_149 = arith.constant 1 : index
    %c0_150 = arith.constant 0 : index
    %105 = vector.load %arg1[%c0_147, %c1_148, %c1_149, %c0_150] : memref<2x5x7x16xbf16, #tpu.memory_space<vmem>>, vector<2x3x5x16xbf16>
    %106 = vector.shape_cast %105 : vector<2x3x5x16xbf16> to vector<30x16xbf16>
    %c3_151 = arith.constant 3 : index
    %c3_152 = arith.constant 3 : index
    %c0_153 = arith.constant 0 : index
    %c0_154 = arith.constant 0 : index
    %107 = vector.load %arg2[%c3_151, %c3_152, %c0_153, %c0_154] : memref<4x4x16x32xbf16, #tpu.memory_space<vmem>>, vector<1x1x16x32xbf16>
    %108 = vector.shape_cast %107 : vector<1x1x16x32xbf16> to vector<16x32xbf16>
    %cst_155 = arith.constant dense<0.000000e+00> : vector<30x32xf32>
    %109 = tpu.matmul %106, %108, %cst_155 {dimension_numbers = #tpu.dot_dimension_numbers<[1], [0], [0], [1], [0, 0, 1, 1], [], []>} : vector<30x16xbf16>, vector<16x32xbf16>, vector<30x32xf32> -> vector<30x32xf32>
    %110 = arith.addf %104, %109 : vector<30x32xf32>
    %111 = vector.broadcast %0 : vector<1x32xf32> to vector<30x32xf32>
    %112 = arith.addf %110, %111 : vector<30x32xf32>
    %113 = vector.shape_cast %112 : vector<30x32xf32> to vector<2x3x5x32xf32>
    %c3_156 = arith.constant 3 : index
    %c0_157 = arith.constant 0 : index
    %c0_158 = arith.constant 0 : index
    %c0_159 = arith.constant 0 : index
    %c0_160 = arith.constant 0 : index
    %114 = vector.load %arg4[%c3_156, %c0_157, %c0_158, %c0_159, %c0_160] : memref<4x2x3x5x32xf32, #tpu.memory_space<vmem>>, vector<1x2x3x5x32xf32>
    %115 = vector.shape_cast %114 : vector<1x2x3x5x32xf32> to vector<2x3x5x32xf32>
    %116 = vector.shape_cast %113 : vector<2x3x5x32xf32> to vector<1x2x3x5x32xf32>
    tpu.vector_store %arg4[%c3_156, %c0_157, %c0_158, %c0_159, %c0_160], %116 {strides = array<i32>} : memref<4x2x3x5x32xf32, #tpu.memory_space<vmem>>, vector<1x2x3x5x32xf32>,
    return
  }
  func.func @transform_0(%arg0: i32) -> (i32, i32, i32, i32) {
    %c0_i32 = arith.constant 0 : i32
    %c0_i32_0 = arith.constant 0 : i32
    %c0_i32_1 = arith.constant 0 : i32
    %c0_i32_2 = arith.constant 0 : i32
    return %arg0, %c0_i32, %c0_i32_0, %c0_i32_1 : i32, i32, i32, i32
  }
  func.func @transform_1(%arg0: i32) -> (i32, i32, i32, i32) {
    %c0_i32 = arith.constant 0 : i32
    %c0_i32_0 = arith.constant 0 : i32
    %c0_i32_1 = arith.constant 0 : i32
    %c0_i32_2 = arith.constant 0 : i32
    %c0_i32_3 = arith.constant 0 : i32
    return %c0_i32, %c0_i32_0, %c0_i32_1, %c0_i32_2 : i32, i32, i32, i32
  }
  func.func @transform_2(%arg0: i32) -> (i32, i32) {
    %c0_i32 = arith.constant 0 : i32
    %c0_i32_0 = arith.constant 0 : i32
    %c0_i32_1 = arith.constant 0 : i32
    return %c0_i32, %c0_i32_0 : i32, i32
  }
  func.func @transform_3(%arg0: i32) -> (i32, i32, i32, i32, i32) {
    %c0_i32 = arith.constant 0 : i32
    %c0_i32_0 = arith.constant 0 : i32
    %c0_i32_1 = arith.constant 0 : i32
    %c0_i32_2 = arith.constant 0 : i32
    %c0_i32_3 = arith.constant 0 : i32
    return %c0_i32, %arg0, %c0_i32_0, %c0_i32_1, %c0_i32_2 : i32, i32, i32, i32, i32
  }
}

</mosaic_0001>

<llo_original>
// kernel: _phase_ct.1
$region0: #{_phase_ct.1}
  #allocation0 [shape = 'u32[]', space=smem, size = 0x4, offset = 0x4, fixed_abs, tag = 'smem constant byte address 0x4 - core index']
  #allocation1 [shape = 'u32[144,128]{1,0:T(1,128)}', space=vmem, size = 0x12000, scoped, tag = 'internal scratch']
  %s0 = inlined_call_operand.vmem [shape: bf16[2,5,7,16], index: 0, kind: input, shape index: {}]
  %s1 = inlined_call_operand.vmem [shape: bf16[4,4,16,32], index: 1, kind: input, shape index: {}]
  %s2 = inlined_call_operand.vmem [shape: f32[1,32], index: 2, kind: input, shape index: {}]
  %s3 = inlined_call_operand.vmem [shape: f32[4,2,3,5,32], index: 3, kind: output, shape index: {}]
  %s4 = sld [smem:[#allocation0]]
  $region22: #{_phase_ct.1} parent=0
    _
  %s6 = ssub.s32 1, %s4
  %s7 = scalar_select 0, %s6, %s4
  // Predicated region
  $region2: #{_phase_ct.1} parent=0 // pred_check
    _
  $region3: #{_phase_ct.1} parent=0 // pred_check_branch
    %9 = sbr.rel (0) target = $region5
  $region4: #{_phase_ct.1} parent=0 // pred_region
    _
  $region5: #{_phase_ct.1} parent=0 // pred_fallthru
    _
  // Predicated region
  $region6: #{_phase_ct.1} parent=0 // pred_check
    _
  $region7: #{_phase_ct.1} parent=0 // pred_check_branch
    %11 = sbr.rel (0) target = $region9
  $region8: #{_phase_ct.1} parent=0 // pred_region
    _
  $region9: #{_phase_ct.1} parent=0 // pred_fallthru
    _
  // Predicated region
  $region10: #{_phase_ct.1} parent=0 // pred_check
    _
  $region11: #{_phase_ct.1} parent=0 // pred_check_branch
    %13 = sbr.rel (0) target = $region13
  $region12: #{_phase_ct.1} parent=0 // pred_region
    _
  $region13: #{_phase_ct.1} parent=0 // pred_fallthru
    _
  %v15 = vld [vmem:[%s2] sm:$0x1]
  %s16 = scalar_lea.vmem %s0, 4
  %v17 = vld [vmem:[%s16] sm:$0x7]
  %v18 = vld [vmem:[%s16 + $0x4] sm:$0x7]
  %v19 = vld [vmem:[%s16 + $0x8] sm:$0x7]
  %v20 = vld [vmem:[%s16 + $0x14] sm:$0x7]
  %v21 = vld [vmem:[%s16 + $0x18] sm:$0x7]
  %v22 = vld [vmem:[%s16 + $0x1c] sm:$0x7]
  %v30 = vunpack.c.l.s4 1966171168
  %v31 = vunpack.c.0.s8 %v30
  %v32 = vlaneseq
  %v33 = vshrl.u32 %v32, 7
  %v34 = vsub.s32 %v31, %v33
  %v35 = vrot.slane %v17, %v34
  %v36 = vcombine.high %v35, %v35
  %v38 = vunpack.c.l.s4 1966171168
  %v39 = vunpack.c.0.s8 %v38
  %v40 = vlaneseq
  %v41 = vshrl.u32 %v40, 7
  %v42 = vsub.s32 %v39, %v41
  %v43 = vrot.slane %v35, %v42
  %v45 = vunpack.c.l.s4 1966171168
  %v46 = vunpack.c.0.s8 %v45
  %v47 = vlaneseq
  %v48 = vshrl.u32 %v47, 7
  %v49 = vsub.s32 %v46, %v48
  %v50 = vrot.slane %v36, %v49
  %v51 = vcombine.high %v43, %v43
  %v53 = vunpack.c.l.s4 1966171168
  %v54 = vunpack.c.0.s8 %v53
  %v55 = vlaneseq
  %v56 = vshrl.u32 %v55, 7
  %v57 = vsub.s32 %v54, %v56
  %v58 = vrot.slane %v18, %v57
  %v59 = vcombine.high %v58, %v58
  %v61 = vunpack.c.l.s4 1966171168
  %v62 = vunpack.c.0.s8 %v61
  %v63 = vlaneseq
  %v64 = vshrl.u32 %v63, 7
  %v65 = vsub.s32 %v62, %v64
  %v66 = vrot.slane %v58, %v65
  %v68 = vunpack.c.l.s4 1966171168
  %v69 = vunpack.c.0.s8 %v68
  %v70 = vlaneseq
  %v71 = vshrl.u32 %v70, 7
  %v72 = vsub.s32 %v69, %v71
  %v73 = vrot.slane %v59, %v72
  %v74 = vcombine.high %v66, %v66
  %v76 = vunpack.c.l.s4 1966171168
  %v77 = vunpack.c.0.s8 %v76
  %v78 = vlaneseq
  %v79 = vshrl.u32 %v78, 7
  %v80 = vsub.s32 %v77, %v79
  %v81 = vrot.slane %v19, %v80
  %v82 = vcombine.high %v81, %v81
  %v84 = vunpack.c.l.s4 1966171168
  %v85 = vunpack.c.0.s8 %v84
  %v86 = vlaneseq
  %v87 = vshrl.u32 %v86, 7
  %v88 = vsub.s32 %v85, %v87
  %v89 = vrot.slane %v81, %v88
  %v91 = vunpack.c.l.s4 1966171168
  %v92 = vunpack.c.0.s8 %v91
  %v93 = vlaneseq
  %v94 = vshrl.u32 %v93, 7
  %v95 = vsub.s32 %v92, %v94
  %v96 = vrot.slane %v82, %v95
  %v97 = vcombine.high %v89, %v89
  %v99 = vunpack.c.l.s4 1966171168
  %v100 = vunpack.c.0.s8 %v99
  %v101 = vlaneseq
  %v102 = vshrl.u32 %v101, 7
  %v103 = vsub.s32 %v100, %v102
  %v104 = vrot.slane %v20, %v103
  %v105 = vcombine.high %v104, %v104
  %v107 = vunpack.c.l.s4 1966171168
  %v108 = vunpack.c.0.s8 %v107
  %v109 = vlaneseq
  %v110 = vshrl.u32 %v109, 7
  %v111 = vsub.s32 %v108, %v110
  %v112 = vrot.slane %v104, %v111
  %v114 = vunpack.c.l.s4 1966171168
  %v115 = vunpack.c.0.s8 %v114
  %v116 = vlaneseq
  %v117 = vshrl.u32 %v116, 7
  %v118 = vsub.s32 %v115, %v117
  %v119 = vrot.slane %v105, %v118
  %v120 = vcombine.high %v112, %v112
  %v122 = vunpack.c.l.s4 1966171168
  %v123 = vunpack.c.0.s8 %v122
  %v124 = vlaneseq
  %v125 = vshrl.u32 %v124, 7
  %v126 = vsub.s32 %v123, %v125
  %v127 = vrot.slane %v21, %v126
  %v128 = vcombine.high %v127, %v127
  %v130 = vunpack.c.l.s4 1966171168
  %v131 = vunpack.c.0.s8 %v130
  %v132 = vlaneseq
  %v133 = vshrl.u32 %v132, 7
  %v134 = vsub.s32 %v131, %v133
  %v135 = vrot.slane %v127, %v134
  %v137 = vunpack.c.l.s4 1966171168
  %v138 = vunpack.c.0.s8 %v137
  %v139 = vlaneseq
  %v140 = vshrl.u32 %v139, 7
  %v141 = vsub.s32 %v138, %v140
  %v142 = vrot.slane %v128, %v141
  %v143 = vcombine.high %v135, %v135
  %v145 = vunpack.c.l.s4 1966171168
  %v146 = vunpack.c.0.s8 %v145
  %v147 = vlaneseq
  %v148 = vshrl.u32 %v147, 7
  %v149 = vsub.s32 %v146, %v148
  %v150 = vrot.slane %v22, %v149
  %v151 = vcombine.high %v150, %v150
  %v153 = vunpack.c.l.s4 1966171168
  %v154 = vunpack.c.0.s8 %v153
  %v155 = vlaneseq
  %v156 = vshrl.u32 %v155, 7
  %v157 = vsub.s32 %v154, %v156
  %v158 = vrot.slane %v150, %v157
  %v160 = vunpack.c.l.s4 1966171168
  %v161 = vunpack.c.0.s8 %v160
  %v162 = vlaneseq
  %v163 = vshrl.u32 %v162, 7
  %v164 = vsub.s32 %v161, %v163
  %v165 = vrot.slane %v151, %v164
  %v166 = vcombine.high %v158, %v158
  %v167 = vunpack.i.h.s16 %v43
  %v168 = vunpack.i.l.s16 %v50
  %v169 = vunpack.i.h.s16 %v50
  %v170 = vunpack.i.l.s16 %v51
  %v171 = vunpack.i.h.s16 %v51
  %v172 = vunpack.i.h.s16 %v66
  %v173 = vunpack.i.l.s16 %v73
  %v174 = vunpack.i.h.s16 %v73
  %v175 = vunpack.i.l.s16 %v74
  %v176 = vunpack.i.h.s16 %v74
  %v177 = vunpack.i.h.s16 %v89
  %v178 = vunpack.i.l.s16 %v96
  %v179 = vunpack.i.h.s16 %v96
  %v180 = vunpack.i.l.s16 %v97
  %v181 = vunpack.i.h.s16 %v97
  %v182 = vunpack.i.h.s16 %v112
  %v183 = vunpack.i.l.s16 %v119
  %v184 = vunpack.i.h.s16 %v119
  %v185 = vunpack.i.l.s16 %v120
  %v186 = vunpack.i.h.s16 %v120
  %v187 = vunpack.i.h.s16 %v135
  %v188 = vunpack.i.l.s16 %v142
  %v189 = vunpack.i.h.s16 %v142
  %v190 = vunpack.i.l.s16 %v143
  %v191 = vunpack.i.h.s16 %v143
  %v192 = vunpack.i.h.s16 %v158
  %v193 = vunpack.i.l.s16 %v165
  %v194 = vunpack.i.h.s16 %v165
  %v195 = vunpack.i.l.s16 %v166
  %v196 = vunpack.i.h.s16 %v166
  %v197 = vld [vmem:[%s1] sm:$0xf]
  %v198 = vld [vmem:[%s1 + $0x4] sm:$0xf]
  %v199 = vunpack.i.l.s16 %v43
  %v200 = vunpack.i.l.s16 %v66
  %v201 = vunpack.i.l.s16 %v89
  %v202 = vunpack.i.l.s16 %v112
  %v203 = vunpack.i.l.s16 %v135
  %v204 = vunpack.i.l.s16 %v158
  %s205 = scalar_lea.vmem %s1, 8
  %v206 = vld [vmem:[%s205] sm:$0xf]
  %v207 = vld [vmem:[%s205 + $0x4] sm:$0xf]
  %v208 = vpack.i.b16 %v167, %v199
  %v209 = vpack.i.b16 %v169, %v168
  %v210 = vpack.i.b16 %v200, %v170
  %v211 = vpack.i.b16 %v173, %v172
  %v212 = vpack.i.b16 %v175, %v174
  %v213 = vpack.i.b16 %v177, %v201
  %v214 = vpack.i.b16 %v179, %v178
  %v215 = vpack.i.b16 %v202, %v180
  %v216 = vpack.i.b16 %v183, %v182
  %v217 = vpack.i.b16 %v185, %v184
  %v218 = vpack.i.b16 %v187, %v203
  %v219 = vpack.i.b16 %v189, %v188
  %v220 = vpack.i.b16 %v204, %v190
  %v221 = vpack.i.b16 %v193, %v192
  %v222 = vpack.i.b16 %v195, %v194
  %v223 = vcombine.low %v208, %v209
  %v224 = vcombine.low %v210, %v211
  %v225 = vcombine.low %v212, %v213
  %v226 = vcombine.low %v214, %v215
  %v228 = vunpack.c.l.s4 1966171168
  %v229 = vunpack.c.0.s8 %v228
  %v230 = vlaneseq
  %v231 = vshrl.u32 %v230, 7
  %v232 = vsub.s32 %v229, %v231
  %v233 = vrot.slane %v223, %v232
  %v235 = vunpack.c.l.s4 1966171168
  %v236 = vunpack.c.0.s8 %v235
  %v237 = vlaneseq
  %v238 = vshrl.u32 %v237, 7
  %v239 = vsub.s32 %v236, %v238
  %v240 = vrot.slane %v224, %v239
  %v242 = vunpack.c.l.s4 1966171168
  %v243 = vunpack.c.0.s8 %v242
  %v244 = vlaneseq
  %v245 = vshrl.u32 %v244, 7
  %v246 = vsub.s32 %v243, %v245
  %v247 = vrot.slane %v225, %v246
  %v249 = vunpack.c.l.s4 1966171168
  %v250 = vunpack.c.0.s8 %v249
  %v251 = vlaneseq
  %v252 = vshrl.u32 %v251, 7
  %v253 = vsub.s32 %v250, %v252
  %v254 = vrot.slane %v226, %v253
  %v255 = vcombine.low %v233, %v240
  %v256 = vcombine.low %v247, %v254
  %v258 = vunpack.c.l.s4 1966171168
  %v259 = vunpack.c.0.s8 %v258
  %v260 = vlaneseq
  %v261 = vshrl.u32 %v260, 7
  %v262 = vsub.s32 %v259, %v261
  %v263 = vrot.slane %v255, %v262
  %v265 = vunpack.c.l.s4 1966171168
  %v266 = vunpack.c.0.s8 %v265
  %v267 = vlaneseq
  %v268 = vshrl.u32 %v267, 7
  %v269 = vsub.s32 %v266, %v268
  %v270 = vrot.slane %v256, %v269
  %v271 = vcombine.low %v263, %v270
  %v272 = vcombine.low %v216, %v217
  %v273 = vcombine.low %v218, %v219
  %v274 = vcombine.low %v220, %v221
  %v276 = vunpack.c.l.s4 1966171168
  %v277 = vunpack.c.0.s8 %v276
  %v278 = vlaneseq
  %v279 = vshrl.u32 %v278, 7
  %v280 = vsub.s32 %v277, %v279
  %v281 = vrot.slane %v272, %v280
  %v283 = vunpack.c.l.s4 1966171168
  %v284 = vunpack.c.0.s8 %v283
  %v285 = vlaneseq
  %v286 = vshrl.u32 %v285, 7
  %v287 = vsub.s32 %v284, %v286
  %v288 = vrot.slane %v273, %v287
  %v290 = vunpack.c.l.s4 1966171168
  %v291 = vunpack.c.0.s8 %v290
  %v292 = vlaneseq
  %v293 = vshrl.u32 %v292, 7
  %v294 = vsub.s32 %v291, %v293
  %v295 = vrot.slane %v274, %v294
  %v297 = vunpack.c.l.s4 1966171168
  %v298 = vunpack.c.0.s8 %v297
  %v299 = vlaneseq
  %v300 = vshrl.u32 %v299, 7
  %v301 = vsub.s32 %v298, %v300
  %v302 = vrot.slane %v222, %v301
  %v303 = vcombine.low %v281, %v288
  %v304 = vcombine.low %v295, %v302
  %v306 = vunpack.c.l.s4 1966171168
  %v307 = vunpack.c.0.s8 %v306
  %v308 = vlaneseq
  %v309 = vshrl.u32 %v308, 7
  %v310 = vsub.s32 %v307, %v309
  %v311 = vrot.slane %v303, %v310
  %v313 = vunpack.c.l.s4 1966171168
  %v314 = vunpack.c.0.s8 %v313
  %v315 = vlaneseq
  %v316 = vshrl.u32 %v315, 7
  %v317 = vsub.s32 %v314, %v316
  %v318 = vrot.slane %v304, %v317
  %v319 = vcombine.low %v311, %v318
  %v322 = vunpack.c.l.b16 %v206
  %v323 = vunpack.c.l.b16 %v207
  %v324 = vpack.c.b16 %v323, %v322
  %vm326 = vcmask 130048
  %v328 = vsel %vm326, %v271, 0
  %v331 = vsel %vm326, %v319, 0
  %333 = vmatprep.subr.bf16.mxu0 0
  %334 = vmatpush1.bf16.msra.mxu0 %v324
  %335 = vmatprep.subr.bf16.mxu0 0
  %336 = vmatpush1.bf16.msra.mxu0 0
  %337 = vmatprep.subr.bf16.mxu0 0
  %338 = vmatpush1.bf16.msra.mxu0 0
  %339 = vmatprep.subr.bf16.mxu0 0
  %340 = vmatpush1.bf16.msra.mxu0 0
  %341 = vmatprep.subr.bf16.mxu0 0
  %342 = vmatpush1.bf16.msra.mxu0 0
  %343 = vmatprep.subr.bf16.mxu0 0
  %344 = vmatpush1.bf16.msra.mxu0 0
  %345 = vmatprep.subr.bf16.mxu0 0
  %346 = vmatpush1.bf16.msra.mxu0 0
  %347 = vmatprep.subr.bf16.mxu0 0
  %348 = vmatpush1.bf16.msra.mxu0 0
  %349 = vmatprep.subr.bf16.mxu0 0
  %350 = vmatpush1.bf16.msra.mxu0 0
  %351 = vmatprep.subr.bf16.mxu0 0
  %352 = vmatpush1.bf16.msra.mxu0 0
  %353 = vmatprep.subr.bf16.mxu0 0
  %354 = vmatpush1.bf16.msra.mxu0 0
  %355 = vmatprep.subr.bf16.mxu0 0
  %356 = vmatpush1.bf16.msra.mxu0 0
  %357 = vmatprep.subr.bf16.mxu0 0
  %358 = vmatpush1.bf16.msra.mxu0 0
  %359 = vmatprep.subr.bf16.mxu0 0
  %360 = vmatpush1.bf16.msra.mxu0 0
  %361 = vmatprep.subr.bf16.mxu0 0
  %362 = vmatpush1.bf16.msra.mxu0 0
  %363 = vmatprep.subr.bf16.mxu0 0
  %364 = vmatpush1.bf16.msra.mxu0 0
  %365 = vmatprep.mubr.bf16.mxu0 0
  %366 = vmatmul.mubr.bf16.gmra.mrb[0].mxu0 %v328
  %v367 = vpop.f32.mrb[0].mxu0
  %v368 = vadd.f32 0.0, %v367
  %v369 = vpop.f32.mrb[0].mxu0
  %v370 = vpop.f32.mrb[0].mxu0
  %v371 = vadd.f32 0.0, %v370
  %v372 = vpop.f32.mrb[0].mxu0
  %373 = vmatprep.mubr.bf16.mxu0 0
  %374 = vmatmul.mubr.bf16.gmra.mrb[0].mxu0 %v331
  %v375 = vpop.f32.mrb[0].mxu0
  %v376 = vadd.f32 0.0, %v375
  %v377 = vpop.f32.mrb[0].mxu0
  %v378 = vpop.f32.mrb[0].mxu0
  %v379 = vadd.f32 0.0, %v378
  %v380 = vpop.f32.mrb[0].mxu0
  %381 = vdwg.mxu0
  %v382 = vpack.i.b16 %v168, %v167
  %v383 = vpack.i.b16 %v170, %v169
  %v384 = vpack.i.b16 %v172, %v171
  %v385 = vpack.i.b16 %v174, %v173
  %v386 = vpack.i.b16 %v176, %v175
  %v387 = vpack.i.b16 %v178, %v177
  %v388 = vpack.i.b16 %v180, %v179
  %v389 = vpack.i.b16 %v182, %v181
  %v390 = vpack.i.b16 %v184, %v183
  %v391 = vpack.i.b16 %v186, %v185
  %v392 = vpack.i.b16 %v188, %v187
  %v393 = vpack.i.b16 %v190, %v189
  %v394 = vpack.i.b16 %v192, %v191
  %v395 = vpack.i.b16 %v194, %v193
  %v396 = vpack.i.b16 %v196, %v195
  %v397 = vcombine.low %v382, %v383
  %v398 = vcombine.low %v384, %v385
  %v399 = vcombine.low %v386, %v387
  %v400 = vcombine.low %v388, %v389
  %v402 = vunpack.c.l.s4 1966171168
  %v403 = vunpack.c.0.s8 %v402
  %v404 = vlaneseq
  %v405 = vshrl.u32 %v404, 7
  %v406 = vsub.s32 %v403, %v405
  %v407 = vrot.slane %v397, %v406
  %v409 = vunpack.c.l.s4 1966171168
  %v410 = vunpack.c.0.s8 %v409
  %v411 = vlaneseq
  %v412 = vshrl.u32 %v411, 7
  %v413 = vsub.s32 %v410, %v412
  %v414 = vrot.slane %v398, %v413
  %v416 = vunpack.c.l.s4 1966171168
  %v417 = vunpack.c.0.s8 %v416
  %v418 = vlaneseq
  %v419 = vshrl.u32 %v418, 7
  %v420 = vsub.s32 %v417, %v419
  %v421 = vrot.slane %v399, %v420
  %v423 = vunpack.c.l.s4 1966171168
  %v424 = vunpack.c.0.s8 %v423
  %v425 = vlaneseq
  %v426 = vshrl.u32 %v425, 7
  %v427 = vsub.s32 %v424, %v426
  %v428 = vrot.slane %v400, %v427
  %v429 = vcombine.low %v407, %v414
  %v430 = vcombine.low %v421, %v428
  %v432 = vunpack.c.l.s4 1966171168
  %v433 = vunpack.c.0.s8 %v432
  %v434 = vlaneseq
  %v435 = vshrl.u32 %v434, 7
  %v436 = vsub.s32 %v433, %v435
  %v437 = vrot.slane %v429, %v436
  %v439 = vunpack.c.l.s4 1966171168
  %v440 = vunpack.c.0.s8 %v439
  %v441 = vlaneseq
  %v442 = vshrl.u32 %v441, 7
  %v443 = vsub.s32 %v440, %v442
  %v444 = vrot.slane %v430, %v443
  %v445 = vcombine.low %v437, %v444
  %v446 = vcombine.low %v390, %v391
  %v447 = vcombine.low %v392, %v393
  %v448 = vcombine.low %v394, %v395
  %v450 = vunpack.c.l.s4 1966171168
  %v451 = vunpack.c.0.s8 %v450
  %v452 = vlaneseq
  %v453 = vshrl.u32 %v452, 7
  %v454 = vsub.s32 %v451, %v453
  %v455 = vrot.slane %v446, %v454
  %v457 = vunpack.c.l.s4 1966171168
  %v458 = vunpack.c.0.s8 %v457
  %v459 = vlaneseq
  %v460 = vshrl.u32 %v459, 7
  %v461 = vsub.s32 %v458, %v460
  %v462 = vrot.slane %v447, %v461
  %v464 = vunpack.c.l.s4 1966171168
  %v465 = vunpack.c.0.s8 %v464
  %v466 = vlaneseq
  %v467 = vshrl.u32 %v466, 7
  %v468 = vsub.s32 %v465, %v467
  %v469 = vrot.slane %v448, %v468
  %v471 = vunpack.c.l.s4 1966171168
  %v472 = vunpack.c.0.s8 %v471
  %v473 = vlaneseq
  %v474 = vshrl.u32 %v473, 7
  %v475 = vsub.s32 %v472, %v474
  %v476 = vrot.slane %v396, %v475
  %v477 = vcombine.low %v455, %v462
  %v478 = vcombine.low %v469, %v476
  %v480 = vunpack.c.l.s4 1966171168
  %v481 = vunpack.c.0.s8 %v480
  %v482 = vlaneseq
  %v483 = vshrl.u32 %v482, 7
  %v484 = vsub.s32 %v481, %v483
  %v485 = vrot.slane %v477, %v484
  %v487 = vunpack.c.l.s4 1966171168
  %v488 = vunpack.c.0.s8 %v487
  %v489 = vlaneseq
  %v490 = vshrl.u32 %v489, 7
  %v491 = vsub.s32 %v488, %v490
  %v492 = vrot.slane %v478, %v491
  %v493 = vcombine.low %v485, %v492
  %v496 = vunpack.c.l.b16 %v197
  %v497 = vunpack.c.l.b16 %v198
  %v498 = vpack.c.b16 %v497, %v496
  %v501 = vsel %vm326, %v445, 0
  %v504 = vsel %vm326, %v493, 0
  %506 = vmatprep.subr.bf16.mxu0 0
  %507 = vmatpush1.bf16.msra.mxu0 %v498
  %508 = vmatprep.subr.bf16.mxu0 0
  %509 = vmatpush1.bf16.msra.mxu0 0
  %510 = vmatprep.subr.bf16.mxu0 0
  %511 = vmatpush1.bf16.msra.mxu0 0
  %512 = vmatprep.subr.bf16.mxu0 0
  %513 = vmatpush1.bf16.msra.mxu0 0
  %514 = vmatprep.subr.bf16.mxu0 0
  %515 = vmatpush1.bf16.msra.mxu0 0
  %516 = vmatprep.subr.bf16.mxu0 0
  %517 = vmatpush1.bf16.msra.mxu0 0
  %518 = vmatprep.subr.bf16.mxu0 0
  %519 = vmatpush1.bf16.msra.mxu0 0
  %520 = vmatprep.subr.bf16.mxu0 0
  %521 = vmatpush1.bf16.msra.mxu0 0
  %522 = vmatprep.subr.bf16.mxu0 0
  %523 = vmatpush1.bf16.msra.mxu0 0
  %524 = vmatprep.subr.bf16.mxu0 0
  %525 = vmatpush1.bf16.msra.mxu0 0
  %526 = vmatprep.subr.bf16.mxu0 0
  %527 = vmatpush1.bf16.msra.mxu0 0
  %528 = vmatprep.subr.bf16.mxu0 0
  %529 = vmatpush1.bf16.msra.mxu0 0
  %530 = vmatprep.subr.bf16.mxu0 0
  %531 = vmatpush1.bf16.msra.mxu0 0
  %532 = vmatprep.subr.bf16.mxu0 0
  %533 = vmatpush1.bf16.msra.mxu0 0
  %534 = vmatprep.subr.bf16.mxu0 0
  %535 = vmatpush1.bf16.msra.mxu0 0
  %536 = vmatprep.subr.bf16.mxu0 0
  %537 = vmatpush1.bf16.msra.mxu0 0
  %538 = vmatprep.mubr.bf16.mxu0 0
  %539 = vmatmul.mubr.bf16.gmra.mrb[0].mxu0 %v501
  %v540 = vpop.f32.mrb[0].mxu0
  %v541 = vadd.f32 %v368, %v540
  %v542 = vpop.f32.mrb[0].mxu0
  %v543 = vpop.f32.mrb[0].mxu0
  %v544 = vadd.f32 %v371, %v543
  %v545 = vpop.f32.mrb[0].mxu0
  %546 = vmatprep.mubr.bf16.mxu0 0
  %547 = vmatmul.mubr.bf16.gmra.mrb[0].mxu0 %v504
  %v548 = vpop.f32.mrb[0].mxu0
  %v549 = vadd.f32 %v376, %v548
  %v550 = vpop.f32.mrb[0].mxu0
  %v551 = vpop.f32.mrb[0].mxu0
  %v552 = vadd.f32 %v379, %v551
  %v553 = vpop.f32.mrb[0].mxu0
  %554 = vdwg.mxu0
  %v555 = vld [vmem:[%s0] sm:$0x7]
  %v556 = vld [vmem:[%s0 + $0x4] sm:$0x7]
  %v557 = vld [vmem:[%s0 + $0x8] sm:$0x7]
  %v558 = vld [vmem:[%s0 + $0x14] sm:$0x7]
  %v559 = vld [vmem:[%s0 + $0x18] sm:$0x7]
  %v560 = vld [vmem:[%s0 + $0x1c] sm:$0x7]
  %v568 = vunpack.c.l.s4 1966171168
  %v569 = vunpack.c.0.s8 %v568
  %v570 = vlaneseq
  %v571 = vshrl.u32 %v570, 7
  %v572 = vsub.s32 %v569, %v571
  %v573 = vrot.slane %v555, %v572
  %v574 = vcombine.high %v573, %v573
  %v576 = vunpack.c.l.s4 1966171168
  %v577 = vunpack.c.0.s8 %v576
  %v578 = vlaneseq
  %v579 = vshrl.u32 %v578, 7
  %v580 = vsub.s32 %v577, %v579
  %v581 = vrot.slane %v573, %v580
  %v583 = vunpack.c.l.s4 1966171168
  %v584 = vunpack.c.0.s8 %v583
  %v585 = vlaneseq
  %v586 = vshrl.u32 %v585, 7
  %v587 = vsub.s32 %v584, %v586
  %v588 = vrot.slane %v574, %v587
  %v589 = vcombine.high %v581, %v581
  %v591 = vunpack.c.l.s4 1966171168
  %v592 = vunpack.c.0.s8 %v591
  %v593 = vlaneseq
  %v594 = vshrl.u32 %v593, 7
  %v595 = vsub.s32 %v592, %v594
  %v596 = vrot.slane %v556, %v595
  %v597 = vcombine.high %v596, %v596
  %v599 = vunpack.c.l.s4 1966171168
  %v600 = vunpack.c.0.s8 %v599
  %v601 = vlaneseq
  %v602 = vshrl.u32 %v601, 7
  %v603 = vsub.s32 %v600, %v602
  %v604 = vrot.slane %v596, %v603
  %v606 = vunpack.c.l.s4 1966171168
  %v607 = vunpack.c.0.s8 %v606
  %v608 = vlaneseq
  %v609 = vshrl.u32 %v608, 7
  %v610 = vsub.s32 %v607, %v609
  %v611 = vrot.slane %v597, %v610
  %v612 = vcombine.high %v604, %v604
  %v614 = vunpack.c.l.s4 1966171168
  %v615 = vunpack.c.0.s8 %v614
  %v616 = vlaneseq
  %v617 = vshrl.u32 %v616, 7
  %v618 = vsub.s32 %v615, %v617
  %v619 = vrot.slane %v557, %v618
  %v620 = vcombine.high %v619, %v619
  %v622 = vunpack.c.l.s4 1966171168
  %v623 = vunpack.c.0.s8 %v622
  %v624 = vlaneseq
  %v625 = vshrl.u32 %v624, 7
  %v626 = vsub.s32 %v623, %v625
  %v627 = vrot.slane %v619, %v626
  %v629 = vunpack.c.l.s4 1966171168
  %v630 = vunpack.c.0.s8 %v629
  %v631 = vlaneseq
  %v632 = vshrl.u32 %v631, 7
  %v633 = vsub.s32 %v630, %v632
  %v634 = vrot.slane %v620, %v633
  %v635 = vcombine.high %v627, %v627
  %v637 = vunpack.c.l.s4 1966171168
  %v638 = vunpack.c.0.s8 %v637
  %v639 = vlaneseq
  %v640 = vshrl.u32 %v639, 7
  %v641 = vsub.s32 %v638, %v640
  %v642 = vrot.slane %v558, %v641
  %v643 = vcombine.high %v642, %v642
  %v645 = vunpack.c.l.s4 1966171168
  %v646 = vunpack.c.0.s8 %v645
  %v647 = vlaneseq
  %v648 = vshrl.u32 %v647, 7
  %v649 = vsub.s32 %v646, %v648
  %v650 = vrot.slane %v642, %v649
  %v652 = vunpack.c.l.s4 1966171168
  %v653 = vunpack.c.0.s8 %v652
  %v654 = vlaneseq
  %v655 = vshrl.u32 %v654, 7
  %v656 = vsub.s32 %v653, %v655
  %v657 = vrot.slane %v643, %v656
  %v658 = vcombine.high %v650, %v650
  %v660 = vunpack.c.l.s4 1966171168
  %v661 = vunpack.c.0.s8 %v660
  %v662 = vlaneseq
  %v663 = vshrl.u32 %v662, 7
  %v664 = vsub.s32 %v661, %v663
  %v665 = vrot.slane %v559, %v664
  %v666 = vcombine.high %v665, %v665
  %v668 = vunpack.c.l.s4 1966171168
  %v669 = vunpack.c.0.s8 %v668
  %v670 = vlaneseq
  %v671 = vshrl.u32 %v670, 7
  %v672 = vsub.s32 %v669, %v671
  %v673 = vrot.slane %v665, %v672
  %v675 = vunpack.c.l.s4 1966171168
  %v676 = vunpack.c.0.s8 %v675
  %v677 = vlaneseq
  %v678 = vshrl.u32 %v677, 7
  %v679 = vsub.s32 %v676, %v678
  %v680 = vrot.slane %v666, %v679
  %v681 = vcombine.high %v673, %v673
  %v683 = vunpack.c.l.s4 1966171168
  %v684 = vunpack.c.0.s8 %v683
  %v685 = vlaneseq
  %v686 = vshrl.u32 %v685, 7
  %v687 = vsub.s32 %v684, %v686
  %v688 = vrot.slane %v560, %v687
  %v689 = vcombine.high %v688, %v688
  %v691 = vunpack.c.l.s4 1966171168
  %v692 = vunpack.c.0.s8 %v691
  %v693 = vlaneseq
  %v694 = vshrl.u32 %v693, 7
  %v695 = vsub.s32 %v692, %v694
  %v696 = vrot.slane %v688, %v695
  %v698 = vunpack.c.l.s4 1966171168
  %v699 = vunpack.c.0.s8 %v698
  %v700 = vlaneseq
  %v701 = vshrl.u32 %v700, 7
  %v702 = vsub.s32 %v699, %v701
  %v703 = vrot.slane %v689, %v702
  %v704 = vcombine.high %v696, %v696
  %v705 = vunpack.i.h.s16 %v581
  %v706 = vunpack.i.l.s16 %v588
  %v707 = vunpack.i.h.s16 %v588
  %v708 = vunpack.i.l.s16 %v589
  %v709 = vunpack.i.h.s16 %v589
  %v710 = vunpack.i.h.s16 %v604
  %v711 = vunpack.i.l.s16 %v611
  %v712 = vunpack.i.h.s16 %v611
  %v713 = vunpack.i.l.s16 %v612
  %v714 = vunpack.i.h.s16 %v612
  %v715 = vunpack.i.h.s16 %v627
  %v716 = vunpack.i.l.s16 %v634
  %v717 = vunpack.i.h.s16 %v634
  %v718 = vunpack.i.l.s16 %v635
  %v719 = vunpack.i.h.s16 %v635
  %v720 = vunpack.i.h.s16 %v650
  %v721 = vunpack.i.l.s16 %v657
  %v722 = vunpack.i.h.s16 %v657
  %v723 = vunpack.i.l.s16 %v658
  %v724 = vunpack.i.h.s16 %v658
  %v725 = vunpack.i.h.s16 %v673
  %v726 = vunpack.i.l.s16 %v680
  %v727 = vunpack.i.h.s16 %v680
  %v728 = vunpack.i.l.s16 %v681
  %v729 = vunpack.i.h.s16 %v681
  %v730 = vunpack.i.h.s16 %v696
  %v731 = vunpack.i.l.s16 %v703
  %v732 = vunpack.i.h.s16 %v703
  %v733 = vunpack.i.l.s16 %v704
  %v734 = vunpack.i.h.s16 %v704
  %s735 = scalar_lea.vmem %s1, 16
  %v736 = vld [vmem:[%s735] sm:$0xf]
  %v737 = vld [vmem:[%s735 + $0x4] sm:$0xf]
  %v738 = vpack.i.b16 %v706, %v705
  %v739 = vpack.i.b16 %v708, %v707
  %v740 = vpack.i.b16 %v710, %v709
  %v741 = vpack.i.b16 %v712, %v711
  %v742 = vpack.i.b16 %v714, %v713
  %v743 = vpack.i.b16 %v716, %v715
  %v744 = vpack.i.b16 %v718, %v717
  %v745 = vpack.i.b16 %v720, %v719
  %v746 = vpack.i.b16 %v722, %v721
  %v747 = vpack.i.b16 %v724, %v723
  %v748 = vpack.i.b16 %v726, %v725
  %v749 = vpack.i.b16 %v728, %v727
  %v750 = vpack.i.b16 %v730, %v729
  %v751 = vpack.i.b16 %v732, %v731
  %v752 = vpack.i.b16 %v734, %v733
  %v753 = vcombine.low %v738, %v739
  %v754 = vcombine.low %v740, %v741
  %v755 = vcombine.low %v742, %v743
  %v756 = vcombine.low %v744, %v745
  %v758 = vunpack.c.l.s4 1966171168
  %v759 = vunpack.c.0.s8 %v758
  %v760 = vlaneseq
  %v761 = vshrl.u32 %v760, 7
  %v762 = vsub.s32 %v759, %v761
  %v763 = vrot.slane %v753, %v762
  %v765 = vunpack.c.l.s4 1966171168
  %v766 = vunpack.c.0.s8 %v765
  %v767 = vlaneseq
  %v768 = vshrl.u32 %v767, 7
  %v769 = vsub.s32 %v766, %v768
  %v770 = vrot.slane %v754, %v769
  %v772 = vunpack.c.l.s4 1966171168
  %v773 = vunpack.c.0.s8 %v772
  %v774 = vlaneseq
  %v775 = vshrl.u32 %v774, 7
  %v776 = vsub.s32 %v773, %v775
  %v777 = vrot.slane %v755, %v776
  %v779 = vunpack.c.l.s4 1966171168
  %v780 = vunpack.c.0.s8 %v779
  %v781 = vlaneseq
  %v782 = vshrl.u32 %v781, 7
  %v783 = vsub.s32 %v780, %v782
  %v784 = vrot.slane %v756, %v783
  %v785 = vcombine.low %v763, %v770
  %v786 = vcombine.low %v777, %v784
  %v788 = vunpack.c.l.s4 1966171168
  %v789 = vunpack.c.0.s8 %v788
  %v790 = vlaneseq
  %v791 = vshrl.u32 %v790, 7
  %v792 = vsub.s32 %v789, %v791
  %v793 = vrot.slane %v785, %v792
  %v795 = vunpack.c.l.s4 1966171168
  %v796 = vunpack.c.0.s8 %v795
  %v797 = vlaneseq
  %v798 = vshrl.u32 %v797, 7
  %v799 = vsub.s32 %v796, %v798
  %v800 = vrot.slane %v786, %v799
  %v801 = vcombine.low %v793, %v800
  %v802 = vcombine.low %v746, %v747
  %v803 = vcombine.low %v748, %v749
  %v804 = vcombine.low %v750, %v751
  %v806 = vunpack.c.l.s4 1966171168
  %v807 = vunpack.c.0.s8 %v806
  %v808 = vlaneseq
  %v809 = vshrl.u32 %v808, 7
  %v810 = vsub.s32 %v807, %v809
  %v811 = vrot.slane %v802, %v810
  %v813 = vunpack.c.l.s4 1966171168
  %v814 = vunpack.c.0.s8 %v813
  %v815 = vlaneseq
  %v816 = vshrl.u32 %v815, 7
  %v817 = vsub.s32 %v814, %v816
  %v818 = vrot.slane %v803, %v817
  %v820 = vunpack.c.l.s4 1966171168
  %v821 = vunpack.c.0.s8 %v820
  %v822 = vlaneseq
  %v823 = vshrl.u32 %v822, 7
  %v824 = vsub.s32 %v821, %v823
  %v825 = vrot.slane %v804, %v824
  %v827 = vunpack.c.l.s4 1966171168
  %v828 = vunpack.c.0.s8 %v827
  %v829 = vlaneseq
  %v830 = vshrl.u32 %v829, 7
  %v831 = vsub.s32 %v828, %v830
  %v832 = vrot.slane %v752, %v831
  %v833 = vcombine.low %v811, %v818
  %v834 = vcombine.low %v825, %v832
  %v836 = vunpack.c.l.s4 1966171168
  %v837 = vunpack.c.0.s8 %v836
  %v838 = vlaneseq
  %v839 = vshrl.u32 %v838, 7
  %v840 = vsub.s32 %v837, %v839
  %v841 = vrot.slane %v833, %v840
  %v843 = vunpack.c.l.s4 1966171168
  %v844 = vunpack.c.0.s8 %v843
  %v845 = vlaneseq
  %v846 = vshrl.u32 %v845, 7
  %v847 = vsub.s32 %v844, %v846
  %v848 = vrot.slane %v834, %v847
  %v849 = vcombine.low %v841, %v848
  %v852 = vunpack.c.l.b16 %v736
  %v853 = vunpack.c.l.b16 %v737
  %v854 = vpack.c.b16 %v853, %v852
  %v857 = vsel %vm326, %v801, 0
  %v860 = vsel %vm326, %v849, 0
  %862 = vmatprep.subr.bf16.mxu0 0
  %863 = vmatpush1.bf16.msra.mxu0 %v854
  %864 = vmatprep.subr.bf16.mxu0 0
  %865 = vmatpush1.bf16.msra.mxu0 0
  %866 = vmatprep.subr.bf16.mxu0 0
  %867 = vmatpush1.bf16.msra.mxu0 0
  %868 = vmatprep.subr.bf16.mxu0 0
  %869 = vmatpush1.bf16.msra.mxu0 0
  %870 = vmatprep.subr.bf16.mxu0 0
  %871 = vmatpush1.bf16.msra.mxu0 0
  %872 = vmatprep.subr.bf16.mxu0 0
  %873 = vmatpush1.bf16.msra.mxu0 0
  %874 = vmatprep.subr.bf16.mxu0 0
  %875 = vmatpush1.bf16.msra.mxu0 0
  %876 = vmatprep.subr.bf16.mxu0 0
  %877 = vmatpush1.bf16.msra.mxu0 0
  %878 = vmatprep.subr.bf16.mxu0 0
  %879 = vmatpush1.bf16.msra.mxu0 0
  %880 = vmatprep.subr.bf16.mxu0 0
  %881 = vmatpush1.bf16.msra.mxu0 0
  %882 = vmatprep.subr.bf16.mxu0 0
  %883 = vmatpush1.bf16.msra.mxu0 0
  %884 = vmatprep.subr.bf16.mxu0 0
  %885 = vmatpush1.bf16.msra.mxu0 0
  %886 = vmatprep.subr.bf16.mxu0 0
  %887 = vmatpush1.bf16.msra.mxu0 0
  %888 = vmatprep.subr.bf16.mxu0 0
  %889 = vmatpush1.bf16.msra.mxu0 0
  %890 = vmatprep.subr.bf16.mxu0 0
  %891 = vmatpush1.bf16.msra.mxu0 0
  %892 = vmatprep.subr.bf16.mxu0 0
  %893 = vmatpush1.bf16.msra.mxu0 0
  %894 = vmatprep.mubr.bf16.mxu0 0
  %895 = vmatmul.mubr.bf16.gmra.mrb[0].mxu0 %v857
  %v896 = vpop.f32.mrb[0].mxu0
  %v897 = vadd.f32 0.0, %v896
  %v898 = vpop.f32.mrb[0].mxu0
  %v899 = vpop.f32.mrb[0].mxu0
  %v900 = vadd.f32 0.0, %v899
  %v901 = vpop.f32.mrb[0].mxu0
  %902 = vmatprep.mubr.bf16.mxu0 0
  %903 = vmatmul.mubr.bf16.gmra.mrb[0].mxu0 %v860
  %v904 = vpop.f32.mrb[0].mxu0
  %v905 = vadd.f32 0.0, %v904
  %v906 = vpop.f32.mrb[0].mxu0
  %v907 = vpop.f32.mrb[0].mxu0
  %v908 = vadd.f32 0.0, %v907
  %v909 = vpop.f32.mrb[0].mxu0
  %910 = vdwg.mxu0
  %v911 = vadd.f32 %v541, %v897
  %v912 = vadd.f32 %v544, %v900
  %v913 = vadd.f32 %v549, %v905
  %v914 = vadd.f32 %v552, %v908
  %v915 = vld [vmem:[%s0] sm:$0x7]
  %v916 = vld [vmem:[%s0 + $0x4] sm:$0x7]
  %v917 = vld [vmem:[%s0 + $0x8] sm:$0x7]
  %v918 = vld [vmem:[%s0 + $0x14] sm:$0x7]
  %v919 = vld [vmem:[%s0 + $0x18] sm:$0x7]
  %v920 = vld [vmem:[%s0 + $0x1c] sm:$0x7]
  %v928 = vunpack.c.l.s4 1966171168
  %v929 = vunpack.c.0.s8 %v928
  %v930 = vlaneseq
  %v931 = vshrl.u32 %v930, 7
  %v932 = vsub.s32 %v929, %v931
  %v933 = vrot.slane %v915, %v932
  %v934 = vcombine.high %v933, %v933
  %v936 = vunpack.c.l.s4 1966171168
  %v937 = vunpack.c.0.s8 %v936
  %v938 = vlaneseq
  %v939 = vshrl.u32 %v938, 7
  %v940 = vsub.s32 %v937, %v939
  %v941 = vrot.slane %v933, %v940
  %v943 = vunpack.c.l.s4 1966171168
  %v944 = vunpack.c.0.s8 %v943
  %v945 = vlaneseq
  %v946 = vshrl.u32 %v945, 7
  %v947 = vsub.s32 %v944, %v946
  %v948 = vrot.slane %v934, %v947
  %v949 = vcombine.high %v941, %v941
  %v951 = vunpack.c.l.s4 1966171168
  %v952 = vunpack.c.0.s8 %v951
  %v953 = vlaneseq
  %v954 = vshrl.u32 %v953, 7
  %v955 = vsub.s32 %v952, %v954
  %v956 = vrot.slane %v916, %v955
  %v957 = vcombine.high %v956, %v956
  %v959 = vunpack.c.l.s4 1966171168
  %v960 = vunpack.c.0.s8 %v959
  %v961 = vlaneseq
  %v962 = vshrl.u32 %v961, 7
  %v963 = vsub.s32 %v960, %v962
  %v964 = vrot.slane %v956, %v963
  %v966 = vunpack.c.l.s4 1966171168
  %v967 = vunpack.c.0.s8 %v966
  %v968 = vlaneseq
  %v969 = vshrl.u32 %v968, 7
  %v970 = vsub.s32 %v967, %v969
  %v971 = vrot.slane %v957, %v970
  %v972 = vcombine.high %v964, %v964
  %v974 = vunpack.c.l.s4 1966171168
  %v975 = vunpack.c.0.s8 %v974
  %v976 = vlaneseq
  %v977 = vshrl.u32 %v976, 7
  %v978 = vsub.s32 %v975, %v977
  %v979 = vrot.slane %v917, %v978
  %v980 = vcombine.high %v979, %v979
  %v982 = vunpack.c.l.s4 1966171168
  %v983 = vunpack.c.0.s8 %v982
  %v984 = vlaneseq
  %v985 = vshrl.u32 %v984, 7
  %v986 = vsub.s32 %v983, %v985
  %v987 = vrot.slane %v979, %v986
  %v989 = vunpack.c.l.s4 1966171168
  %v990 = vunpack.c.0.s8 %v989
  %v991 = vlaneseq
  %v992 = vshrl.u32 %v991, 7
  %v993 = vsub.s32 %v990, %v992
  %v994 = vrot.slane %v980, %v993
  %v995 = vcombine.high %v987, %v987
  %v997 = vunpack.c.l.s4 1966171168
  %v998 = vunpack.c.0.s8 %v997
  %v999 = vlaneseq
  %v1000 = vshrl.u32 %v999, 7
  %v1001 = vsub.s32 %v998, %v1000
  %v1002 = vrot.slane %v918, %v1001
  %v1003 = vcombine.high %v1002, %v1002
  %v1005 = vunpack.c.l.s4 1966171168
  %v1006 = vunpack.c.0.s8 %v1005
  %v1007 = vlaneseq
  %v1008 = vshrl.u32 %v1007, 7
  %v1009 = vsub.s32 %v1006, %v1008
  %v1010 = vrot.slane %v1002, %v1009
  %v1012 = vunpack.c.l.s4 1966171168
  %v1013 = vunpack.c.0.s8 %v1012
  %v1014 = vlaneseq
  %v1015 = vshrl.u32 %v1014, 7
  %v1016 = vsub.s32 %v1013, %v1015
  %v1017 = vrot.slane %v1003, %v1016
  %v1018 = vcombine.high %v1010, %v1010
  %v1020 = vunpack.c.l.s4 1966171168
  %v1021 = vunpack.c.0.s8 %v1020
  %v1022 = vlaneseq
  %v1023 = vshrl.u32 %v1022, 7
  %v1024 = vsub.s32 %v1021, %v1023
  %v1025 = vrot.slane %v919, %v1024
  %v1026 = vcombine.high %v1025, %v1025
  %v1028 = vunpack.c.l.s4 1966171168
  %v1029 = vunpack.c.0.s8 %v1028
  %v1030 = vlaneseq
  %v1031 = vshrl.u32 %v1030, 7
  %v1032 = vsub.s32 %v1029, %v1031
  %v1033 = vrot.slane %v1025, %v1032
  %v1035 = vunpack.c.l.s4 1966171168
  %v1036 = vunpack.c.0.s8 %v1035
  %v1037 = vlaneseq
  %v1038 = vshrl.u32 %v1037, 7
  %v1039 = vsub.s32 %v1036, %v1038
  %v1040 = vrot.slane %v1026, %v1039
  %v1041 = vcombine.high %v1033, %v1033
  %v1043 = vunpack.c.l.s4 1966171168
  %v1044 = vunpack.c.0.s8 %v1043
  %v1045 = vlaneseq
  %v1046 = vshrl.u32 %v1045, 7
  %v1047 = vsub.s32 %v1044, %v1046
  %v1048 = vrot.slane %v920, %v1047
  %v1049 = vcombine.high %v1048, %v1048
  %v1051 = vunpack.c.l.s4 1966171168
  %v1052 = vunpack.c.0.s8 %v1051
  %v1053 = vlaneseq
  %v1054 = vshrl.u32 %v1053, 7
  %v1055 = vsub.s32 %v1052, %v1054
  %v1056 = vrot.slane %v1048, %v1055
  %v1058 = vunpack.c.l.s4 1966171168
  %v1059 = vunpack.c.0.s8 %v1058
  %v1060 = vlaneseq
  %v1061 = vshrl.u32 %v1060, 7
  %v1062 = vsub.s32 %v1059, %v1061
  %v1063 = vrot.slane %v1049, %v1062
  %v1064 = vcombine.high %v1056, %v1056
  %v1065 = vunpack.i.l.s16 %v941
  %v1066 = vunpack.i.h.s16 %v941
  %v1067 = vunpack.i.l.s16 %v948
  %v1068 = vunpack.i.h.s16 %v948
  %v1069 = vunpack.i.l.s16 %v949
  %v1070 = vunpack.i.l.s16 %v964
  %v1071 = vunpack.i.h.s16 %v964
  %v1072 = vunpack.i.l.s16 %v971
  %v1073 = vunpack.i.h.s16 %v971
  %v1074 = vunpack.i.l.s16 %v972
  %v1075 = vunpack.i.l.s16 %v987
  %v1076 = vunpack.i.h.s16 %v987
  %v1077 = vunpack.i.l.s16 %v994
  %v1078 = vunpack.i.h.s16 %v994
  %v1079 = vunpack.i.l.s16 %v995
  %v1080 = vunpack.i.l.s16 %v1010
  %v1081 = vunpack.i.h.s16 %v1010
  %v1082 = vunpack.i.l.s16 %v1017
  %v1083 = vunpack.i.h.s16 %v1017
  %v1084 = vunpack.i.l.s16 %v1018
  %v1085 = vunpack.i.l.s16 %v1033
  %v1086 = vunpack.i.h.s16 %v1033
  %v1087 = vunpack.i.l.s16 %v1040
  %v1088 = vunpack.i.h.s16 %v1040
  %v1089 = vunpack.i.l.s16 %v1041
  %v1090 = vunpack.i.l.s16 %v1056
  %v1091 = vunpack.i.h.s16 %v1056
  %v1092 = vunpack.i.l.s16 %v1063
  %v1093 = vunpack.i.h.s16 %v1063
  %v1094 = vunpack.i.l.s16 %v1064
  %s1095 = scalar_lea.vmem %s1, 24
  %v1096 = vld [vmem:[%s1095] sm:$0xf]
  %v1097 = vld [vmem:[%s1095 + $0x4] sm:$0xf]
  %v1098 = vpack.i.b16 %v1066, %v1065
  %v1099 = vpack.i.b16 %v1068, %v1067
  %v1100 = vpack.i.b16 %v1070, %v1069
  %v1101 = vpack.i.b16 %v1072, %v1071
  %v1102 = vpack.i.b16 %v1074, %v1073
  %v1103 = vpack.i.b16 %v1076, %v1075
  %v1104 = vpack.i.b16 %v1078, %v1077
  %v1105 = vpack.i.b16 %v1080, %v1079
  %v1106 = vpack.i.b16 %v1082, %v1081
  %v1107 = vpack.i.b16 %v1084, %v1083
  %v1108 = vpack.i.b16 %v1086, %v1085
  %v1109 = vpack.i.b16 %v1088, %v1087
  %v1110 = vpack.i.b16 %v1090, %v1089
  %v1111 = vpack.i.b16 %v1092, %v1091
  %v1112 = vpack.i.b16 %v1094, %v1093
  %v1113 = vcombine.low %v1098, %v1099
  %v1114 = vcombine.low %v1100, %v1101
  %v1115 = vcombine.low %v1102, %v1103
  %v1116 = vcombine.low %v1104, %v1105
  %v1118 = vunpack.c.l.s4 1966171168
  %v1119 = vunpack.c.0.s8 %v1118
  %v1120 = vlaneseq
  %v1121 = vshrl.u32 %v1120, 7
  %v1122 = vsub.s32 %v1119, %v1121
  %v1123 = vrot.slane %v1113, %v1122
  %v1125 = vunpack.c.l.s4 1966171168
  %v1126 = vunpack.c.0.s8 %v1125
  %v1127 = vlaneseq
  %v1128 = vshrl.u32 %v1127, 7
  %v1129 = vsub.s32 %v1126, %v1128
  %v1130 = vrot.slane %v1114, %v1129
  %v1132 = vunpack.c.l.s4 1966171168
  %v1133 = vunpack.c.0.s8 %v1132
  %v1134 = vlaneseq
  %v1135 = vshrl.u32 %v1134, 7
  %v1136 = vsub.s32 %v1133, %v1135
  %v1137 = vrot.slane %v1115, %v1136
  %v1139 = vunpack.c.l.s4 1966171168
  %v1140 = vunpack.c.0.s8 %v1139
  %v1141 = vlaneseq
  %v1142 = vshrl.u32 %v1141, 7
  %v1143 = vsub.s32 %v1140, %v1142
  %v1144 = vrot.slane %v1116, %v1143
  %v1145 = vcombine.low %v1123, %v1130
  %v1146 = vcombine.low %v1137, %v1144
  %v1148 = vunpack.c.l.s4 1966171168
  %v1149 = vunpack.c.0.s8 %v1148
  %v1150 = vlaneseq
  %v1151 = vshrl.u32 %v1150, 7
  %v1152 = vsub.s32 %v1149, %v1151
  %v1153 = vrot.slane %v1145, %v1152
  %v1155 = vunpack.c.l.s4 1966171168
  %v1156 = vunpack.c.0.s8 %v1155
  %v1157 = vlaneseq
  %v1158 = vshrl.u32 %v1157, 7
  %v1159 = vsub.s32 %v1156, %v1158
  %v1160 = vrot.slane %v1146, %v1159
  %v1161 = vcombine.low %v1153, %v1160
  %v1162 = vcombine.low %v1106, %v1107
  %v1163 = vcombine.low %v1108, %v1109
  %v1164 = vcombine.low %v1110, %v1111
  %v1166 = vunpack.c.l.s4 1966171168
  %v1167 = vunpack.c.0.s8 %v1166
  %v1168 = vlaneseq
  %v1169 = vshrl.u32 %v1168, 7
  %v1170 = vsub.s32 %v1167, %v1169
  %v1171 = vrot.slane %v1162, %v1170
  %v1173 = vunpack.c.l.s4 1966171168
  %v1174 = vunpack.c.0.s8 %v1173
  %v1175 = vlaneseq
  %v1176 = vshrl.u32 %v1175, 7
  %v1177 = vsub.s32 %v1174, %v1176
  %v1178 = vrot.slane %v1163, %v1177
  %v1180 = vunpack.c.l.s4 1966171168
  %v1181 = vunpack.c.0.s8 %v1180
  %v1182 = vlaneseq
  %v1183 = vshrl.u32 %v1182, 7
  %v1184 = vsub.s32 %v1181, %v1183
  %v1185 = vrot.slane %v1164, %v1184
  %v1187 = vunpack.c.l.s4 1966171168
  %v1188 = vunpack.c.0.s8 %v1187
  %v1189 = vlaneseq
  %v1190 = vshrl.u32 %v1189, 7
  %v1191 = vsub.s32 %v1188, %v1190
  %v1192 = vrot.slane %v1112, %v1191
  %v1193 = vcombine.low %v1171, %v1178
  %v1194 = vcombine.low %v1185, %v1192
  %v1196 = vunpack.c.l.s4 1966171168
  %v1197 = vunpack.c.0.s8 %v1196
  %v1198 = vlaneseq
  %v1199 = vshrl.u32 %v1198, 7
  %v1200 = vsub.s32 %v1197, %v1199
  %v1201 = vrot.slane %v1193, %v1200
  %v1203 = vunpack.c.l.s4 1966171168
  %v1204 = vunpack.c.0.s8 %v1203
  %v1205 = vlaneseq
  %v1206 = vshrl.u32 %v1205, 7
  %v1207 = vsub.s32 %v1204, %v1206
  %v1208 = vrot.slane %v1194, %v1207
  %v1209 = vcombine.low %v1201, %v1208
  %v1212 = vunpack.c.l.b16 %v1096
  %v1213 = vunpack.c.l.b16 %v1097
  %v1214 = vpack.c.b16 %v1213, %v1212
  %v1217 = vsel %vm326, %v1161, 0
  %v1220 = vsel %vm326, %v1209, 0
  %1222 = vmatprep.subr.bf16.mxu0 0
  %1223 = vmatpush1.bf16.msra.mxu0 %v1214
  %1224 = vmatprep.subr.bf16.mxu0 0
  %1225 = vmatpush1.bf16.msra.mxu0 0
  %1226 = vmatprep.subr.bf16.mxu0 0
  %1227 = vmatpush1.bf16.msra.mxu0 0
  %1228 = vmatprep.subr.bf16.mxu0 0
  %1229 = vmatpush1.bf16.msra.mxu0 0
  %1230 = vmatprep.subr.bf16.mxu0 0
  %1231 = vmatpush1.bf16.msra.mxu0 0
  %1232 = vmatprep.subr.bf16.mxu0 0
  %1233 = vmatpush1.bf16.msra.mxu0 0
  %1234 = vmatprep.subr.bf16.mxu0 0
  %1235 = vmatpush1.bf16.msra.mxu0 0
  %1236 = vmatprep.subr.bf16.mxu0 0
  %1237 = vmatpush1.bf16.msra.mxu0 0
  %1238 = vmatprep.subr.bf16.mxu0 0
  %1239 = vmatpush1.bf16.msra.mxu0 0
  %1240 = vmatprep.subr.bf16.mxu0 0
  %1241 = vmatpush1.bf16.msra.mxu0 0
  %1242 = vmatprep.subr.bf16.mxu0 0
  %1243 = vmatpush1.bf16.msra.mxu0 0
  %1244 = vmatprep.subr.bf16.mxu0 0
  %1245 = vmatpush1.bf16.msra.mxu0 0
  %1246 = vmatprep.subr.bf16.mxu0 0
  %1247 = vmatpush1.bf16.msra.mxu0 0
  %1248 = vmatprep.subr.bf16.mxu0 0
  %1249 = vmatpush1.bf16.msra.mxu0 0
  %1250 = vmatprep.subr.bf16.mxu0 0
  %1251 = vmatpush1.bf16.msra.mxu0 0
  %1252 = vmatprep.subr.bf16.mxu0 0
  %1253 = vmatpush1.bf16.msra.mxu0 0
  %1254 = vmatprep.mubr.bf16.mxu0 0
  %1255 = vmatmul.mubr.bf16.gmra.mrb[0].mxu0 %v1217
  %v1256 = vpop.f32.mrb[0].mxu0
  %v1257 = vadd.f32 0.0, %v1256
  %v1258 = vpop.f32.mrb[0].mxu0
  %v1259 = vpop.f32.mrb[0].mxu0
  %v1260 = vadd.f32 0.0, %v1259
  %v1261 = vpop.f32.mrb[0].mxu0
  %1262 = vmatprep.mubr.bf16.mxu0 0
  %1263 = vmatmul.mubr.bf16.gmra.mrb[0].mxu0 %v1220
  %v1264 = vpop.f32.mrb[0].mxu0
  %v1265 = vadd.f32 0.0, %v1264
  %v1266 = vpop.f32.mrb[0].mxu0
  %v1267 = vpop.f32.mrb[0].mxu0
  %v1268 = vadd.f32 0.0, %v1267
  %v1269 = vpop.f32.mrb[0].mxu0
  %1270 = vdwg.mxu0
  %v1271 = vadd.f32 %v911, %v1257
  %v1272 = vadd.f32 %v912, %v1260
  %v1273 = vadd.f32 %v913, %v1265
  %v1274 = vadd.f32 %v914, %v1268
  %v1276 = vlaneseq
  %v1277 = vshrl.u32 %v1276, 7
  %v1278 = vsub.s32 0, %v1277
  %v1279 = vrot.slane %v15, %v1278
  %v1281 = vadd.f32 %v1271, %v1279
  %v1282 = vadd.f32 %v1272, %v1279
  %v1283 = vadd.f32 %v1273, %v1279
  %v1284 = vadd.f32 %v1274, %v1279
  %v1289 = vcombine.high %v1281, %v1281
  %v1291 = vunpack.c.l.s4 1966171168
  %v1292 = vunpack.c.0.s8 %v1291
  %v1293 = vlaneseq
  %v1294 = vshrl.u32 %v1293, 7
  %v1295 = vsub.s32 %v1292, %v1294
  %v1296 = vrot.slane %v1281, %v1295
  %v1298 = vunpack.c.l.s4 1966171168
  %v1299 = vunpack.c.0.s8 %v1298
  %v1300 = vlaneseq
  %v1301 = vshrl.u32 %v1300, 7
  %v1302 = vsub.s32 %v1299, %v1301
  %v1303 = vrot.slane %v1289, %v1302
  %v1304 = vcombine.high %v1296, %v1296
  %v1305 = vcombine.high %v1303, %v1303
  %v1307 = vunpack.c.l.s4 1966171168
  %v1308 = vunpack.c.0.s8 %v1307
  %v1309 = vlaneseq
  %v1310 = vshrl.u32 %v1309, 7
  %v1311 = vsub.s32 %v1308, %v1310
  %v1312 = vrot.slane %v1296, %v1311
  %v1314 = vunpack.c.l.s4 1966171168
  %v1315 = vunpack.c.0.s8 %v1314
  %v1316 = vlaneseq
  %v1317 = vshrl.u32 %v1316, 7
  %v1318 = vsub.s32 %v1315, %v1317
  %v1319 = vrot.slane %v1303, %v1318
  %v1321 = vunpack.c.l.s4 1966171168
  %v1322 = vunpack.c.0.s8 %v1321
  %v1323 = vlaneseq
  %v1324 = vshrl.u32 %v1323, 7
  %v1325 = vsub.s32 %v1322, %v1324
  %v1326 = vrot.slane %v1304, %v1325
  %v1328 = vunpack.c.l.s4 1966171168
  %v1329 = vunpack.c.0.s8 %v1328
  %v1330 = vlaneseq
  %v1331 = vshrl.u32 %v1330, 7
  %v1332 = vsub.s32 %v1329, %v1331
  %v1333 = vrot.slane %v1305, %v1332
  %v1334 = vcombine.high %v1312, %v1312
  %v1335 = vcombine.high %v1319, %v1319
  %v1336 = vcombine.high %v1326, %v1326
  %v1337 = vcombine.high %v1333, %v1333
  %v1338 = vcombine.high %v1282, %v1282
  %v1340 = vunpack.c.l.s4 1966171168
  %v1341 = vunpack.c.0.s8 %v1340
  %v1342 = vlaneseq
  %v1343 = vshrl.u32 %v1342, 7
  %v1344 = vsub.s32 %v1341, %v1343
  %v1345 = vrot.slane %v1282, %v1344
  %v1347 = vunpack.c.l.s4 1966171168
  %v1348 = vunpack.c.0.s8 %v1347
  %v1349 = vlaneseq
  %v1350 = vshrl.u32 %v1349, 7
  %v1351 = vsub.s32 %v1348, %v1350
  %v1352 = vrot.slane %v1338, %v1351
  %v1353 = vcombine.high %v1345, %v1345
  %v1354 = vcombine.high %v1352, %v1352
  %v1356 = vunpack.c.l.s4 1966171168
  %v1357 = vunpack.c.0.s8 %v1356
  %v1358 = vlaneseq
  %v1359 = vshrl.u32 %v1358, 7
  %v1360 = vsub.s32 %v1357, %v1359
  %v1361 = vrot.slane %v1345, %v1360
  %v1363 = vunpack.c.l.s4 1966171168
  %v1364 = vunpack.c.0.s8 %v1363
  %v1365 = vlaneseq
  %v1366 = vshrl.u32 %v1365, 7
  %v1367 = vsub.s32 %v1364, %v1366
  %v1368 = vrot.slane %v1352, %v1367
  %v1370 = vunpack.c.l.s4 1966171168
  %v1371 = vunpack.c.0.s8 %v1370
  %v1372 = vlaneseq
  %v1373 = vshrl.u32 %v1372, 7
  %v1374 = vsub.s32 %v1371, %v1373
  %v1375 = vrot.slane %v1353, %v1374
  %v1377 = vunpack.c.l.s4 1966171168
  %v1378 = vunpack.c.0.s8 %v1377
  %v1379 = vlaneseq
  %v1380 = vshrl.u32 %v1379, 7
  %v1381 = vsub.s32 %v1378, %v1380
  %v1382 = vrot.slane %v1354, %v1381
  %v1383 = vcombine.high %v1361, %v1361
  %v1384 = vcombine.high %v1368, %v1368
  %v1385 = vcombine.high %v1375, %v1375
  %v1386 = vcombine.high %v1382, %v1382
  %v1387 = vcombine.high %v1283, %v1283
  %v1389 = vunpack.c.l.s4 1966171168
  %v1390 = vunpack.c.0.s8 %v1389
  %v1391 = vlaneseq
  %v1392 = vshrl.u32 %v1391, 7
  %v1393 = vsub.s32 %v1390, %v1392
  %v1394 = vrot.slane %v1283, %v1393
  %v1396 = vunpack.c.l.s4 1966171168
  %v1397 = vunpack.c.0.s8 %v1396
  %v1398 = vlaneseq
  %v1399 = vshrl.u32 %v1398, 7
  %v1400 = vsub.s32 %v1397, %v1399
  %v1401 = vrot.slane %v1387, %v1400
  %v1402 = vcombine.high %v1394, %v1394
  %v1403 = vcombine.high %v1401, %v1401
  %v1405 = vunpack.c.l.s4 1966171168
  %v1406 = vunpack.c.0.s8 %v1405
  %v1407 = vlaneseq
  %v1408 = vshrl.u32 %v1407, 7
  %v1409 = vsub.s32 %v1406, %v1408
  %v1410 = vrot.slane %v1394, %v1409
  %v1412 = vunpack.c.l.s4 1966171168
  %v1413 = vunpack.c.0.s8 %v1412
  %v1414 = vlaneseq
  %v1415 = vshrl.u32 %v1414, 7
  %v1416 = vsub.s32 %v1413, %v1415
  %v1417 = vrot.slane %v1401, %v1416
  %v1419 = vunpack.c.l.s4 1966171168
  %v1420 = vunpack.c.0.s8 %v1419
  %v1421 = vlaneseq
  %v1422 = vshrl.u32 %v1421, 7
  %v1423 = vsub.s32 %v1420, %v1422
  %v1424 = vrot.slane %v1402, %v1423
  %v1426 = vunpack.c.l.s4 1966171168
  %v1427 = vunpack.c.0.s8 %v1426
  %v1428 = vlaneseq
  %v1429 = vshrl.u32 %v1428, 7
  %v1430 = vsub.s32 %v1427, %v1429
  %v1431 = vrot.slane %v1403, %v1430
  %v1432 = vcombine.high %v1410, %v1410
  %v1433 = vcombine.high %v1417, %v1417
  %v1434 = vcombine.high %v1424, %v1424
  %v1435 = vcombine.high %v1431, %v1431
  %v1436 = vcombine.high %v1284, %v1284
  %v1438 = vunpack.c.l.s4 1966171168
  %v1439 = vunpack.c.0.s8 %v1438
  %v1440 = vlaneseq
  %v1441 = vshrl.u32 %v1440, 7
  %v1442 = vsub.s32 %v1439, %v1441
  %v1443 = vrot.slane %v1284, %v1442
  %v1445 = vunpack.c.l.s4 1966171168
  %v1446 = vunpack.c.0.s8 %v1445
  %v1447 = vlaneseq
  %v1448 = vshrl.u32 %v1447, 7
  %v1449 = vsub.s32 %v1446, %v1448
  %v1450 = vrot.slane %v1436, %v1449
  %v1451 = vcombine.high %v1443, %v1443
  %v1452 = vcombine.high %v1450, %v1450
  %v1454 = vunpack.c.l.s4 1966171168
  %v1455 = vunpack.c.0.s8 %v1454
  %v1456 = vlaneseq
  %v1457 = vshrl.u32 %v1456, 7
  %v1458 = vsub.s32 %v1455, %v1457
  %v1459 = vrot.slane %v1443, %v1458
  %v1461 = vunpack.c.l.s4 1966171168
  %v1462 = vunpack.c.0.s8 %v1461
  %v1463 = vlaneseq
  %v1464 = vshrl.u32 %v1463, 7
  %v1465 = vsub.s32 %v1462, %v1464
  %v1466 = vrot.slane %v1450, %v1465
  %v1468 = vunpack.c.l.s4 1966171168
  %v1469 = vunpack.c.0.s8 %v1468
  %v1470 = vlaneseq
  %v1471 = vshrl.u32 %v1470, 7
  %v1472 = vsub.s32 %v1469, %v1471
  %v1473 = vrot.slane %v1451, %v1472
  %v1475 = vunpack.c.l.s4 1966171168
  %v1476 = vunpack.c.0.s8 %v1475
  %v1477 = vlaneseq
  %v1478 = vshrl.u32 %v1477, 7
  %v1479 = vsub.s32 %v1476, %v1478
  %v1480 = vrot.slane %v1452, %v1479
  %v1481 = vcombine.high %v1459, %v1459
  %v1482 = vcombine.high %v1473, %v1473
  %v1483 = vcombine.low %v1312, %v1326
  %v1484 = vcombine.low %v1334, %v1336
  %v1486 = vunpack.c.l.s4 1966171168
  %v1487 = vunpack.c.0.s8 %v1486
  %v1488 = vlaneseq
  %v1489 = vshrl.u32 %v1488, 7
  %v1490 = vsub.s32 %v1487, %v1489
  %v1491 = vrot.slane %v1483, %v1490
  %v1493 = vunpack.c.l.s4 1966171168
  %v1494 = vunpack.c.0.s8 %v1493
  %v1495 = vlaneseq
  %v1496 = vshrl.u32 %v1495, 7
  %v1497 = vsub.s32 %v1494, %v1496
  %v1498 = vrot.slane %v1484, %v1497
  %v1500 = vunpack.c.l.s4 1966171168
  %v1501 = vunpack.c.0.s8 %v1500
  %v1502 = vlaneseq
  %v1503 = vshrl.u32 %v1502, 7
  %v1504 = vsub.s32 %v1501, %v1503
  %v1505 = vrot.slane %v1319, %v1504
  %v1506 = vcombine.low %v1491, %v1498
  %v1508 = vunpack.c.l.s4 1966171168
  %v1509 = vunpack.c.0.s8 %v1508
  %v1510 = vlaneseq
  %v1511 = vshrl.u32 %v1510, 7
  %v1512 = vsub.s32 %v1509, %v1511
  %v1513 = vrot.slane %v1506, %v1512
  %v1515 = vunpack.c.l.s4 1966171168
  %v1516 = vunpack.c.0.s8 %v1515
  %v1517 = vlaneseq
  %v1518 = vshrl.u32 %v1517, 7
  %v1519 = vsub.s32 %v1516, %v1518
  %v1520 = vrot.slane %v1505, %v1519
  %v1521 = vcombine.low %v1513, %v1520
  %v1522 = vcombine.low %v1333, %v1335
  %v1523 = vcombine.low %v1337, %v1361
  %v1525 = vunpack.c.l.s4 1966171168
  %v1526 = vunpack.c.0.s8 %v1525
  %v1527 = vlaneseq
  %v1528 = vshrl.u32 %v1527, 7
  %v1529 = vsub.s32 %v1526, %v1528
  %v1530 = vrot.slane %v1522, %v1529
  %v1532 = vunpack.c.l.s4 1966171168
  %v1533 = vunpack.c.0.s8 %v1532
  %v1534 = vlaneseq
  %v1535 = vshrl.u32 %v1534, 7
  %v1536 = vsub.s32 %v1533, %v1535
  %v1537 = vrot.slane %v1523, %v1536
  %v1539 = vunpack.c.l.s4 1966171168
  %v1540 = vunpack.c.0.s8 %v1539
  %v1541 = vlaneseq
  %v1542 = vshrl.u32 %v1541, 7
  %v1543 = vsub.s32 %v1540, %v1542
  %v1544 = vrot.slane %v1375, %v1543
  %v1545 = vcombine.low %v1530, %v1537
  %v1547 = vunpack.c.l.s4 1966171168
  %v1548 = vunpack.c.0.s8 %v1547
  %v1549 = vlaneseq
  %v1550 = vshrl.u32 %v1549, 7
  %v1551 = vsub.s32 %v1548, %v1550
  %v1552 = vrot.slane %v1545, %v1551
  %v1554 = vunpack.c.l.s4 1966171168
  %v1555 = vunpack.c.0.s8 %v1554
  %v1556 = vlaneseq
  %v1557 = vshrl.u32 %v1556, 7
  %v1558 = vsub.s32 %v1555, %v1557
  %v1559 = vrot.slane %v1544, %v1558
  %v1560 = vcombine.low %v1552, %v1559
  %v1561 = vcombine.low %v1383, %v1385
  %v1562 = vcombine.low %v1368, %v1382
  %v1564 = vunpack.c.l.s4 1966171168
  %v1565 = vunpack.c.0.s8 %v1564
  %v1566 = vlaneseq
  %v1567 = vshrl.u32 %v1566, 7
  %v1568 = vsub.s32 %v1565, %v1567
  %v1569 = vrot.slane %v1561, %v1568
  %v1571 = vunpack.c.l.s4 1966171168
  %v1572 = vunpack.c.0.s8 %v1571
  %v1573 = vlaneseq
  %v1574 = vshrl.u32 %v1573, 7
  %v1575 = vsub.s32 %v1572, %v1574
  %v1576 = vrot.slane %v1562, %v1575
  %v1578 = vunpack.c.l.s4 1966171168
  %v1579 = vunpack.c.0.s8 %v1578
  %v1580 = vlaneseq
  %v1581 = vshrl.u32 %v1580, 7
  %v1582 = vsub.s32 %v1579, %v1581
  %v1583 = vrot.slane %v1384, %v1582
  %v1584 = vcombine.low %v1569, %v1576
  %v1586 = vunpack.c.l.s4 1966171168
  %v1587 = vunpack.c.0.s8 %v1586
  %v1588 = vlaneseq
  %v1589 = vshrl.u32 %v1588, 7
  %v1590 = vsub.s32 %v1587, %v1589
  %v1591 = vrot.slane %v1584, %v1590
  %v1593 = vunpack.c.l.s4 1966171168
  %v1594 = vunpack.c.0.s8 %v1593
  %v1595 = vlaneseq
  %v1596 = vshrl.u32 %v1595, 7
  %v1597 = vsub.s32 %v1594, %v1596
  %v1598 = vrot.slane %v1583, %v1597
  %v1599 = vcombine.low %v1591, %v1598
  %v1600 = vcombine.low %v1386, %v1410
  %v1601 = vcombine.low %v1424, %v1432
  %v1603 = vunpack.c.l.s4 1966171168
  %v1604 = vunpack.c.0.s8 %v1603
  %v1605 = vlaneseq
  %v1606 = vshrl.u32 %v1605, 7
  %v1607 = vsub.s32 %v1604, %v1606
  %v1608 = vrot.slane %v1600, %v1607
  %v1610 = vunpack.c.l.s4 1966171168
  %v1611 = vunpack.c.0.s8 %v1610
  %v1612 = vlaneseq
  %v1613 = vshrl.u32 %v1612, 7
  %v1614 = vsub.s32 %v1611, %v1613
  %v1615 = vrot.slane %v1601, %v1614
  %v1617 = vunpack.c.l.s4 1966171168
  %v1618 = vunpack.c.0.s8 %v1617
  %v1619 = vlaneseq
  %v1620 = vshrl.u32 %v1619, 7
  %v1621 = vsub.s32 %v1618, %v1620
  %v1622 = vrot.slane %v1434, %v1621
  %v1623 = vcombine.low %v1608, %v1615
  %v1625 = vunpack.c.l.s4 1966171168
  %v1626 = vunpack.c.0.s8 %v1625
  %v1627 = vlaneseq
  %v1628 = vshrl.u32 %v1627, 7
  %v1629 = vsub.s32 %v1626, %v1628
  %v1630 = vrot.slane %v1623, %v1629
  %v1632 = vunpack.c.l.s4 1966171168
  %v1633 = vunpack.c.0.s8 %v1632
  %v1634 = vlaneseq
  %v1635 = vshrl.u32 %v1634, 7
  %v1636 = vsub.s32 %v1633, %v1635
  %v1637 = vrot.slane %v1622, %v1636
  %v1638 = vcombine.low %v1630, %v1637
  %v1639 = vcombine.low %v1417, %v1431
  %v1640 = vcombine.low %v1433, %v1435
  %v1642 = vunpack.c.l.s4 1966171168
  %v1643 = vunpack.c.0.s8 %v1642
  %v1644 = vlaneseq
  %v1645 = vshrl.u32 %v1644, 7
  %v1646 = vsub.s32 %v1643, %v1645
  %v1647 = vrot.slane %v1639, %v1646
  %v1649 = vunpack.c.l.s4 1966171168
  %v1650 = vunpack.c.0.s8 %v1649
  %v1651 = vlaneseq
  %v1652 = vshrl.u32 %v1651, 7
  %v1653 = vsub.s32 %v1650, %v1652
  %v1654 = vrot.slane %v1640, %v1653
  %v1656 = vunpack.c.l.s4 1966171168
  %v1657 = vunpack.c.0.s8 %v1656
  %v1658 = vlaneseq
  %v1659 = vshrl.u32 %v1658, 7
  %v1660 = vsub.s32 %v1657, %v1659
  %v1661 = vrot.slane %v1459, %v1660
  %v1662 = vcombine.low %v1647, %v1654
  %v1664 = vunpack.c.l.s4 1966171168
  %v1665 = vunpack.c.0.s8 %v1664
  %v1666 = vlaneseq
  %v1667 = vshrl.u32 %v1666, 7
  %v1668 = vsub.s32 %v1665, %v1667
  %v1669 = vrot.slane %v1662, %v1668
  %v1671 = vunpack.c.l.s4 1966171168
  %v1672 = vunpack.c.0.s8 %v1671
  %v1673 = vlaneseq
  %v1674 = vshrl.u32 %v1673, 7
  %v1675 = vsub.s32 %v1672, %v1674
  %v1676 = vrot.slane %v1661, %v1675
  %v1677 = vcombine.low %v1669, %v1676
  %v1678 = vcombine.low %v1473, %v1481
  %v1679 = vcombine.low %v1482, %v1466
  %v1681 = vunpack.c.l.s4 1966171168
  %v1682 = vunpack.c.0.s8 %v1681
  %v1683 = vlaneseq
  %v1684 = vshrl.u32 %v1683, 7
  %v1685 = vsub.s32 %v1682, %v1684
  %v1686 = vrot.slane %v1678, %v1685
  %v1688 = vunpack.c.l.s4 1966171168
  %v1689 = vunpack.c.0.s8 %v1688
  %v1690 = vlaneseq
  %v1691 = vshrl.u32 %v1690, 7
  %v1692 = vsub.s32 %v1689, %v1691
  %v1693 = vrot.slane %v1679, %v1692
  %v1695 = vunpack.c.l.s4 1966171168
  %v1696 = vunpack.c.0.s8 %v1695
  %v1697 = vlaneseq
  %v1698 = vshrl.u32 %v1697, 7
  %v1699 = vsub.s32 %v1696, %v1698
  %v1700 = vrot.slane %v1480, %v1699
  %v1701 = vcombine.low %v1686, %v1693
  %v1703 = vunpack.c.l.s4 1966171168
  %v1704 = vunpack.c.0.s8 %v1703
  %v1705 = vlaneseq
  %v1706 = vshrl.u32 %v1705, 7
  %v1707 = vsub.s32 %v1704, %v1706
  %v1708 = vrot.slane %v1701, %v1707
  %v1710 = vunpack.c.l.s4 1966171168
  %v1711 = vunpack.c.0.s8 %v1710
  %v1712 = vlaneseq
  %v1713 = vshrl.u32 %v1712, 7
  %v1714 = vsub.s32 %v1711, %v1713
  %v1715 = vrot.slane %v1700, %v1714
  %v1716 = vcombine.low %v1708, %v1715
  %vm1723 = vcmask 258048
  %1724 = vst.msk [vmem:[%s3] sm:$0x1f] %vm1723, %v1521
  %1725 = vst.msk [vmem:[%s3 + $0x8] sm:$0x1f] %vm1723, %v1560
  %1726 = vst.msk [vmem:[%s3 + $0x10] sm:$0x1f] %vm1723, %v1599
  %1727 = vst.msk [vmem:[%s3 + $0x18] sm:$0x1f] %vm1723, %v1638
  %1728 = vst.msk [vmem:[%s3 + $0x20] sm:$0x1f] %vm1723, %v1677
  %1729 = vst.msk [vmem:[%s3 + $0x28] sm:$0x1f] %vm1723, %v1716
  %v1730 = vld [vmem:[%s16] sm:$0xe]
  %v1731 = vld [vmem:[%s16 + $0x4] sm:$0xe]
  %v1732 = vld [vmem:[%s16 + $0x8] sm:$0xe]
  %v1733 = vld [vmem:[%s16 + $0x14] sm:$0xe]
  %v1734 = vld [vmem:[%s16 + $0x18] sm:$0xe]
  %v1735 = vld [vmem:[%s16 + $0x1c] sm:$0xe]
  %v1743 = vunpack.c.l.s4 1966171168
  %v1744 = vunpack.c.0.s8 %v1743
  %v1745 = vlaneseq
  %v1746 = vshrl.u32 %v1745, 7
  %v1747 = vsub.s32 %v1744, %v1746
  %v1748 = vrot.slane %v1730, %v1747
  %v1749 = vcombine.high %v1748, %v1748
  %v1751 = vunpack.c.l.s4 1966171168
  %v1752 = vunpack.c.0.s8 %v1751
  %v1753 = vlaneseq
  %v1754 = vshrl.u32 %v1753, 7
  %v1755 = vsub.s32 %v1752, %v1754
  %v1756 = vrot.slane %v1748, %v1755
  %v1758 = vunpack.c.l.s4 1966171168
  %v1759 = vunpack.c.0.s8 %v1758
  %v1760 = vlaneseq
  %v1761 = vshrl.u32 %v1760, 7
  %v1762 = vsub.s32 %v1759, %v1761
  %v1763 = vrot.slane %v1749, %v1762
  %v1764 = vcombine.high %v1756, %v1756
  %v1765 = vcombine.high %v1763, %v1763
  %v1767 = vunpack.c.l.s4 1966171168
  %v1768 = vunpack.c.0.s8 %v1767
  %v1769 = vlaneseq
  %v1770 = vshrl.u32 %v1769, 7
  %v1771 = vsub.s32 %v1768, %v1770
  %v1772 = vrot.slane %v1731, %v1771
  %v1773 = vcombine.high %v1772, %v1772
  %v1775 = vunpack.c.l.s4 1966171168
  %v1776 = vunpack.c.0.s8 %v1775
  %v1777 = vlaneseq
  %v1778 = vshrl.u32 %v1777, 7
  %v1779 = vsub.s32 %v1776, %v1778
  %v1780 = vrot.slane %v1772, %v1779
  %v1782 = vunpack.c.l.s4 1966171168
  %v1783 = vunpack.c.0.s8 %v1782
  %v1784 = vlaneseq
  %v1785 = vshrl.u32 %v1784, 7
  %v1786 = vsub.s32 %v1783, %v1785
  %v1787 = vrot.slane %v1773, %v1786
  %v1788 = vcombine.high %v1780, %v1780
  %v1789 = vcombine.high %v1787, %v1787
  %v1791 = vunpack.c.l.s4 1966171168
  %v1792 = vunpack.c.0.s8 %v1791
  %v1793 = vlaneseq
  %v1794 = vshrl.u32 %v1793, 7
  %v1795 = vsub.s32 %v1792, %v1794
  %v1796 = vrot.slane %v1732, %v1795
  %v1797 = vcombine.high %v1796, %v1796
  %v1799 = vunpack.c.l.s4 1966171168
  %v1800 = vunpack.c.0.s8 %v1799
  %v1801 = vlaneseq
  %v1802 = vshrl.u32 %v1801, 7
  %v1803 = vsub.s32 %v1800, %v1802
  %v1804 = vrot.slane %v1796, %v1803
  %v1806 = vunpack.c.l.s4 1966171168
  %v1807 = vunpack.c.0.s8 %v1806
  %v1808 = vlaneseq
  %v1809 = vshrl.u32 %v1808, 7
  %v1810 = vsub.s32 %v1807, %v1809
  %v1811 = vrot.slane %v1797, %v1810
  %v1812 = vcombine.high %v1804, %v1804
  %v1813 = vcombine.high %v1811, %v1811
  %v1815 = vunpack.c.l.s4 1966171168
  %v1816 = vunpack.c.0.s8 %v1815
  %v1817 = vlaneseq
  %v1818 = vshrl.u32 %v1817, 7
  %v1819 = vsub.s32 %v1816, %v1818
  %v1820 = vrot.slane %v1733, %v1819
  %v1821 = vcombine.high %v1820, %v1820
  %v1823 = vunpack.c.l.s4 1966171168
  %v1824 = vunpack.c.0.s8 %v1823
  %v1825 = vlaneseq
  %v1826 = vshrl.u32 %v1825, 7
  %v1827 = vsub.s32 %v1824, %v1826
  %v1828 = vrot.slane %v1820, %v1827
  %v1830 = vunpack.c.l.s4 1966171168
  %v1831 = vunpack.c.0.s8 %v1830
  %v1832 = vlaneseq
  %v1833 = vshrl.u32 %v1832, 7
  %v1834 = vsub.s32 %v1831, %v1833
  %v1835 = vrot.slane %v1821, %v1834
  %v1836 = vcombine.high %v1828, %v1828
  %v1837 = vcombine.high %v1835, %v1835
  %v1839 = vunpack.c.l.s4 1966171168
  %v1840 = vunpack.c.0.s8 %v1839
  %v1841 = vlaneseq
  %v1842 = vshrl.u32 %v1841, 7
  %v1843 = vsub.s32 %v1840, %v1842
  %v1844 = vrot.slane %v1734, %v1843
  %v1845 = vcombine.high %v1844, %v1844
  %v1847 = vunpack.c.l.s4 1966171168
  %v1848 = vunpack.c.0.s8 %v1847
  %v1849 = vlaneseq
  %v1850 = vshrl.u32 %v1849, 7
  %v1851 = vsub.s32 %v1848, %v1850
  %v1852 = vrot.slane %v1844, %v1851
  %v1854 = vunpack.c.l.s4 1966171168
  %v1855 = vunpack.c.0.s8 %v1854
  %v1856 = vlaneseq
  %v1857 = vshrl.u32 %v1856, 7
  %v1858 = vsub.s32 %v1855, %v1857
  %v1859 = vrot.slane %v1845, %v1858
  %v1860 = vcombine.high %v1852, %v1852
  %v1861 = vcombine.high %v1859, %v1859
  %v1863 = vunpack.c.l.s4 1966171168
  %v1864 = vunpack.c.0.s8 %v1863
  %v1865 = vlaneseq
  %v1866 = vshrl.u32 %v1865, 7
  %v1867 = vsub.s32 %v1864, %v1866
  %v1868 = vrot.slane %v1735, %v1867
  %v1869 = vcombine.high %v1868, %v1868
  %v1871 = vunpack.c.l.s4 1966171168
  %v1872 = vunpack.c.0.s8 %v1871
  %v1873 = vlaneseq
  %v1874 = vshrl.u32 %v1873, 7
  %v1875 = vsub.s32 %v1872, %v1874
  %v1876 = vrot.slane %v1868, %v1875
  %v1878 = vunpack.c.l.s4 1966171168
  %v1879 = vunpack.c.0.s8 %v1878
  %v1880 = vlaneseq
  %v1881 = vshrl.u32 %v1880, 7
  %v1882 = vsub.s32 %v1879, %v1881
  %v1883 = vrot.slane %v1869, %v1882
  %v1884 = vcombine.high %v1876, %v1876
  %v1885 = vcombine.high %v1883, %v1883
  %v1886 = vunpack.i.l.s16 %v1763
  %v1887 = vunpack.i.h.s16 %v1763
  %v1888 = vunpack.i.l.s16 %v1764
  %v1889 = vunpack.i.h.s16 %v1764
  %v1890 = vunpack.i.l.s16 %v1765
  %v1891 = vunpack.i.l.s16 %v1787
  %v1892 = vunpack.i.h.s16 %v1787
  %v1893 = vunpack.i.l.s16 %v1788
  %v1894 = vunpack.i.h.s16 %v1788
  %v1895 = vunpack.i.l.s16 %v1789
  %v1896 = vunpack.i.l.s16 %v1811
  %v1897 = vunpack.i.h.s16 %v1811
  %v1898 = vunpack.i.l.s16 %v1812
  %v1899 = vunpack.i.h.s16 %v1812
  %v1900 = vunpack.i.l.s16 %v1813
  %v1901 = vunpack.i.l.s16 %v1835
  %v1902 = vunpack.i.h.s16 %v1835
  %v1903 = vunpack.i.l.s16 %v1836
  %v1904 = vunpack.i.h.s16 %v1836
  %v1905 = vunpack.i.l.s16 %v1837
  %v1906 = vunpack.i.l.s16 %v1859
  %v1907 = vunpack.i.h.s16 %v1859
  %v1908 = vunpack.i.l.s16 %v1860
  %v1909 = vunpack.i.h.s16 %v1860
  %v1910 = vunpack.i.l.s16 %v1861
  %v1911 = vunpack.i.l.s16 %v1883
  %v1912 = vunpack.i.h.s16 %v1883
  %v1913 = vunpack.i.l.s16 %v1884
  %v1914 = vunpack.i.h.s16 %v1884
  %v1915 = vunpack.i.l.s16 %v1885
  %s1916 = scalar_lea.vmem %s1, 32
  %v1917 = vld [vmem:[%s1916] sm:$0xf]
  %v1918 = vld [vmem:[%s1916 + $0x4] sm:$0xf]
  %v1919 = vld [vmem:[%s16] sm:$0x7]
  %v1920 = vld [vmem:[%s16 + $0x4] sm:$0x7]
  %v1921 = vld [vmem:[%s16 + $0x8] sm:$0x7]
  %v1922 = vld [vmem:[%s16 + $0x14] sm:$0x7]
  %v1923 = vld [vmem:[%s16 + $0x18] sm:$0x7]
  %v1924 = vld [vmem:[%s16 + $0x1c] sm:$0x7]
  %v1932 = vunpack.c.l.s4 1966171168
  %v1933 = vunpack.c.0.s8 %v1932
  %v1934 = vlaneseq
  %v1935 = vshrl.u32 %v1934, 7
  %v1936 = vsub.s32 %v1933, %v1935
  %v1937 = vrot.slane %v1919, %v1936
  %v1938 = vcombine.high %v1937, %v1937
  %v1940 = vunpack.c.l.s4 1966171168
  %v1941 = vunpack.c.0.s8 %v1940
  %v1942 = vlaneseq
  %v1943 = vshrl.u32 %v1942, 7
  %v1944 = vsub.s32 %v1941, %v1943
  %v1945 = vrot.slane %v1937, %v1944
  %v1947 = vunpack.c.l.s4 1966171168
  %v1948 = vunpack.c.0.s8 %v1947
  %v1949 = vlaneseq
  %v1950 = vshrl.u32 %v1949, 7
  %v1951 = vsub.s32 %v1948, %v1950
  %v1952 = vrot.slane %v1938, %v1951
  %v1953 = vcombine.high %v1945, %v1945
  %v1955 = vunpack.c.l.s4 1966171168
  %v1956 = vunpack.c.0.s8 %v1955
  %v1957 = vlaneseq
  %v1958 = vshrl.u32 %v1957, 7
  %v1959 = vsub.s32 %v1956, %v1958
  %v1960 = vrot.slane %v1920, %v1959
  %v1961 = vcombine.high %v1960, %v1960
  %v1963 = vunpack.c.l.s4 1966171168
  %v1964 = vunpack.c.0.s8 %v1963
  %v1965 = vlaneseq
  %v1966 = vshrl.u32 %v1965, 7
  %v1967 = vsub.s32 %v1964, %v1966
  %v1968 = vrot.slane %v1960, %v1967
  %v1970 = vunpack.c.l.s4 1966171168
  %v1971 = vunpack.c.0.s8 %v1970
  %v1972 = vlaneseq
  %v1973 = vshrl.u32 %v1972, 7
  %v1974 = vsub.s32 %v1971, %v1973
  %v1975 = vrot.slane %v1961, %v1974
  %v1976 = vcombine.high %v1968, %v1968
  %v1978 = vunpack.c.l.s4 1966171168
  %v1979 = vunpack.c.0.s8 %v1978
  %v1980 = vlaneseq
  %v1981 = vshrl.u32 %v1980, 7
  %v1982 = vsub.s32 %v1979, %v1981
  %v1983 = vrot.slane %v1921, %v1982
  %v1984 = vcombine.high %v1983, %v1983
  %v1986 = vunpack.c.l.s4 1966171168
  %v1987 = vunpack.c.0.s8 %v1986
  %v1988 = vlaneseq
  %v1989 = vshrl.u32 %v1988, 7
  %v1990 = vsub.s32 %v1987, %v1989
  %v1991 = vrot.slane %v1983, %v1990
  %v1993 = vunpack.c.l.s4 1966171168
  %v1994 = vunpack.c.0.s8 %v1993
  %v1995 = vlaneseq
  %v1996 = vshrl.u32 %v1995, 7
  %v1997 = vsub.s32 %v1994, %v1996
  %v1998 = vrot.slane %v1984, %v1997
  %v1999 = vcombine.high %v1991, %v1991
  %v2001 = vunpack.c.l.s4 1966171168
  %v2002 = vunpack.c.0.s8 %v2001
  %v2003 = vlaneseq
  %v2004 = vshrl.u32 %v2003, 7
  %v2005 = vsub.s32 %v2002, %v2004
  %v2006 = vrot.slane %v1922, %v2005
  %v2007 = vcombine.high %v2006, %v2006
  %v2009 = vunpack.c.l.s4 1966171168
  %v2010 = vunpack.c.0.s8 %v2009
  %v2011 = vlaneseq
  %v2012 = vshrl.u32 %v2011, 7
  %v2013 = vsub.s32 %v2010, %v2012
  %v2014 = vrot.slane %v2006, %v2013
  %v2016 = vunpack.c.l.s4 1966171168
  %v2017 = vunpack.c.0.s8 %v2016
  %v2018 = vlaneseq
  %v2019 = vshrl.u32 %v2018, 7
  %v2020 = vsub.s32 %v2017, %v2019
  %v2021 = vrot.slane %v2007, %v2020
  %v2022 = vcombine.high %v2014, %v2014
  %v2024 = vunpack.c.l.s4 1966171168
  %v2025 = vunpack.c.0.s8 %v2024
  %v2026 = vlaneseq
  %v2027 = vshrl.u32 %v2026, 7
  %v2028 = vsub.s32 %v2025, %v2027
  %v2029 = vrot.slane %v1923, %v2028
  %v2030 = vcombine.high %v2029, %v2029
  %v2032 = vunpack.c.l.s4 1966171168
  %v2033 = vunpack.c.0.s8 %v2032
  %v2034 = vlaneseq
  %v2035 = vshrl.u32 %v2034, 7
  %v2036 = vsub.s32 %v2033, %v2035
  %v2037 = vrot.slane %v2029, %v2036
  %v2039 = vunpack.c.l.s4 1966171168
  %v2040 = vunpack.c.0.s8 %v2039
  %v2041 = vlaneseq
  %v2042 = vshrl.u32 %v2041, 7
  %v2043 = vsub.s32 %v2040, %v2042
  %v2044 = vrot.slane %v2030, %v2043
  %v2045 = vcombine.high %v2037, %v2037
  %v2047 = vunpack.c.l.s4 1966171168
  %v2048 = vunpack.c.0.s8 %v2047
  %v2049 = vlaneseq
  %v2050 = vshrl.u32 %v2049, 7
  %v2051 = vsub.s32 %v2048, %v2050
  %v2052 = vrot.slane %v1924, %v2051
  %v2053 = vcombine.high %v2052, %v2052
  %v2055 = vunpack.c.l.s4 1966171168
  %v2056 = vunpack.c.0.s8 %v2055
  %v2057 = vlaneseq
  %v2058 = vshrl.u32 %v2057, 7
  %v2059 = vsub.s32 %v2056, %v2058
  %v2060 = vrot.slane %v2052, %v2059
  %v2062 = vunpack.c.l.s4 1966171168
  %v2063 = vunpack.c.0.s8 %v2062
  %v2064 = vlaneseq
  %v2065 = vshrl.u32 %v2064, 7
  %v2066 = vsub.s32 %v2063, %v2065
  %v2067 = vrot.slane %v2053, %v2066
  %v2068 = vcombine.high %v2060, %v2060
  %v2069 = vunpack.i.h.s16 %v1945
  %v2070 = vunpack.i.l.s16 %v1952
  %v2071 = vunpack.i.h.s16 %v1952
  %v2072 = vunpack.i.l.s16 %v1953
  %v2073 = vunpack.i.h.s16 %v1953
  %v2074 = vunpack.i.h.s16 %v1968
  %v2075 = vunpack.i.l.s16 %v1975
  %v2076 = vunpack.i.h.s16 %v1975
  %v2077 = vunpack.i.l.s16 %v1976
  %v2078 = vunpack.i.h.s16 %v1976
  %v2079 = vunpack.i.h.s16 %v1991
  %v2080 = vunpack.i.l.s16 %v1998
  %v2081 = vunpack.i.h.s16 %v1998
  %v2082 = vunpack.i.l.s16 %v1999
  %v2083 = vunpack.i.h.s16 %v1999
  %v2084 = vunpack.i.h.s16 %v2014
  %v2085 = vunpack.i.l.s16 %v2021
  %v2086 = vunpack.i.h.s16 %v2021
  %v2087 = vunpack.i.l.s16 %v2022
  %v2088 = vunpack.i.h.s16 %v2022
  %v2089 = vunpack.i.h.s16 %v2037
  %v2090 = vunpack.i.l.s16 %v2044
  %v2091 = vunpack.i.h.s16 %v2044
  %v2092 = vunpack.i.l.s16 %v2045
  %v2093 = vunpack.i.h.s16 %v2045
  %v2094 = vunpack.i.h.s16 %v2060
  %v2095 = vunpack.i.l.s16 %v2067
  %v2096 = vunpack.i.h.s16 %v2067
  %v2097 = vunpack.i.l.s16 %v2068
  %v2098 = vunpack.i.h.s16 %v2068
  %s2099 = scalar_lea.vmem %s1, 40
  %v2100 = vld [vmem:[%s2099] sm:$0xf]
  %v2101 = vld [vmem:[%s2099 + $0x4] sm:$0xf]
  %v2102 = vpack.i.b16 %v2070, %v2069
  %v2103 = vpack.i.b16 %v2072, %v2071
  %v2104 = vpack.i.b16 %v2074, %v2073
  %v2105 = vpack.i.b16 %v2076, %v2075
  %v2106 = vpack.i.b16 %v2078, %v2077
  %v2107 = vpack.i.b16 %v2080, %v2079
  %v2108 = vpack.i.b16 %v2082, %v2081
  %v2109 = vpack.i.b16 %v2084, %v2083
  %v2110 = vpack.i.b16 %v2086, %v2085
  %v2111 = vpack.i.b16 %v2088, %v2087
  %v2112 = vpack.i.b16 %v2090, %v2089
  %v2113 = vpack.i.b16 %v2092, %v2091
  %v2114 = vpack.i.b16 %v2094, %v2093
  %v2115 = vpack.i.b16 %v2096, %v2095
  %v2116 = vpack.i.b16 %v2098, %v2097
  %v2117 = vcombine.low %v2102, %v2103
  %v2118 = vcombine.low %v2104, %v2105
  %v2119 = vcombine.low %v2106, %v2107
  %v2120 = vcombine.low %v2108, %v2109
  %v2122 = vunpack.c.l.s4 1966171168
  %v2123 = vunpack.c.0.s8 %v2122
  %v2124 = vlaneseq
  %v2125 = vshrl.u32 %v2124, 7
  %v2126 = vsub.s32 %v2123, %v2125
  %v2127 = vrot.slane %v2117, %v2126
  %v2129 = vunpack.c.l.s4 1966171168
  %v2130 = vunpack.c.0.s8 %v2129
  %v2131 = vlaneseq
  %v2132 = vshrl.u32 %v2131, 7
  %v2133 = vsub.s32 %v2130, %v2132
  %v2134 = vrot.slane %v2118, %v2133
  %v2136 = vunpack.c.l.s4 1966171168
  %v2137 = vunpack.c.0.s8 %v2136
  %v2138 = vlaneseq
  %v2139 = vshrl.u32 %v2138, 7
  %v2140 = vsub.s32 %v2137, %v2139
  %v2141 = vrot.slane %v2119, %v2140
  %v2143 = vunpack.c.l.s4 1966171168
  %v2144 = vunpack.c.0.s8 %v2143
  %v2145 = vlaneseq
  %v2146 = vshrl.u32 %v2145, 7
  %v2147 = vsub.s32 %v2144, %v2146
  %v2148 = vrot.slane %v2120, %v2147
  %v2149 = vcombine.low %v2127, %v2134
  %v2150 = vcombine.low %v2141, %v2148
  %v2152 = vunpack.c.l.s4 1966171168
  %v2153 = vunpack.c.0.s8 %v2152
  %v2154 = vlaneseq
  %v2155 = vshrl.u32 %v2154, 7
  %v2156 = vsub.s32 %v2153, %v2155
  %v2157 = vrot.slane %v2149, %v2156
  %v2159 = vunpack.c.l.s4 1966171168
  %v2160 = vunpack.c.0.s8 %v2159
  %v2161 = vlaneseq
  %v2162 = vshrl.u32 %v2161, 7
  %v2163 = vsub.s32 %v2160, %v2162
  %v2164 = vrot.slane %v2150, %v2163
  %v2165 = vcombine.low %v2157, %v2164
  %v2166 = vcombine.low %v2110, %v2111
  %v2167 = vcombine.low %v2112, %v2113
  %v2168 = vcombine.low %v2114, %v2115
  %v2170 = vunpack.c.l.s4 1966171168
  %v2171 = vunpack.c.0.s8 %v2170
  %v2172 = vlaneseq
  %v2173 = vshrl.u32 %v2172, 7
  %v2174 = vsub.s32 %v2171, %v2173
  %v2175 = vrot.slane %v2166, %v2174
  %v2177 = vunpack.c.l.s4 1966171168
  %v2178 = vunpack.c.0.s8 %v2177
  %v2179 = vlaneseq
  %v2180 = vshrl.u32 %v2179, 7
  %v2181 = vsub.s32 %v2178, %v2180
  %v2182 = vrot.slane %v2167, %v2181
  %v2184 = vunpack.c.l.s4 1966171168
  %v2185 = vunpack.c.0.s8 %v2184
  %v2186 = vlaneseq
  %v2187 = vshrl.u32 %v2186, 7
  %v2188 = vsub.s32 %v2185, %v2187
  %v2189 = vrot.slane %v2168, %v2188
  %v2191 = vunpack.c.l.s4 1966171168
  %v2192 = vunpack.c.0.s8 %v2191
  %v2193 = vlaneseq
  %v2194 = vshrl.u32 %v2193, 7
  %v2195 = vsub.s32 %v2192, %v2194
  %v2196 = vrot.slane %v2116, %v2195
  %v2197 = vcombine.low %v2175, %v2182
  %v2198 = vcombine.low %v2189, %v2196
  %v2200 = vunpack.c.l.s4 1966171168
  %v2201 = vunpack.c.0.s8 %v2200
  %v2202 = vlaneseq
  %v2203 = vshrl.u32 %v2202, 7
  %v2204 = vsub.s32 %v2201, %v2203
  %v2205 = vrot.slane %v2197, %v2204
  %v2207 = vunpack.c.l.s4 1966171168
  %v2208 = vunpack.c.0.s8 %v2207
  %v2209 = vlaneseq
  %v2210 = vshrl.u32 %v2209, 7
  %v2211 = vsub.s32 %v2208, %v2210
  %v2212 = vrot.slane %v2198, %v2211
  %v2213 = vcombine.low %v2205, %v2212
  %v2216 = vunpack.c.l.b16 %v2100
  %v2217 = vunpack.c.l.b16 %v2101
  %v2218 = vpack.c.b16 %v2217, %v2216
  %v2221 = vsel %vm326, %v2165, 0
  %v2224 = vsel %vm326, %v2213, 0
  %2226 = vmatprep.subr.bf16.mxu0 0
  %2227 = vmatpush1.bf16.msra.mxu0 %v2218
  %2228 = vmatprep.subr.bf16.mxu0 0
  %2229 = vmatpush1.bf16.msra.mxu0 0
  %2230 = vmatprep.subr.bf16.mxu0 0
  %2231 = vmatpush1.bf16.msra.mxu0 0
  %2232 = vmatprep.subr.bf16.mxu0 0
  %2233 = vmatpush1.bf16.msra.mxu0 0
  %2234 = vmatprep.subr.bf16.mxu0 0
  %2235 = vmatpush1.bf16.msra.mxu0 0
  %2236 = vmatprep.subr.bf16.mxu0 0
  %2237 = vmatpush1.bf16.msra.mxu0 0
  %2238 = vmatprep.subr.bf16.mxu0 0
  %2239 = vmatpush1.bf16.msra.mxu0 0
  %2240 = vmatprep.subr.bf16.mxu0 0
  %2241 = vmatpush1.bf16.msra.mxu0 0
  %2242 = vmatprep.subr.bf16.mxu0 0
  %2243 = vmatpush1.bf16.msra.mxu0 0
  %2244 = vmatprep.subr.bf16.mxu0 0
  %2245 = vmatpush1.bf16.msra.mxu0 0
  %2246 = vmatprep.subr.bf16.mxu0 0
  %2247 = vmatpush1.bf16.msra.mxu0 0
  %2248 = vmatprep.subr.bf16.mxu0 0
  %2249 = vmatpush1.bf16.msra.mxu0 0
  %2250 = vmatprep.subr.bf16.mxu0 0
  %2251 = vmatpush1.bf16.msra.mxu0 0
  %2252 = vmatprep.subr.bf16.mxu0 0
  %2253 = vmatpush1.bf16.msra.mxu0 0
  %2254 = vmatprep.subr.bf16.mxu0 0
  %2255 = vmatpush1.bf16.msra.mxu0 0
  %2256 = vmatprep.subr.bf16.mxu0 0
  %2257 = vmatpush1.bf16.msra.mxu0 0
  %2258 = vmatprep.mubr.bf16.mxu0 0
  %2259 = vmatmul.mubr.bf16.gmra.mrb[0].mxu0 %v2221
  %v2260 = vpop.f32.mrb[0].mxu0
  %v2261 = vadd.f32 0.0, %v2260
  %v2262 = vpop.f32.mrb[0].mxu0
  %v2263 = vpop.f32.mrb[0].mxu0
  %v2264 = vadd.f32 0.0, %v2263
  %v2265 = vpop.f32.mrb[0].mxu0
  %2266 = vmatprep.mubr.bf16.mxu0 0
  %2267 = vmatmul.mubr.bf16.gmra.mrb[0].mxu0 %v2224
  %v2268 = vpop.f32.mrb[0].mxu0
  %v2269 = vadd.f32 0.0, %v2268
  %v2270 = vpop.f32.mrb[0].mxu0
  %v2271 = vpop.f32.mrb[0].mxu0
  %v2272 = vadd.f32 0.0, %v2271
  %v2273 = vpop.f32.mrb[0].mxu0
  %2274 = vdwg.mxu0
  %v2275 = vpack.i.b16 %v1887, %v1886
  %v2276 = vpack.i.b16 %v1889, %v1888
  %v2277 = vpack.i.b16 %v1891, %v1890
  %v2278 = vpack.i.b16 %v1893, %v1892
  %v2279 = vpack.i.b16 %v1895, %v1894
  %v2280 = vpack.i.b16 %v1897, %v1896
  %v2281 = vpack.i.b16 %v1899, %v1898
  %v2282 = vpack.i.b16 %v1901, %v1900
  %v2283 = vpack.i.b16 %v1903, %v1902
  %v2284 = vpack.i.b16 %v1905, %v1904
  %v2285 = vpack.i.b16 %v1907, %v1906
  %v2286 = vpack.i.b16 %v1909, %v1908
  %v2287 = vpack.i.b16 %v1911, %v1910
  %v2288 = vpack.i.b16 %v1913, %v1912
  %v2289 = vpack.i.b16 %v1915, %v1914
  %v2290 = vcombine.low %v2275, %v2276
  %v2291 = vcombine.low %v2277, %v2278
  %v2292 = vcombine.low %v2279, %v2280
  %v2293 = vcombine.low %v2281, %v2282
  %v2295 = vunpack.c.l.s4 1966171168
  %v2296 = vunpack.c.0.s8 %v2295
  %v2297 = vlaneseq
  %v2298 = vshrl.u32 %v2297, 7
  %v2299 = vsub.s32 %v2296, %v2298
  %v2300 = vrot.slane %v2290, %v2299
  %v2302 = vunpack.c.l.s4 1966171168
  %v2303 = vunpack.c.0.s8 %v2302
  %v2304 = vlaneseq
  %v2305 = vshrl.u32 %v2304, 7
  %v2306 = vsub.s32 %v2303, %v2305
  %v2307 = vrot.slane %v2291, %v2306
  %v2309 = vunpack.c.l.s4 1966171168
  %v2310 = vunpack.c.0.s8 %v2309
  %v2311 = vlaneseq
  %v2312 = vshrl.u32 %v2311, 7
  %v2313 = vsub.s32 %v2310, %v2312
  %v2314 = vrot.slane %v2292, %v2313
  %v2316 = vunpack.c.l.s4 1966171168
  %v2317 = vunpack.c.0.s8 %v2316
  %v2318 = vlaneseq
  %v2319 = vshrl.u32 %v2318, 7
  %v2320 = vsub.s32 %v2317, %v2319
  %v2321 = vrot.slane %v2293, %v2320
  %v2322 = vcombine.low %v2300, %v2307
  %v2323 = vcombine.low %v2314, %v2321
  %v2325 = vunpack.c.l.s4 1966171168
  %v2326 = vunpack.c.0.s8 %v2325
  %v2327 = vlaneseq
  %v2328 = vshrl.u32 %v2327, 7
  %v2329 = vsub.s32 %v2326, %v2328
  %v2330 = vrot.slane %v2322, %v2329
  %v2332 = vunpack.c.l.s4 1966171168
  %v2333 = vunpack.c.0.s8 %v2332
  %v2334 = vlaneseq
  %v2335 = vshrl.u32 %v2334, 7
  %v2336 = vsub.s32 %v2333, %v2335
  %v2337 = vrot.slane %v2323, %v2336
  %v2338 = vcombine.low %v2330, %v2337
  %v2339 = vcombine.low %v2283, %v2284
  %v2340 = vcombine.low %v2285, %v2286
  %v2341 = vcombine.low %v2287, %v2288
  %v2343 = vunpack.c.l.s4 1966171168
  %v2344 = vunpack.c.0.s8 %v2343
  %v2345 = vlaneseq
  %v2346 = vshrl.u32 %v2345, 7
  %v2347 = vsub.s32 %v2344, %v2346
  %v2348 = vrot.slane %v2339, %v2347
  %v2350 = vunpack.c.l.s4 1966171168
  %v2351 = vunpack.c.0.s8 %v2350
  %v2352 = vlaneseq
  %v2353 = vshrl.u32 %v2352, 7
  %v2354 = vsub.s32 %v2351, %v2353
  %v2355 = vrot.slane %v2340, %v2354
  %v2357 = vunpack.c.l.s4 1966171168
  %v2358 = vunpack.c.0.s8 %v2357
  %v2359 = vlaneseq
  %v2360 = vshrl.u32 %v2359, 7
  %v2361 = vsub.s32 %v2358, %v2360
  %v2362 = vrot.slane %v2341, %v2361
  %v2364 = vunpack.c.l.s4 1966171168
  %v2365 = vunpack.c.0.s8 %v2364
  %v2366 = vlaneseq
  %v2367 = vshrl.u32 %v2366, 7
  %v2368 = vsub.s32 %v2365, %v2367
  %v2369 = vrot.slane %v2289, %v2368
  %v2370 = vcombine.low %v2348, %v2355
  %v2371 = vcombine.low %v2362, %v2369
  %v2373 = vunpack.c.l.s4 1966171168
  %v2374 = vunpack.c.0.s8 %v2373
  %v2375 = vlaneseq
  %v2376 = vshrl.u32 %v2375, 7
  %v2377 = vsub.s32 %v2374, %v2376
  %v2378 = vrot.slane %v2370, %v2377
  %v2380 = vunpack.c.l.s4 1966171168
  %v2381 = vunpack.c.0.s8 %v2380
  %v2382 = vlaneseq
  %v2383 = vshrl.u32 %v2382, 7
  %v2384 = vsub.s32 %v2381, %v2383
  %v2385 = vrot.slane %v2371, %v2384
  %v2386 = vcombine.low %v2378, %v2385
  %v2389 = vunpack.c.l.b16 %v1917
  %v2390 = vunpack.c.l.b16 %v1918
  %v2391 = vpack.c.b16 %v2390, %v2389
  %v2394 = vsel %vm326, %v2338, 0
  %v2397 = vsel %vm326, %v2386, 0
  %2399 = vmatprep.subr.bf16.mxu0 0
  %2400 = vmatpush1.bf16.msra.mxu0 %v2391
  %2401 = vmatprep.subr.bf16.mxu0 0
  %2402 = vmatpush1.bf16.msra.mxu0 0
  %2403 = vmatprep.subr.bf16.mxu0 0
  %2404 = vmatpush1.bf16.msra.mxu0 0
  %2405 = vmatprep.subr.bf16.mxu0 0
  %2406 = vmatpush1.bf16.msra.mxu0 0
  %2407 = vmatprep.subr.bf16.mxu0 0
  %2408 = vmatpush1.bf16.msra.mxu0 0
  %2409 = vmatprep.subr.bf16.mxu0 0
  %2410 = vmatpush1.bf16.msra.mxu0 0
  %2411 = vmatprep.subr.bf16.mxu0 0
  %2412 = vmatpush1.bf16.msra.mxu0 0
  %2413 = vmatprep.subr.bf16.mxu0 0
  %2414 = vmatpush1.bf16.msra.mxu0 0
  %2415 = vmatprep.subr.bf16.mxu0 0
  %2416 = vmatpush1.bf16.msra.mxu0 0
  %2417 = vmatprep.subr.bf16.mxu0 0
  %2418 = vmatpush1.bf16.msra.mxu0 0
  %2419 = vmatprep.subr.bf16.mxu0 0
  %2420 = vmatpush1.bf16.msra.mxu0 0
  %2421 = vmatprep.subr.bf16.mxu0 0
  %2422 = vmatpush1.bf16.msra.mxu0 0
  %2423 = vmatprep.subr.bf16.mxu0 0
  %2424 = vmatpush1.bf16.msra.mxu0 0
  %2425 = vmatprep.subr.bf16.mxu0 0
  %2426 = vmatpush1.bf16.msra.mxu0 0
  %2427 = vmatprep.subr.bf16.mxu0 0
  %2428 = vmatpush1.bf16.msra.mxu0 0
  %2429 = vmatprep.subr.bf16.mxu0 0
  %2430 = vmatpush1.bf16.msra.mxu0 0
  %2431 = vmatprep.mubr.bf16.mxu0 0
  %2432 = vmatmul.mubr.bf16.gmra.mrb[0].mxu0 %v2394
  %v2433 = vpop.f32.mrb[0].mxu0
  %v2434 = vadd.f32 %v2261, %v2433
  %v2435 = vpop.f32.mrb[0].mxu0
  %v2436 = vpop.f32.mrb[0].mxu0
  %v2437 = vadd.f32 %v2264, %v2436
  %v2438 = vpop.f32.mrb[0].mxu0
  %2439 = vmatprep.mubr.bf16.mxu0 0
  %2440 = vmatmul.mubr.bf16.gmra.mrb[0].mxu0 %v2397
  %v2441 = vpop.f32.mrb[0].mxu0
  %v2442 = vadd.f32 %v2269, %v2441
  %v2443 = vpop.f32.mrb[0].mxu0
  %v2444 = vpop.f32.mrb[0].mxu0
  %v2445 = vadd.f32 %v2272, %v2444
  %v2446 = vpop.f32.mrb[0].mxu0
  %2447 = vdwg.mxu0
  %v2448 = vld [vmem:[%s0] sm:$0xe]
  %v2449 = vld [vmem:[%s0 + $0x4] sm:$0xe]
  %v2450 = vld [vmem:[%s0 + $0x8] sm:$0xe]
  %v2451 = vld [vmem:[%s0 + $0x14] sm:$0xe]
  %v2452 = vld [vmem:[%s0 + $0x18] sm:$0xe]
  %v2453 = vld [vmem:[%s0 + $0x1c] sm:$0xe]
  %v2461 = vunpack.c.l.s4 1966171168
  %v2462 = vunpack.c.0.s8 %v2461
  %v2463 = vlaneseq
  %v2464 = vshrl.u32 %v2463, 7
  %v2465 = vsub.s32 %v2462, %v2464
  %v2466 = vrot.slane %v2448, %v2465
  %v2467 = vcombine.high %v2466, %v2466
  %v2469 = vunpack.c.l.s4 1966171168
  %v2470 = vunpack.c.0.s8 %v2469
  %v2471 = vlaneseq
  %v2472 = vshrl.u32 %v2471, 7
  %v2473 = vsub.s32 %v2470, %v2472
  %v2474 = vrot.slane %v2466, %v2473
  %v2476 = vunpack.c.l.s4 1966171168
  %v2477 = vunpack.c.0.s8 %v2476
  %v2478 = vlaneseq
  %v2479 = vshrl.u32 %v2478, 7
  %v2480 = vsub.s32 %v2477, %v2479
  %v2481 = vrot.slane %v2467, %v2480
  %v2482 = vcombine.high %v2474, %v2474
  %v2483 = vcombine.high %v2481, %v2481
  %v2485 = vunpack.c.l.s4 1966171168
  %v2486 = vunpack.c.0.s8 %v2485
  %v2487 = vlaneseq
  %v2488 = vshrl.u32 %v2487, 7
  %v2489 = vsub.s32 %v2486, %v2488
  %v2490 = vrot.slane %v2449, %v2489
  %v2491 = vcombine.high %v2490, %v2490
  %v2493 = vunpack.c.l.s4 1966171168
  %v2494 = vunpack.c.0.s8 %v2493
  %v2495 = vlaneseq
  %v2496 = vshrl.u32 %v2495, 7
  %v2497 = vsub.s32 %v2494, %v2496
  %v2498 = vrot.slane %v2490, %v2497
  %v2500 = vunpack.c.l.s4 1966171168
  %v2501 = vunpack.c.0.s8 %v2500
  %v2502 = vlaneseq
  %v2503 = vshrl.u32 %v2502, 7
  %v2504 = vsub.s32 %v2501, %v2503
  %v2505 = vrot.slane %v2491, %v2504
  %v2506 = vcombine.high %v2498, %v2498
  %v2507 = vcombine.high %v2505, %v2505
  %v2509 = vunpack.c.l.s4 1966171168
  %v2510 = vunpack.c.0.s8 %v2509
  %v2511 = vlaneseq
  %v2512 = vshrl.u32 %v2511, 7
  %v2513 = vsub.s32 %v2510, %v2512
  %v2514 = vrot.slane %v2450, %v2513
  %v2515 = vcombine.high %v2514, %v2514
  %v2517 = vunpack.c.l.s4 1966171168
  %v2518 = vunpack.c.0.s8 %v2517
  %v2519 = vlaneseq
  %v2520 = vshrl.u32 %v2519, 7
  %v2521 = vsub.s32 %v2518, %v2520
  %v2522 = vrot.slane %v2514, %v2521
  %v2524 = vunpack.c.l.s4 1966171168
  %v2525 = vunpack.c.0.s8 %v2524
  %v2526 = vlaneseq
  %v2527 = vshrl.u32 %v2526, 7
  %v2528 = vsub.s32 %v2525, %v2527
  %v2529 = vrot.slane %v2515, %v2528
  %v2530 = vcombine.high %v2522, %v2522
  %v2531 = vcombine.high %v2529, %v2529
  %v2533 = vunpack.c.l.s4 1966171168
  %v2534 = vunpack.c.0.s8 %v2533
  %v2535 = vlaneseq
  %v2536 = vshrl.u32 %v2535, 7
  %v2537 = vsub.s32 %v2534, %v2536
  %v2538 = vrot.slane %v2451, %v2537
  %v2539 = vcombine.high %v2538, %v2538
  %v2541 = vunpack.c.l.s4 1966171168
  %v2542 = vunpack.c.0.s8 %v2541
  %v2543 = vlaneseq
  %v2544 = vshrl.u32 %v2543, 7
  %v2545 = vsub.s32 %v2542, %v2544
  %v2546 = vrot.slane %v2538, %v2545
  %v2548 = vunpack.c.l.s4 1966171168
  %v2549 = vunpack.c.0.s8 %v2548
  %v2550 = vlaneseq
  %v2551 = vshrl.u32 %v2550, 7
  %v2552 = vsub.s32 %v2549, %v2551
  %v2553 = vrot.slane %v2539, %v2552
  %v2554 = vcombine.high %v2546, %v2546
  %v2555 = vcombine.high %v2553, %v2553
  %v2557 = vunpack.c.l.s4 1966171168
  %v2558 = vunpack.c.0.s8 %v2557
  %v2559 = vlaneseq
  %v2560 = vshrl.u32 %v2559, 7
  %v2561 = vsub.s32 %v2558, %v2560
  %v2562 = vrot.slane %v2452, %v2561
  %v2563 = vcombine.high %v2562, %v2562
  %v2565 = vunpack.c.l.s4 1966171168
  %v2566 = vunpack.c.0.s8 %v2565
  %v2567 = vlaneseq
  %v2568 = vshrl.u32 %v2567, 7
  %v2569 = vsub.s32 %v2566, %v2568
  %v2570 = vrot.slane %v2562, %v2569
  %v2572 = vunpack.c.l.s4 1966171168
  %v2573 = vunpack.c.0.s8 %v2572
  %v2574 = vlaneseq
  %v2575 = vshrl.u32 %v2574, 7
  %v2576 = vsub.s32 %v2573, %v2575
  %v2577 = vrot.slane %v2563, %v2576
  %v2578 = vcombine.high %v2570, %v2570
  %v2579 = vcombine.high %v2577, %v2577
  %v2581 = vunpack.c.l.s4 1966171168
  %v2582 = vunpack.c.0.s8 %v2581
  %v2583 = vlaneseq
  %v2584 = vshrl.u32 %v2583, 7
  %v2585 = vsub.s32 %v2582, %v2584
  %v2586 = vrot.slane %v2453, %v2585
  %v2587 = vcombine.high %v2586, %v2586
  %v2589 = vunpack.c.l.s4 1966171168
  %v2590 = vunpack.c.0.s8 %v2589
  %v2591 = vlaneseq
  %v2592 = vshrl.u32 %v2591, 7
  %v2593 = vsub.s32 %v2590, %v2592
  %v2594 = vrot.slane %v2586, %v2593
  %v2596 = vunpack.c.l.s4 1966171168
  %v2597 = vunpack.c.0.s8 %v2596
  %v2598 = vlaneseq
  %v2599 = vshrl.u32 %v2598, 7
  %v2600 = vsub.s32 %v2597, %v2599
  %v2601 = vrot.slane %v2587, %v2600
  %v2602 = vcombine.high %v2594, %v2594
  %v2603 = vcombine.high %v2601, %v2601
  %v2604 = vunpack.i.l.s16 %v2481
  %v2605 = vunpack.i.h.s16 %v2481
  %v2606 = vunpack.i.l.s16 %v2482
  %v2607 = vunpack.i.h.s16 %v2482
  %v2608 = vunpack.i.l.s16 %v2483
  %v2609 = vunpack.i.l.s16 %v2505
  %v2610 = vunpack.i.h.s16 %v2505
  %v2611 = vunpack.i.l.s16 %v2506
  %v2612 = vunpack.i.h.s16 %v2506
  %v2613 = vunpack.i.l.s16 %v2507
  %v2614 = vunpack.i.l.s16 %v2529
  %v2615 = vunpack.i.h.s16 %v2529
  %v2616 = vunpack.i.l.s16 %v2530
  %v2617 = vunpack.i.h.s16 %v2530
  %v2618 = vunpack.i.l.s16 %v2531
  %v2619 = vunpack.i.l.s16 %v2553
  %v2620 = vunpack.i.h.s16 %v2553
  %v2621 = vunpack.i.l.s16 %v2554
  %v2622 = vunpack.i.h.s16 %v2554
  %v2623 = vunpack.i.l.s16 %v2555
  %v2624 = vunpack.i.l.s16 %v2577
  %v2625 = vunpack.i.h.s16 %v2577
  %v2626 = vunpack.i.l.s16 %v2578
  %v2627 = vunpack.i.h.s16 %v2578
  %v2628 = vunpack.i.l.s16 %v2579
  %v2629 = vunpack.i.l.s16 %v2601
  %v2630 = vunpack.i.h.s16 %v2601
  %v2631 = vunpack.i.l.s16 %v2602
  %v2632 = vunpack.i.h.s16 %v2602
  %v2633 = vunpack.i.l.s16 %v2603
  %s2634 = scalar_lea.vmem %s1, 48
  %v2635 = vld [vmem:[%s2634] sm:$0xf]
  %v2636 = vld [vmem:[%s2634 + $0x4] sm:$0xf]
  %v2637 = vpack.i.b16 %v2605, %v2604
  %v2638 = vpack.i.b16 %v2607, %v2606
  %v2639 = vpack.i.b16 %v2609, %v2608
  %v2640 = vpack.i.b16 %v2611, %v2610
  %v2641 = vpack.i.b16 %v2613, %v2612
  %v2642 = vpack.i.b16 %v2615, %v2614
  %v2643 = vpack.i.b16 %v2617, %v2616
  %v2644 = vpack.i.b16 %v2619, %v2618
  %v2645 = vpack.i.b16 %v2621, %v2620
  %v2646 = vpack.i.b16 %v2623, %v2622
  %v2647 = vpack.i.b16 %v2625, %v2624
  %v2648 = vpack.i.b16 %v2627, %v2626
  %v2649 = vpack.i.b16 %v2629, %v2628
  %v2650 = vpack.i.b16 %v2631, %v2630
  %v2651 = vpack.i.b16 %v2633, %v2632
  %v2652 = vcombine.low %v2637, %v2638
  %v2653 = vcombine.low %v2639, %v2640
  %v2654 = vcombine.low %v2641, %v2642
  %v2655 = vcombine.low %v2643, %v2644
  %v2657 = vunpack.c.l.s4 1966171168
  %v2658 = vunpack.c.0.s8 %v2657
  %v2659 = vlaneseq
  %v2660 = vshrl.u32 %v2659, 7
  %v2661 = vsub.s32 %v2658, %v2660
  %v2662 = vrot.slane %v2652, %v2661
  %v2664 = vunpack.c.l.s4 1966171168
  %v2665 = vunpack.c.0.s8 %v2664
  %v2666 = vlaneseq
  %v2667 = vshrl.u32 %v2666, 7
  %v2668 = vsub.s32 %v2665, %v2667
  %v2669 = vrot.slane %v2653, %v2668
  %v2671 = vunpack.c.l.s4 1966171168
  %v2672 = vunpack.c.0.s8 %v2671
  %v2673 = vlaneseq
  %v2674 = vshrl.u32 %v2673, 7
  %v2675 = vsub.s32 %v2672, %v2674
  %v2676 = vrot.slane %v2654, %v2675
  %v2678 = vunpack.c.l.s4 1966171168
  %v2679 = vunpack.c.0.s8 %v2678
  %v2680 = vlaneseq
  %v2681 = vshrl.u32 %v2680, 7
  %v2682 = vsub.s32 %v2679, %v2681
  %v2683 = vrot.slane %v2655, %v2682
  %v2684 = vcombine.low %v2662, %v2669
  %v2685 = vcombine.low %v2676, %v2683
  %v2687 = vunpack.c.l.s4 1966171168
  %v2688 = vunpack.c.0.s8 %v2687
  %v2689 = vlaneseq
  %v2690 = vshrl.u32 %v2689, 7
  %v2691 = vsub.s32 %v2688, %v2690
  %v2692 = vrot.slane %v2684, %v2691
  %v2694 = vunpack.c.l.s4 1966171168
  %v2695 = vunpack.c.0.s8 %v2694
  %v2696 = vlaneseq
  %v2697 = vshrl.u32 %v2696, 7
  %v2698 = vsub.s32 %v2695, %v2697
  %v2699 = vrot.slane %v2685, %v2698
  %v2700 = vcombine.low %v2692, %v2699
  %v2701 = vcombine.low %v2645, %v2646
  %v2702 = vcombine.low %v2647, %v2648
  %v2703 = vcombine.low %v2649, %v2650
  %v2705 = vunpack.c.l.s4 1966171168
  %v2706 = vunpack.c.0.s8 %v2705
  %v2707 = vlaneseq
  %v2708 = vshrl.u32 %v2707, 7
  %v2709 = vsub.s32 %v2706, %v2708
  %v2710 = vrot.slane %v2701, %v2709
  %v2712 = vunpack.c.l.s4 1966171168
  %v2713 = vunpack.c.0.s8 %v2712
  %v2714 = vlaneseq
  %v2715 = vshrl.u32 %v2714, 7
  %v2716 = vsub.s32 %v2713, %v2715
  %v2717 = vrot.slane %v2702, %v2716
  %v2719 = vunpack.c.l.s4 1966171168
  %v2720 = vunpack.c.0.s8 %v2719
  %v2721 = vlaneseq
  %v2722 = vshrl.u32 %v2721, 7
  %v2723 = vsub.s32 %v2720, %v2722
  %v2724 = vrot.slane %v2703, %v2723
  %v2726 = vunpack.c.l.s4 1966171168
  %v2727 = vunpack.c.0.s8 %v2726
  %v2728 = vlaneseq
  %v2729 = vshrl.u32 %v2728, 7
  %v2730 = vsub.s32 %v2727, %v2729
  %v2731 = vrot.slane %v2651, %v2730
  %v2732 = vcombine.low %v2710, %v2717
  %v2733 = vcombine.low %v2724, %v2731
  %v2735 = vunpack.c.l.s4 1966171168
  %v2736 = vunpack.c.0.s8 %v2735
  %v2737 = vlaneseq
  %v2738 = vshrl.u32 %v2737, 7
  %v2739 = vsub.s32 %v2736, %v2738
  %v2740 = vrot.slane %v2732, %v2739
  %v2742 = vunpack.c.l.s4 1966171168
  %v2743 = vunpack.c.0.s8 %v2742
  %v2744 = vlaneseq
  %v2745 = vshrl.u32 %v2744, 7
  %v2746 = vsub.s32 %v2743, %v2745
  %v2747 = vrot.slane %v2733, %v2746
  %v2748 = vcombine.low %v2740, %v2747
  %v2751 = vunpack.c.l.b16 %v2635
  %v2752 = vunpack.c.l.b16 %v2636
  %v2753 = vpack.c.b16 %v2752, %v2751
  %v2756 = vsel %vm326, %v2700, 0
  %v2759 = vsel %vm326, %v2748, 0
  %2761 = vmatprep.subr.bf16.mxu0 0
  %2762 = vmatpush1.bf16.msra.mxu0 %v2753
  %2763 = vmatprep.subr.bf16.mxu0 0
  %2764 = vmatpush1.bf16.msra.mxu0 0
  %2765 = vmatprep.subr.bf16.mxu0 0
  %2766 = vmatpush1.bf16.msra.mxu0 0
  %2767 = vmatprep.subr.bf16.mxu0 0
  %2768 = vmatpush1.bf16.msra.mxu0 0
  %2769 = vmatprep.subr.bf16.mxu0 0
  %2770 = vmatpush1.bf16.msra.mxu0 0
  %2771 = vmatprep.subr.bf16.mxu0 0
  %2772 = vmatpush1.bf16.msra.mxu0 0
  %2773 = vmatprep.subr.bf16.mxu0 0
  %2774 = vmatpush1.bf16.msra.mxu0 0
  %2775 = vmatprep.subr.bf16.mxu0 0
  %2776 = vmatpush1.bf16.msra.mxu0 0
  %2777 = vmatprep.subr.bf16.mxu0 0
  %2778 = vmatpush1.bf16.msra.mxu0 0
  %2779 = vmatprep.subr.bf16.mxu0 0
  %2780 = vmatpush1.bf16.msra.mxu0 0
  %2781 = vmatprep.subr.bf16.mxu0 0
  %2782 = vmatpush1.bf16.msra.mxu0 0
  %2783 = vmatprep.subr.bf16.mxu0 0
  %2784 = vmatpush1.bf16.msra.mxu0 0
  %2785 = vmatprep.subr.bf16.mxu0 0
  %2786 = vmatpush1.bf16.msra.mxu0 0
  %2787 = vmatprep.subr.bf16.mxu0 0
  %2788 = vmatpush1.bf16.msra.mxu0 0
  %2789 = vmatprep.subr.bf16.mxu0 0
  %2790 = vmatpush1.bf16.msra.mxu0 0
  %2791 = vmatprep.subr.bf16.mxu0 0
  %2792 = vmatpush1.bf16.msra.mxu0 0
  %2793 = vmatprep.mubr.bf16.mxu0 0
  %2794 = vmatmul.mubr.bf16.gmra.mrb[0].mxu0 %v2756
  %v2795 = vpop.f32.mrb[0].mxu0
  %v2796 = vadd.f32 0.0, %v2795
  %v2797 = vpop.f32.mrb[0].mxu0
  %v2798 = vpop.f32.mrb[0].mxu0
  %v2799 = vadd.f32 0.0, %v2798
  %v2800 = vpop.f32.mrb[0].mxu0
  %2801 = vmatprep.mubr.bf16.mxu0 0
  %2802 = vmatmul.mubr.bf16.gmra.mrb[0].mxu0 %v2759
  %v2803 = vpop.f32.mrb[0].mxu0
  %v2804 = vadd.f32 0.0, %v2803
  %v2805 = vpop.f32.mrb[0].mxu0
  %v2806 = vpop.f32.mrb[0].mxu0
  %v2807 = vadd.f32 0.0, %v2806
  %v2808 = vpop.f32.mrb[0].mxu0
  %2809 = vdwg.mxu0
  %v2810 = vadd.f32 %v2434, %v2796
  %v2811 = vadd.f32 %v2437, %v2799
  %v2812 = vadd.f32 %v2442, %v2804
  %v2813 = vadd.f32 %v2445, %v2807
  %v2814 = vld [vmem:[%s0] sm:$0x7]
  %v2815 = vld [vmem:[%s0 + $0x4] sm:$0x7]
  %v2816 = vld [vmem:[%s0 + $0x8] sm:$0x7]
  %v2817 = vld [vmem:[%s0 + $0x14] sm:$0x7]
  %v2818 = vld [vmem:[%s0 + $0x18] sm:$0x7]
  %v2819 = vld [vmem:[%s0 + $0x1c] sm:$0x7]
  %v2827 = vunpack.c.l.s4 1966171168
  %v2828 = vunpack.c.0.s8 %v2827
  %v2829 = vlaneseq
  %v2830 = vshrl.u32 %v2829, 7
  %v2831 = vsub.s32 %v2828, %v2830
  %v2832 = vrot.slane %v2814, %v2831
  %v2833 = vcombine.high %v2832, %v2832
  %v2835 = vunpack.c.l.s4 1966171168
  %v2836 = vunpack.c.0.s8 %v2835
  %v2837 = vlaneseq
  %v2838 = vshrl.u32 %v2837, 7
  %v2839 = vsub.s32 %v2836, %v2838
  %v2840 = vrot.slane %v2832, %v2839
  %v2842 = vunpack.c.l.s4 1966171168
  %v2843 = vunpack.c.0.s8 %v2842
  %v2844 = vlaneseq
  %v2845 = vshrl.u32 %v2844, 7
  %v2846 = vsub.s32 %v2843, %v2845
  %v2847 = vrot.slane %v2833, %v2846
  %v2848 = vcombine.high %v2840, %v2840
  %v2850 = vunpack.c.l.s4 1966171168
  %v2851 = vunpack.c.0.s8 %v2850
  %v2852 = vlaneseq
  %v2853 = vshrl.u32 %v2852, 7
  %v2854 = vsub.s32 %v2851, %v2853
  %v2855 = vrot.slane %v2815, %v2854
  %v2856 = vcombine.high %v2855, %v2855
  %v2858 = vunpack.c.l.s4 1966171168
  %v2859 = vunpack.c.0.s8 %v2858
  %v2860 = vlaneseq
  %v2861 = vshrl.u32 %v2860, 7
  %v2862 = vsub.s32 %v2859, %v2861
  %v2863 = vrot.slane %v2855, %v2862
  %v2865 = vunpack.c.l.s4 1966171168
  %v2866 = vunpack.c.0.s8 %v2865
  %v2867 = vlaneseq
  %v2868 = vshrl.u32 %v2867, 7
  %v2869 = vsub.s32 %v2866, %v2868
  %v2870 = vrot.slane %v2856, %v2869
  %v2871 = vcombine.high %v2863, %v2863
  %v2873 = vunpack.c.l.s4 1966171168
  %v2874 = vunpack.c.0.s8 %v2873
  %v2875 = vlaneseq
  %v2876 = vshrl.u32 %v2875, 7
  %v2877 = vsub.s32 %v2874, %v2876
  %v2878 = vrot.slane %v2816, %v2877
  %v2879 = vcombine.high %v2878, %v2878
  %v2881 = vunpack.c.l.s4 1966171168
  %v2882 = vunpack.c.0.s8 %v2881
  %v2883 = vlaneseq
  %v2884 = vshrl.u32 %v2883, 7
  %v2885 = vsub.s32 %v2882, %v2884
  %v2886 = vrot.slane %v2878, %v2885
  %v2888 = vunpack.c.l.s4 1966171168
  %v2889 = vunpack.c.0.s8 %v2888
  %v2890 = vlaneseq
  %v2891 = vshrl.u32 %v2890, 7
  %v2892 = vsub.s32 %v2889, %v2891
  %v2893 = vrot.slane %v2879, %v2892
  %v2894 = vcombine.high %v2886, %v2886
  %v2896 = vunpack.c.l.s4 1966171168
  %v2897 = vunpack.c.0.s8 %v2896
  %v2898 = vlaneseq
  %v2899 = vshrl.u32 %v2898, 7
  %v2900 = vsub.s32 %v2897, %v2899
  %v2901 = vrot.slane %v2817, %v2900
  %v2902 = vcombine.high %v2901, %v2901
  %v2904 = vunpack.c.l.s4 1966171168
  %v2905 = vunpack.c.0.s8 %v2904
  %v2906 = vlaneseq
  %v2907 = vshrl.u32 %v2906, 7
  %v2908 = vsub.s32 %v2905, %v2907
  %v2909 = vrot.slane %v2901, %v2908
  %v2911 = vunpack.c.l.s4 1966171168
  %v2912 = vunpack.c.0.s8 %v2911
  %v2913 = vlaneseq
  %v2914 = vshrl.u32 %v2913, 7
  %v2915 = vsub.s32 %v2912, %v2914
  %v2916 = vrot.slane %v2902, %v2915
  %v2917 = vcombine.high %v2909, %v2909
  %v2919 = vunpack.c.l.s4 1966171168
  %v2920 = vunpack.c.0.s8 %v2919
  %v2921 = vlaneseq
  %v2922 = vshrl.u32 %v2921, 7
  %v2923 = vsub.s32 %v2920, %v2922
  %v2924 = vrot.slane %v2818, %v2923
  %v2925 = vcombine.high %v2924, %v2924
  %v2927 = vunpack.c.l.s4 1966171168
  %v2928 = vunpack.c.0.s8 %v2927
  %v2929 = vlaneseq
  %v2930 = vshrl.u32 %v2929, 7
  %v2931 = vsub.s32 %v2928, %v2930
  %v2932 = vrot.slane %v2924, %v2931
  %v2934 = vunpack.c.l.s4 1966171168
  %v2935 = vunpack.c.0.s8 %v2934
  %v2936 = vlaneseq
  %v2937 = vshrl.u32 %v2936, 7
  %v2938 = vsub.s32 %v2935, %v2937
  %v2939 = vrot.slane %v2925, %v2938
  %v2940 = vcombine.high %v2932, %v2932
  %v2942 = vunpack.c.l.s4 1966171168
  %v2943 = vunpack.c.0.s8 %v2942
  %v2944 = vlaneseq
  %v2945 = vshrl.u32 %v2944, 7
  %v2946 = vsub.s32 %v2943, %v2945
  %v2947 = vrot.slane %v2819, %v2946
  %v2948 = vcombine.high %v2947, %v2947
  %v2950 = vunpack.c.l.s4 1966171168
  %v2951 = vunpack.c.0.s8 %v2950
  %v2952 = vlaneseq
  %v2953 = vshrl.u32 %v2952, 7
  %v2954 = vsub.s32 %v2951, %v2953
  %v2955 = vrot.slane %v2947, %v2954
  %v2957 = vunpack.c.l.s4 1966171168
  %v2958 = vunpack.c.0.s8 %v2957
  %v2959 = vlaneseq
  %v2960 = vshrl.u32 %v2959, 7
  %v2961 = vsub.s32 %v2958, %v2960
  %v2962 = vrot.slane %v2948, %v2961
  %v2963 = vcombine.high %v2955, %v2955
  %v2964 = vunpack.i.h.s16 %v2840
  %v2965 = vunpack.i.l.s16 %v2847
  %v2966 = vunpack.i.h.s16 %v2847
  %v2967 = vunpack.i.l.s16 %v2848
  %v2968 = vunpack.i.h.s16 %v2848
  %v2969 = vunpack.i.h.s16 %v2863
  %v2970 = vunpack.i.l.s16 %v2870
  %v2971 = vunpack.i.h.s16 %v2870
  %v2972 = vunpack.i.l.s16 %v2871
  %v2973 = vunpack.i.h.s16 %v2871
  %v2974 = vunpack.i.h.s16 %v2886
  %v2975 = vunpack.i.l.s16 %v2893
  %v2976 = vunpack.i.h.s16 %v2893
  %v2977 = vunpack.i.l.s16 %v2894
  %v2978 = vunpack.i.h.s16 %v2894
  %v2979 = vunpack.i.h.s16 %v2909
  %v2980 = vunpack.i.l.s16 %v2916
  %v2981 = vunpack.i.h.s16 %v2916
  %v2982 = vunpack.i.l.s16 %v2917
  %v2983 = vunpack.i.h.s16 %v2917
  %v2984 = vunpack.i.h.s16 %v2932
  %v2985 = vunpack.i.l.s16 %v2939
  %v2986 = vunpack.i.h.s16 %v2939
  %v2987 = vunpack.i.l.s16 %v2940
  %v2988 = vunpack.i.h.s16 %v2940
  %v2989 = vunpack.i.h.s16 %v2955
  %v2990 = vunpack.i.l.s16 %v2962
  %v2991 = vunpack.i.h.s16 %v2962
  %v2992 = vunpack.i.l.s16 %v2963
  %v2993 = vunpack.i.h.s16 %v2963
  %s2994 = scalar_lea.vmem %s1, 56
  %v2995 = vld [vmem:[%s2994] sm:$0xf]
  %v2996 = vld [vmem:[%s2994 + $0x4] sm:$0xf]
  %v2997 = vpack.i.b16 %v2965, %v2964
  %v2998 = vpack.i.b16 %v2967, %v2966
  %v2999 = vpack.i.b16 %v2969, %v2968
  %v3000 = vpack.i.b16 %v2971, %v2970
  %v3001 = vpack.i.b16 %v2973, %v2972
  %v3002 = vpack.i.b16 %v2975, %v2974
  %v3003 = vpack.i.b16 %v2977, %v2976
  %v3004 = vpack.i.b16 %v2979, %v2978
  %v3005 = vpack.i.b16 %v2981, %v2980
  %v3006 = vpack.i.b16 %v2983, %v2982
  %v3007 = vpack.i.b16 %v2985, %v2984
  %v3008 = vpack.i.b16 %v2987, %v2986
  %v3009 = vpack.i.b16 %v2989, %v2988
  %v3010 = vpack.i.b16 %v2991, %v2990
  %v3011 = vpack.i.b16 %v2993, %v2992
  %v3012 = vcombine.low %v2997, %v2998
  %v3013 = vcombine.low %v2999, %v3000
  %v3014 = vcombine.low %v3001, %v3002
  %v3015 = vcombine.low %v3003, %v3004
  %v3017 = vunpack.c.l.s4 1966171168
  %v3018 = vunpack.c.0.s8 %v3017
  %v3019 = vlaneseq
  %v3020 = vshrl.u32 %v3019, 7
  %v3021 = vsub.s32 %v3018, %v3020
  %v3022 = vrot.slane %v3012, %v3021
  %v3024 = vunpack.c.l.s4 1966171168
  %v3025 = vunpack.c.0.s8 %v3024
  %v3026 = vlaneseq
  %v3027 = vshrl.u32 %v3026, 7
  %v3028 = vsub.s32 %v3025, %v3027
  %v3029 = vrot.slane %v3013, %v3028
  %v3031 = vunpack.c.l.s4 1966171168
  %v3032 = vunpack.c.0.s8 %v3031
  %v3033 = vlaneseq
  %v3034 = vshrl.u32 %v3033, 7
  %v3035 = vsub.s32 %v3032, %v3034
  %v3036 = vrot.slane %v3014, %v3035
  %v3038 = vunpack.c.l.s4 1966171168
  %v3039 = vunpack.c.0.s8 %v3038
  %v3040 = vlaneseq
  %v3041 = vshrl.u32 %v3040, 7
  %v3042 = vsub.s32 %v3039, %v3041
  %v3043 = vrot.slane %v3015, %v3042
  %v3044 = vcombine.low %v3022, %v3029
  %v3045 = vcombine.low %v3036, %v3043
  %v3047 = vunpack.c.l.s4 1966171168
  %v3048 = vunpack.c.0.s8 %v3047
  %v3049 = vlaneseq
  %v3050 = vshrl.u32 %v3049, 7
  %v3051 = vsub.s32 %v3048, %v3050
  %v3052 = vrot.slane %v3044, %v3051
  %v3054 = vunpack.c.l.s4 1966171168
  %v3055 = vunpack.c.0.s8 %v3054
  %v3056 = vlaneseq
  %v3057 = vshrl.u32 %v3056, 7
  %v3058 = vsub.s32 %v3055, %v3057
  %v3059 = vrot.slane %v3045, %v3058
  %v3060 = vcombine.low %v3052, %v3059
  %v3061 = vcombine.low %v3005, %v3006
  %v3062 = vcombine.low %v3007, %v3008
  %v3063 = vcombine.low %v3009, %v3010
  %v3065 = vunpack.c.l.s4 1966171168
  %v3066 = vunpack.c.0.s8 %v3065
  %v3067 = vlaneseq
  %v3068 = vshrl.u32 %v3067, 7
  %v3069 = vsub.s32 %v3066, %v3068
  %v3070 = vrot.slane %v3061, %v3069
  %v3072 = vunpack.c.l.s4 1966171168
  %v3073 = vunpack.c.0.s8 %v3072
  %v3074 = vlaneseq
  %v3075 = vshrl.u32 %v3074, 7
  %v3076 = vsub.s32 %v3073, %v3075
  %v3077 = vrot.slane %v3062, %v3076
  %v3079 = vunpack.c.l.s4 1966171168
  %v3080 = vunpack.c.0.s8 %v3079
  %v3081 = vlaneseq
  %v3082 = vshrl.u32 %v3081, 7
  %v3083 = vsub.s32 %v3080, %v3082
  %v3084 = vrot.slane %v3063, %v3083
  %v3086 = vunpack.c.l.s4 1966171168
  %v3087 = vunpack.c.0.s8 %v3086
  %v3088 = vlaneseq
  %v3089 = vshrl.u32 %v3088, 7
  %v3090 = vsub.s32 %v3087, %v3089
  %v3091 = vrot.slane %v3011, %v3090
  %v3092 = vcombine.low %v3070, %v3077
  %v3093 = vcombine.low %v3084, %v3091
  %v3095 = vunpack.c.l.s4 1966171168
  %v3096 = vunpack.c.0.s8 %v3095
  %v3097 = vlaneseq
  %v3098 = vshrl.u32 %v3097, 7
  %v3099 = vsub.s32 %v3096, %v3098
  %v3100 = vrot.slane %v3092, %v3099
  %v3102 = vunpack.c.l.s4 1966171168
  %v3103 = vunpack.c.0.s8 %v3102
  %v3104 = vlaneseq
  %v3105 = vshrl.u32 %v3104, 7
  %v3106 = vsub.s32 %v3103, %v3105
  %v3107 = vrot.slane %v3093, %v3106
  %v3108 = vcombine.low %v3100, %v3107
  %v3111 = vunpack.c.l.b16 %v2995
  %v3112 = vunpack.c.l.b16 %v2996
  %v3113 = vpack.c.b16 %v3112, %v3111
  %v3116 = vsel %vm326, %v3060, 0
  %v3119 = vsel %vm326, %v3108, 0
  %3121 = vmatprep.subr.bf16.mxu0 0
  %3122 = vmatpush1.bf16.msra.mxu0 %v3113
  %3123 = vmatprep.subr.bf16.mxu0 0
  %3124 = vmatpush1.bf16.msra.mxu0 0
  %3125 = vmatprep.subr.bf16.mxu0 0
  %3126 = vmatpush1.bf16.msra.mxu0 0
  %3127 = vmatprep.subr.bf16.mxu0 0
  %3128 = vmatpush1.bf16.msra.mxu0 0
  %3129 = vmatprep.subr.bf16.mxu0 0
  %3130 = vmatpush1.bf16.msra.mxu0 0
  %3131 = vmatprep.subr.bf16.mxu0 0
  %3132 = vmatpush1.bf16.msra.mxu0 0
  %3133 = vmatprep.subr.bf16.mxu0 0
  %3134 = vmatpush1.bf16.msra.mxu0 0
  %3135 = vmatprep.subr.bf16.mxu0 0
  %3136 = vmatpush1.bf16.msra.mxu0 0
  %3137 = vmatprep.subr.bf16.mxu0 0
  %3138 = vmatpush1.bf16.msra.mxu0 0
  %3139 = vmatprep.subr.bf16.mxu0 0
  %3140 = vmatpush1.bf16.msra.mxu0 0
  %3141 = vmatprep.subr.bf16.mxu0 0
  %3142 = vmatpush1.bf16.msra.mxu0 0
  %3143 = vmatprep.subr.bf16.mxu0 0
  %3144 = vmatpush1.bf16.msra.mxu0 0
  %3145 = vmatprep.subr.bf16.mxu0 0
  %3146 = vmatpush1.bf16.msra.mxu0 0
  %3147 = vmatprep.subr.bf16.mxu0 0
  %3148 = vmatpush1.bf16.msra.mxu0 0
  %3149 = vmatprep.subr.bf16.mxu0 0
  %3150 = vmatpush1.bf16.msra.mxu0 0
  %3151 = vmatprep.subr.bf16.mxu0 0
  %3152 = vmatpush1.bf16.msra.mxu0 0
  %3153 = vmatprep.mubr.bf16.mxu0 0
  %3154 = vmatmul.mubr.bf16.gmra.mrb[0].mxu0 %v3116
  %v3155 = vpop.f32.mrb[0].mxu0
  %v3156 = vadd.f32 0.0, %v3155
  %v3157 = vpop.f32.mrb[0].mxu0
  %v3158 = vpop.f32.mrb[0].mxu0
  %v3159 = vadd.f32 0.0, %v3158
  %v3160 = vpop.f32.mrb[0].mxu0
  %3161 = vmatprep.mubr.bf16.mxu0 0
  %3162 = vmatmul.mubr.bf16.gmra.mrb[0].mxu0 %v3119
  %v3163 = vpop.f32.mrb[0].mxu0
  %v3164 = vadd.f32 0.0, %v3163
  %v3165 = vpop.f32.mrb[0].mxu0
  %v3166 = vpop.f32.mrb[0].mxu0
  %v3167 = vadd.f32 0.0, %v3166
  %v3168 = vpop.f32.mrb[0].mxu0
  %3169 = vdwg.mxu0
  %v3170 = vadd.f32 %v2810, %v3156
  %v3171 = vadd.f32 %v2811, %v3159
  %v3172 = vadd.f32 %v2812, %v3164
  %v3173 = vadd.f32 %v2813, %v3167
  %v3174 = vadd.f32 %v3170, %v1279
  %v3175 = vadd.f32 %v3171, %v1279
  %v3176 = vadd.f32 %v3172, %v1279
  %v3177 = vadd.f32 %v3173, %v1279
  %v3182 = vcombine.high %v3174, %v3174
  %v3184 = vunpack.c.l.s4 1966171168
  %v3185 = vunpack.c.0.s8 %v3184
  %v3186 = vlaneseq
  %v3187 = vshrl.u32 %v3186, 7
  %v3188 = vsub.s32 %v3185, %v3187
  %v3189 = vrot.slane %v3174, %v3188
  %v3191 = vunpack.c.l.s4 1966171168
  %v3192 = vunpack.c.0.s8 %v3191
  %v3193 = vlaneseq
  %v3194 = vshrl.u32 %v3193, 7
  %v3195 = vsub.s32 %v3192, %v3194
  %v3196 = vrot.slane %v3182, %v3195
  %v3197 = vcombine.high %v3189, %v3189
  %v3198 = vcombine.high %v3196, %v3196
  %v3200 = vunpack.c.l.s4 1966171168
  %v3201 = vunpack.c.0.s8 %v3200
  %v3202 = vlaneseq
  %v3203 = vshrl.u32 %v3202, 7
  %v3204 = vsub.s32 %v3201, %v3203
  %v3205 = vrot.slane %v3189, %v3204
  %v3207 = vunpack.c.l.s4 1966171168
  %v3208 = vunpack.c.0.s8 %v3207
  %v3209 = vlaneseq
  %v3210 = vshrl.u32 %v3209, 7
  %v3211 = vsub.s32 %v3208, %v3210
  %v3212 = vrot.slane %v3196, %v3211
  %v3214 = vunpack.c.l.s4 1966171168
  %v3215 = vunpack.c.0.s8 %v3214
  %v3216 = vlaneseq
  %v3217 = vshrl.u32 %v3216, 7
  %v3218 = vsub.s32 %v3215, %v3217
  %v3219 = vrot.slane %v3197, %v3218
  %v3221 = vunpack.c.l.s4 1966171168
  %v3222 = vunpack.c.0.s8 %v3221
  %v3223 = vlaneseq
  %v3224 = vshrl.u32 %v3223, 7
  %v3225 = vsub.s32 %v3222, %v3224
  %v3226 = vrot.slane %v3198, %v3225
  %v3227 = vcombine.high %v3205, %v3205
  %v3228 = vcombine.high %v3212, %v3212
  %v3229 = vcombine.high %v3219, %v3219
  %v3230 = vcombine.high %v3226, %v3226
  %v3231 = vcombine.high %v3175, %v3175
  %v3233 = vunpack.c.l.s4 1966171168
  %v3234 = vunpack.c.0.s8 %v3233
  %v3235 = vlaneseq
  %v3236 = vshrl.u32 %v3235, 7
  %v3237 = vsub.s32 %v3234, %v3236
  %v3238 = vrot.slane %v3175, %v3237
  %v3240 = vunpack.c.l.s4 1966171168
  %v3241 = vunpack.c.0.s8 %v3240
  %v3242 = vlaneseq
  %v3243 = vshrl.u32 %v3242, 7
  %v3244 = vsub.s32 %v3241, %v3243
  %v3245 = vrot.slane %v3231, %v3244
  %v3246 = vcombine.high %v3238, %v3238
  %v3247 = vcombine.high %v3245, %v3245
  %v3249 = vunpack.c.l.s4 1966171168
  %v3250 = vunpack.c.0.s8 %v3249
  %v3251 = vlaneseq
  %v3252 = vshrl.u32 %v3251, 7
  %v3253 = vsub.s32 %v3250, %v3252
  %v3254 = vrot.slane %v3238, %v3253
  %v3256 = vunpack.c.l.s4 1966171168
  %v3257 = vunpack.c.0.s8 %v3256
  %v3258 = vlaneseq
  %v3259 = vshrl.u32 %v3258, 7
  %v3260 = vsub.s32 %v3257, %v3259
  %v3261 = vrot.slane %v3245, %v3260
  %v3263 = vunpack.c.l.s4 1966171168
  %v3264 = vunpack.c.0.s8 %v3263
  %v3265 = vlaneseq
  %v3266 = vshrl.u32 %v3265, 7
  %v3267 = vsub.s32 %v3264, %v3266
  %v3268 = vrot.slane %v3246, %v3267
  %v3270 = vunpack.c.l.s4 1966171168
  %v3271 = vunpack.c.0.s8 %v3270
  %v3272 = vlaneseq
  %v3273 = vshrl.u32 %v3272, 7
  %v3274 = vsub.s32 %v3271, %v3273
  %v3275 = vrot.slane %v3247, %v3274
  %v3276 = vcombine.high %v3254, %v3254
  %v3277 = vcombine.high %v3261, %v3261
  %v3278 = vcombine.high %v3268, %v3268
  %v3279 = vcombine.high %v3275, %v3275
  %v3280 = vcombine.high %v3176, %v3176
  %v3282 = vunpack.c.l.s4 1966171168
  %v3283 = vunpack.c.0.s8 %v3282
  %v3284 = vlaneseq
  %v3285 = vshrl.u32 %v3284, 7
  %v3286 = vsub.s32 %v3283, %v3285
  %v3287 = vrot.slane %v3176, %v3286
  %v3289 = vunpack.c.l.s4 1966171168
  %v3290 = vunpack.c.0.s8 %v3289
  %v3291 = vlaneseq
  %v3292 = vshrl.u32 %v3291, 7
  %v3293 = vsub.s32 %v3290, %v3292
  %v3294 = vrot.slane %v3280, %v3293
  %v3295 = vcombine.high %v3287, %v3287
  %v3296 = vcombine.high %v3294, %v3294
  %v3298 = vunpack.c.l.s4 1966171168
  %v3299 = vunpack.c.0.s8 %v3298
  %v3300 = vlaneseq
  %v3301 = vshrl.u32 %v3300, 7
  %v3302 = vsub.s32 %v3299, %v3301
  %v3303 = vrot.slane %v3287, %v3302
  %v3305 = vunpack.c.l.s4 1966171168
  %v3306 = vunpack.c.0.s8 %v3305
  %v3307 = vlaneseq
  %v3308 = vshrl.u32 %v3307, 7
  %v3309 = vsub.s32 %v3306, %v3308
  %v3310 = vrot.slane %v3294, %v3309
  %v3312 = vunpack.c.l.s4 1966171168
  %v3313 = vunpack.c.0.s8 %v3312
  %v3314 = vlaneseq
  %v3315 = vshrl.u32 %v3314, 7
  %v3316 = vsub.s32 %v3313, %v3315
  %v3317 = vrot.slane %v3295, %v3316
  %v3319 = vunpack.c.l.s4 1966171168
  %v3320 = vunpack.c.0.s8 %v3319
  %v3321 = vlaneseq
  %v3322 = vshrl.u32 %v3321, 7
  %v3323 = vsub.s32 %v3320, %v3322
  %v3324 = vrot.slane %v3296, %v3323
  %v3325 = vcombine.high %v3303, %v3303
  %v3326 = vcombine.high %v3310, %v3310
  %v3327 = vcombine.high %v3317, %v3317
  %v3328 = vcombine.high %v3324, %v3324
  %v3329 = vcombine.high %v3177, %v3177
  %v3331 = vunpack.c.l.s4 1966171168
  %v3332 = vunpack.c.0.s8 %v3331
  %v3333 = vlaneseq
  %v3334 = vshrl.u32 %v3333, 7
  %v3335 = vsub.s32 %v3332, %v3334
  %v3336 = vrot.slane %v3177, %v3335
  %v3338 = vunpack.c.l.s4 1966171168
  %v3339 = vunpack.c.0.s8 %v3338
  %v3340 = vlaneseq
  %v3341 = vshrl.u32 %v3340, 7
  %v3342 = vsub.s32 %v3339, %v3341
  %v3343 = vrot.slane %v3329, %v3342
  %v3344 = vcombine.high %v3336, %v3336
  %v3345 = vcombine.high %v3343, %v3343
  %v3347 = vunpack.c.l.s4 1966171168
  %v3348 = vunpack.c.0.s8 %v3347
  %v3349 = vlaneseq
  %v3350 = vshrl.u32 %v3349, 7
  %v3351 = vsub.s32 %v3348, %v3350
  %v3352 = vrot.slane %v3336, %v3351
  %v3354 = vunpack.c.l.s4 1966171168
  %v3355 = vunpack.c.0.s8 %v3354
  %v3356 = vlaneseq
  %v3357 = vshrl.u32 %v3356, 7
  %v3358 = vsub.s32 %v3355, %v3357
  %v3359 = vrot.slane %v3343, %v3358
  %v3361 = vunpack.c.l.s4 1966171168
  %v3362 = vunpack.c.0.s8 %v3361
  %v3363 = vlaneseq
  %v3364 = vshrl.u32 %v3363, 7
  %v3365 = vsub.s32 %v3362, %v3364
  %v3366 = vrot.slane %v3344, %v3365
  %v3368 = vunpack.c.l.s4 1966171168
  %v3369 = vunpack.c.0.s8 %v3368
  %v3370 = vlaneseq
  %v3371 = vshrl.u32 %v3370, 7
  %v3372 = vsub.s32 %v3369, %v3371
  %v3373 = vrot.slane %v3345, %v3372
  %v3374 = vcombine.high %v3352, %v3352
  %v3375 = vcombine.high %v3366, %v3366
  %v3376 = vcombine.low %v3205, %v3219
  %v3377 = vcombine.low %v3227, %v3229
  %v3379 = vunpack.c.l.s4 1966171168
  %v3380 = vunpack.c.0.s8 %v3379
  %v3381 = vlaneseq
  %v3382 = vshrl.u32 %v3381, 7
  %v3383 = vsub.s32 %v3380, %v3382
  %v3384 = vrot.slane %v3376, %v3383
  %v3386 = vunpack.c.l.s4 1966171168
  %v3387 = vunpack.c.0.s8 %v3386
  %v3388 = vlaneseq
  %v3389 = vshrl.u32 %v3388, 7
  %v3390 = vsub.s32 %v3387, %v3389
  %v3391 = vrot.slane %v3377, %v3390
  %v3393 = vunpack.c.l.s4 1966171168
  %v3394 = vunpack.c.0.s8 %v3393
  %v3395 = vlaneseq
  %v3396 = vshrl.u32 %v3395, 7
  %v3397 = vsub.s32 %v3394, %v3396
  %v3398 = vrot.slane %v3212, %v3397
  %v3399 = vcombine.low %v3384, %v3391
  %v3401 = vunpack.c.l.s4 1966171168
  %v3402 = vunpack.c.0.s8 %v3401
  %v3403 = vlaneseq
  %v3404 = vshrl.u32 %v3403, 7
  %v3405 = vsub.s32 %v3402, %v3404
  %v3406 = vrot.slane %v3399, %v3405
  %v3408 = vunpack.c.l.s4 1966171168
  %v3409 = vunpack.c.0.s8 %v3408
  %v3410 = vlaneseq
  %v3411 = vshrl.u32 %v3410, 7
  %v3412 = vsub.s32 %v3409, %v3411
  %v3413 = vrot.slane %v3398, %v3412
  %v3414 = vcombine.low %v3406, %v3413
  %v3415 = vcombine.low %v3226, %v3228
  %v3416 = vcombine.low %v3230, %v3254
  %v3418 = vunpack.c.l.s4 1966171168
  %v3419 = vunpack.c.0.s8 %v3418
  %v3420 = vlaneseq
  %v3421 = vshrl.u32 %v3420, 7
  %v3422 = vsub.s32 %v3419, %v3421
  %v3423 = vrot.slane %v3415, %v3422
  %v3425 = vunpack.c.l.s4 1966171168
  %v3426 = vunpack.c.0.s8 %v3425
  %v3427 = vlaneseq
  %v3428 = vshrl.u32 %v3427, 7
  %v3429 = vsub.s32 %v3426, %v3428
  %v3430 = vrot.slane %v3416, %v3429
  %v3432 = vunpack.c.l.s4 1966171168
  %v3433 = vunpack.c.0.s8 %v3432
  %v3434 = vlaneseq
  %v3435 = vshrl.u32 %v3434, 7
  %v3436 = vsub.s32 %v3433, %v3435
  %v3437 = vrot.slane %v3268, %v3436
  %v3438 = vcombine.low %v3423, %v3430
  %v3440 = vunpack.c.l.s4 1966171168
  %v3441 = vunpack.c.0.s8 %v3440
  %v3442 = vlaneseq
  %v3443 = vshrl.u32 %v3442, 7
  %v3444 = vsub.s32 %v3441, %v3443
  %v3445 = vrot.slane %v3438, %v3444
  %v3447 = vunpack.c.l.s4 1966171168
  %v3448 = vunpack.c.0.s8 %v3447
  %v3449 = vlaneseq
  %v3450 = vshrl.u32 %v3449, 7
  %v3451 = vsub.s32 %v3448, %v3450
  %v3452 = vrot.slane %v3437, %v3451
  %v3453 = vcombine.low %v3445, %v3452
  %v3454 = vcombine.low %v3276, %v3278
  %v3455 = vcombine.low %v3261, %v3275
  %v3457 = vunpack.c.l.s4 1966171168
  %v3458 = vunpack.c.0.s8 %v3457
  %v3459 = vlaneseq
  %v3460 = vshrl.u32 %v3459, 7
  %v3461 = vsub.s32 %v3458, %v3460
  %v3462 = vrot.slane %v3454, %v3461
  %v3464 = vunpack.c.l.s4 1966171168
  %v3465 = vunpack.c.0.s8 %v3464
  %v3466 = vlaneseq
  %v3467 = vshrl.u32 %v3466, 7
  %v3468 = vsub.s32 %v3465, %v3467
  %v3469 = vrot.slane %v3455, %v3468
  %v3471 = vunpack.c.l.s4 1966171168
  %v3472 = vunpack.c.0.s8 %v3471
  %v3473 = vlaneseq
  %v3474 = vshrl.u32 %v3473, 7
  %v3475 = vsub.s32 %v3472, %v3474
  %v3476 = vrot.slane %v3277, %v3475
  %v3477 = vcombine.low %v3462, %v3469
  %v3479 = vunpack.c.l.s4 1966171168
  %v3480 = vunpack.c.0.s8 %v3479
  %v3481 = vlaneseq
  %v3482 = vshrl.u32 %v3481, 7
  %v3483 = vsub.s32 %v3480, %v3482
  %v3484 = vrot.slane %v3477, %v3483
  %v3486 = vunpack.c.l.s4 1966171168
  %v3487 = vunpack.c.0.s8 %v3486
  %v3488 = vlaneseq
  %v3489 = vshrl.u32 %v3488, 7
  %v3490 = vsub.s32 %v3487, %v3489
  %v3491 = vrot.slane %v3476, %v3490
  %v3492 = vcombine.low %v3484, %v3491
  %v3493 = vcombine.low %v3279, %v3303
  %v3494 = vcombine.low %v3317, %v3325
  %v3496 = vunpack.c.l.s4 1966171168
  %v3497 = vunpack.c.0.s8 %v3496
  %v3498 = vlaneseq
  %v3499 = vshrl.u32 %v3498, 7
  %v3500 = vsub.s32 %v3497, %v3499
  %v3501 = vrot.slane %v3493, %v3500
  %v3503 = vunpack.c.l.s4 1966171168
  %v3504 = vunpack.c.0.s8 %v3503
  %v3505 = vlaneseq
  %v3506 = vshrl.u32 %v3505, 7
  %v3507 = vsub.s32 %v3504, %v3506
  %v3508 = vrot.slane %v3494, %v3507
  %v3510 = vunpack.c.l.s4 1966171168
  %v3511 = vunpack.c.0.s8 %v3510
  %v3512 = vlaneseq
  %v3513 = vshrl.u32 %v3512, 7
  %v3514 = vsub.s32 %v3511, %v3513
  %v3515 = vrot.slane %v3327, %v3514
  %v3516 = vcombine.low %v3501, %v3508
  %v3518 = vunpack.c.l.s4 1966171168
  %v3519 = vunpack.c.0.s8 %v3518
  %v3520 = vlaneseq
  %v3521 = vshrl.u32 %v3520, 7
  %v3522 = vsub.s32 %v3519, %v3521
  %v3523 = vrot.slane %v3516, %v3522
  %v3525 = vunpack.c.l.s4 1966171168
  %v3526 = vunpack.c.0.s8 %v3525
  %v3527 = vlaneseq
  %v3528 = vshrl.u32 %v3527, 7
  %v3529 = vsub.s32 %v3526, %v3528
  %v3530 = vrot.slane %v3515, %v3529
  %v3531 = vcombine.low %v3523, %v3530
  %v3532 = vcombine.low %v3310, %v3324
  %v3533 = vcombine.low %v3326, %v3328
  %v3535 = vunpack.c.l.s4 1966171168
  %v3536 = vunpack.c.0.s8 %v3535
  %v3537 = vlaneseq
  %v3538 = vshrl.u32 %v3537, 7
  %v3539 = vsub.s32 %v3536, %v3538
  %v3540 = vrot.slane %v3532, %v3539
  %v3542 = vunpack.c.l.s4 1966171168
  %v3543 = vunpack.c.0.s8 %v3542
  %v3544 = vlaneseq
  %v3545 = vshrl.u32 %v3544, 7
  %v3546 = vsub.s32 %v3543, %v3545
  %v3547 = vrot.slane %v3533, %v3546
  %v3549 = vunpack.c.l.s4 1966171168
  %v3550 = vunpack.c.0.s8 %v3549
  %v3551 = vlaneseq
  %v3552 = vshrl.u32 %v3551, 7
  %v3553 = vsub.s32 %v3550, %v3552
  %v3554 = vrot.slane %v3352, %v3553
  %v3555 = vcombine.low %v3540, %v3547
  %v3557 = vunpack.c.l.s4 1966171168
  %v3558 = vunpack.c.0.s8 %v3557
  %v3559 = vlaneseq
  %v3560 = vshrl.u32 %v3559, 7
  %v3561 = vsub.s32 %v3558, %v3560
  %v3562 = vrot.slane %v3555, %v3561
  %v3564 = vunpack.c.l.s4 1966171168
  %v3565 = vunpack.c.0.s8 %v3564
  %v3566 = vlaneseq
  %v3567 = vshrl.u32 %v3566, 7
  %v3568 = vsub.s32 %v3565, %v3567
  %v3569 = vrot.slane %v3554, %v3568
  %v3570 = vcombine.low %v3562, %v3569
  %v3571 = vcombine.low %v3366, %v3374
  %v3572 = vcombine.low %v3375, %v3359
  %v3574 = vunpack.c.l.s4 1966171168
  %v3575 = vunpack.c.0.s8 %v3574
  %v3576 = vlaneseq
  %v3577 = vshrl.u32 %v3576, 7
  %v3578 = vsub.s32 %v3575, %v3577
  %v3579 = vrot.slane %v3571, %v3578
  %v3581 = vunpack.c.l.s4 1966171168
  %v3582 = vunpack.c.0.s8 %v3581
  %v3583 = vlaneseq
  %v3584 = vshrl.u32 %v3583, 7
  %v3585 = vsub.s32 %v3582, %v3584
  %v3586 = vrot.slane %v3572, %v3585
  %v3588 = vunpack.c.l.s4 1966171168
  %v3589 = vunpack.c.0.s8 %v3588
  %v3590 = vlaneseq
  %v3591 = vshrl.u32 %v3590, 7
  %v3592 = vsub.s32 %v3589, %v3591
  %v3593 = vrot.slane %v3373, %v3592
  %v3594 = vcombine.low %v3579, %v3586
  %v3596 = vunpack.c.l.s4 1966171168
  %v3597 = vunpack.c.0.s8 %v3596
  %v3598 = vlaneseq
  %v3599 = vshrl.u32 %v3598, 7
  %v3600 = vsub.s32 %v3597, %v3599
  %v3601 = vrot.slane %v3594, %v3600
  %v3603 = vunpack.c.l.s4 1966171168
  %v3604 = vunpack.c.0.s8 %v3603
  %v3605 = vlaneseq
  %v3606 = vshrl.u32 %v3605, 7
  %v3607 = vsub.s32 %v3604, %v3606
  %v3608 = vrot.slane %v3593, %v3607
  %v3609 = vcombine.low %v3601, %v3608
  %s3616 = scalar_lea.vmem %s3, 48
  %3617 = vst.msk [vmem:[%s3616] sm:$0x1f] %vm1723, %v3414
  %3618 = vst.msk [vmem:[%s3616 + $0x8] sm:$0x1f] %vm1723, %v3453
  %3619 = vst.msk [vmem:[%s3616 + $0x10] sm:$0x1f] %vm1723, %v3492
  %3620 = vst.msk [vmem:[%s3616 + $0x18] sm:$0x1f] %vm1723, %v3531
  %3621 = vst.msk [vmem:[%s3616 + $0x20] sm:$0x1f] %vm1723, %v3570
  %3622 = vst.msk [vmem:[%s3616 + $0x28] sm:$0x1f] %vm1723, %v3609
  %s3623 = scalar_lea.vmem %s0, 8
  %v3624 = vld [vmem:[%s3623] sm:$0x7]
  %v3625 = vld [vmem:[%s3623 + $0x4] sm:$0x7]
  %v3626 = vld [vmem:[%s3623 + $0x8] sm:$0x7]
  %v3627 = vld [vmem:[%s3623 + $0x14] sm:$0x7]
  %v3628 = vld [vmem:[%s3623 + $0x18] sm:$0x7]
  %v3629 = vld [vmem:[%s3623 + $0x1c] sm:$0x7]
  %v3637 = vunpack.c.l.s4 1966171168
  %v3638 = vunpack.c.0.s8 %v3637
  %v3639 = vlaneseq
  %v3640 = vshrl.u32 %v3639, 7
  %v3641 = vsub.s32 %v3638, %v3640
  %v3642 = vrot.slane %v3624, %v3641
  %v3643 = vcombine.high %v3642, %v3642
  %v3645 = vunpack.c.l.s4 1966171168
  %v3646 = vunpack.c.0.s8 %v3645
  %v3647 = vlaneseq
  %v3648 = vshrl.u32 %v3647, 7
  %v3649 = vsub.s32 %v3646, %v3648
  %v3650 = vrot.slane %v3642, %v3649
  %v3652 = vunpack.c.l.s4 1966171168
  %v3653 = vunpack.c.0.s8 %v3652
  %v3654 = vlaneseq
  %v3655 = vshrl.u32 %v3654, 7
  %v3656 = vsub.s32 %v3653, %v3655
  %v3657 = vrot.slane %v3643, %v3656
  %v3658 = vcombine.high %v3650, %v3650
  %v3660 = vunpack.c.l.s4 1966171168
  %v3661 = vunpack.c.0.s8 %v3660
  %v3662 = vlaneseq
  %v3663 = vshrl.u32 %v3662, 7
  %v3664 = vsub.s32 %v3661, %v3663
  %v3665 = vrot.slane %v3625, %v3664
  %v3666 = vcombine.high %v3665, %v3665
  %v3668 = vunpack.c.l.s4 1966171168
  %v3669 = vunpack.c.0.s8 %v3668
  %v3670 = vlaneseq
  %v3671 = vshrl.u32 %v3670, 7
  %v3672 = vsub.s32 %v3669, %v3671
  %v3673 = vrot.slane %v3665, %v3672
  %v3675 = vunpack.c.l.s4 1966171168
  %v3676 = vunpack.c.0.s8 %v3675
  %v3677 = vlaneseq
  %v3678 = vshrl.u32 %v3677, 7
  %v3679 = vsub.s32 %v3676, %v3678
  %v3680 = vrot.slane %v3666, %v3679
  %v3681 = vcombine.high %v3673, %v3673
  %v3683 = vunpack.c.l.s4 1966171168
  %v3684 = vunpack.c.0.s8 %v3683
  %v3685 = vlaneseq
  %v3686 = vshrl.u32 %v3685, 7
  %v3687 = vsub.s32 %v3684, %v3686
  %v3688 = vrot.slane %v3626, %v3687
  %v3689 = vcombine.high %v3688, %v3688
  %v3691 = vunpack.c.l.s4 1966171168
  %v3692 = vunpack.c.0.s8 %v3691
  %v3693 = vlaneseq
  %v3694 = vshrl.u32 %v3693, 7
  %v3695 = vsub.s32 %v3692, %v3694
  %v3696 = vrot.slane %v3688, %v3695
  %v3698 = vunpack.c.l.s4 1966171168
  %v3699 = vunpack.c.0.s8 %v3698
  %v3700 = vlaneseq
  %v3701 = vshrl.u32 %v3700, 7
  %v3702 = vsub.s32 %v3699, %v3701
  %v3703 = vrot.slane %v3689, %v3702
  %v3704 = vcombine.high %v3696, %v3696
  %v3706 = vunpack.c.l.s4 1966171168
  %v3707 = vunpack.c.0.s8 %v3706
  %v3708 = vlaneseq
  %v3709 = vshrl.u32 %v3708, 7
  %v3710 = vsub.s32 %v3707, %v3709
  %v3711 = vrot.slane %v3627, %v3710
  %v3712 = vcombine.high %v3711, %v3711
  %v3714 = vunpack.c.l.s4 1966171168
  %v3715 = vunpack.c.0.s8 %v3714
  %v3716 = vlaneseq
  %v3717 = vshrl.u32 %v3716, 7
  %v3718 = vsub.s32 %v3715, %v3717
  %v3719 = vrot.slane %v3711, %v3718
  %v3721 = vunpack.c.l.s4 1966171168
  %v3722 = vunpack.c.0.s8 %v3721
  %v3723 = vlaneseq
  %v3724 = vshrl.u32 %v3723, 7
  %v3725 = vsub.s32 %v3722, %v3724
  %v3726 = vrot.slane %v3712, %v3725
  %v3727 = vcombine.high %v3719, %v3719
  %v3729 = vunpack.c.l.s4 1966171168
  %v3730 = vunpack.c.0.s8 %v3729
  %v3731 = vlaneseq
  %v3732 = vshrl.u32 %v3731, 7
  %v3733 = vsub.s32 %v3730, %v3732
  %v3734 = vrot.slane %v3628, %v3733
  %v3735 = vcombine.high %v3734, %v3734
  %v3737 = vunpack.c.l.s4 1966171168
  %v3738 = vunpack.c.0.s8 %v3737
  %v3739 = vlaneseq
  %v3740 = vshrl.u32 %v3739, 7
  %v3741 = vsub.s32 %v3738, %v3740
  %v3742 = vrot.slane %v3734, %v3741
  %v3744 = vunpack.c.l.s4 1966171168
  %v3745 = vunpack.c.0.s8 %v3744
  %v3746 = vlaneseq
  %v3747 = vshrl.u32 %v3746, 7
  %v3748 = vsub.s32 %v3745, %v3747
  %v3749 = vrot.slane %v3735, %v3748
  %v3750 = vcombine.high %v3742, %v3742
  %v3752 = vunpack.c.l.s4 1966171168
  %v3753 = vunpack.c.0.s8 %v3752
  %v3754 = vlaneseq
  %v3755 = vshrl.u32 %v3754, 7
  %v3756 = vsub.s32 %v3753, %v3755
  %v3757 = vrot.slane %v3629, %v3756
  %v3758 = vcombine.high %v3757, %v3757
  %v3760 = vunpack.c.l.s4 1966171168
  %v3761 = vunpack.c.0.s8 %v3760
  %v3762 = vlaneseq
  %v3763 = vshrl.u32 %v3762, 7
  %v3764 = vsub.s32 %v3761, %v3763
  %v3765 = vrot.slane %v3757, %v3764
  %v3767 = vunpack.c.l.s4 1966171168
  %v3768 = vunpack.c.0.s8 %v3767
  %v3769 = vlaneseq
  %v3770 = vshrl.u32 %v3769, 7
  %v3771 = vsub.s32 %v3768, %v3770
  %v3772 = vrot.slane %v3758, %v3771
  %v3773 = vcombine.high %v3765, %v3765
  %v3774 = vunpack.i.h.s16 %v3650
  %v3775 = vunpack.i.l.s16 %v3657
  %v3776 = vunpack.i.h.s16 %v3657
  %v3777 = vunpack.i.l.s16 %v3658
  %v3778 = vunpack.i.h.s16 %v3658
  %v3779 = vunpack.i.h.s16 %v3673
  %v3780 = vunpack.i.l.s16 %v3680
  %v3781 = vunpack.i.h.s16 %v3680
  %v3782 = vunpack.i.l.s16 %v3681
  %v3783 = vunpack.i.h.s16 %v3681
  %v3784 = vunpack.i.h.s16 %v3696
  %v3785 = vunpack.i.l.s16 %v3703
  %v3786 = vunpack.i.h.s16 %v3703
  %v3787 = vunpack.i.l.s16 %v3704
  %v3788 = vunpack.i.h.s16 %v3704
  %v3789 = vunpack.i.h.s16 %v3719
  %v3790 = vunpack.i.l.s16 %v3726
  %v3791 = vunpack.i.h.s16 %v3726
  %v3792 = vunpack.i.l.s16 %v3727
  %v3793 = vunpack.i.h.s16 %v3727
  %v3794 = vunpack.i.h.s16 %v3742
  %v3795 = vunpack.i.l.s16 %v3749
  %v3796 = vunpack.i.h.s16 %v3749
  %v3797 = vunpack.i.l.s16 %v3750
  %v3798 = vunpack.i.h.s16 %v3750
  %v3799 = vunpack.i.h.s16 %v3765
  %v3800 = vunpack.i.l.s16 %v3772
  %v3801 = vunpack.i.h.s16 %v3772
  %v3802 = vunpack.i.l.s16 %v3773
  %v3803 = vunpack.i.h.s16 %v3773
  %s3804 = scalar_lea.vmem %s1, 64
  %v3805 = vld [vmem:[%s3804] sm:$0xf]
  %v3806 = vld [vmem:[%s3804 + $0x4] sm:$0xf]
  %v3807 = vunpack.i.l.s16 %v3650
  %v3808 = vunpack.i.l.s16 %v3673
  %v3809 = vunpack.i.l.s16 %v3696
  %v3810 = vunpack.i.l.s16 %v3719
  %v3811 = vunpack.i.l.s16 %v3742
  %v3812 = vunpack.i.l.s16 %v3765
  %s3813 = scalar_lea.vmem %s1, 72
  %v3814 = vld [vmem:[%s3813] sm:$0xf]
  %v3815 = vld [vmem:[%s3813 + $0x4] sm:$0xf]
  %v3816 = vpack.i.b16 %v3774, %v3807
  %v3817 = vpack.i.b16 %v3776, %v3775
  %v3818 = vpack.i.b16 %v3808, %v3777
  %v3819 = vpack.i.b16 %v3780, %v3779
  %v3820 = vpack.i.b16 %v3782, %v3781
  %v3821 = vpack.i.b16 %v3784, %v3809
  %v3822 = vpack.i.b16 %v3786, %v3785
  %v3823 = vpack.i.b16 %v3810, %v3787
  %v3824 = vpack.i.b16 %v3790, %v3789
  %v3825 = vpack.i.b16 %v3792, %v3791
  %v3826 = vpack.i.b16 %v3794, %v3811
  %v3827 = vpack.i.b16 %v3796, %v3795
  %v3828 = vpack.i.b16 %v3812, %v3797
  %v3829 = vpack.i.b16 %v3800, %v3799
  %v3830 = vpack.i.b16 %v3802, %v3801
  %v3831 = vcombine.low %v3816, %v3817
  %v3832 = vcombine.low %v3818, %v3819
  %v3833 = vcombine.low %v3820, %v3821
  %v3834 = vcombine.low %v3822, %v3823
  %v3836 = vunpack.c.l.s4 1966171168
  %v3837 = vunpack.c.0.s8 %v3836
  %v3838 = vlaneseq
  %v3839 = vshrl.u32 %v3838, 7
  %v3840 = vsub.s32 %v3837, %v3839
  %v3841 = vrot.slane %v3831, %v3840
  %v3843 = vunpack.c.l.s4 1966171168
  %v3844 = vunpack.c.0.s8 %v3843
  %v3845 = vlaneseq
  %v3846 = vshrl.u32 %v3845, 7
  %v3847 = vsub.s32 %v3844, %v3846
  %v3848 = vrot.slane %v3832, %v3847
  %v3850 = vunpack.c.l.s4 1966171168
  %v3851 = vunpack.c.0.s8 %v3850
  %v3852 = vlaneseq
  %v3853 = vshrl.u32 %v3852, 7
  %v3854 = vsub.s32 %v3851, %v3853
  %v3855 = vrot.slane %v3833, %v3854
  %v3857 = vunpack.c.l.s4 1966171168
  %v3858 = vunpack.c.0.s8 %v3857
  %v3859 = vlaneseq
  %v3860 = vshrl.u32 %v3859, 7
  %v3861 = vsub.s32 %v3858, %v3860
  %v3862 = vrot.slane %v3834, %v3861
  %v3863 = vcombine.low %v3841, %v3848
  %v3864 = vcombine.low %v3855, %v3862
  %v3866 = vunpack.c.l.s4 1966171168
  %v3867 = vunpack.c.0.s8 %v3866
  %v3868 = vlaneseq
  %v3869 = vshrl.u32 %v3868, 7
  %v3870 = vsub.s32 %v3867, %v3869
  %v3871 = vrot.slane %v3863, %v3870
  %v3873 = vunpack.c.l.s4 1966171168
  %v3874 = vunpack.c.0.s8 %v3873
  %v3875 = vlaneseq
  %v3876 = vshrl.u32 %v3875, 7
  %v3877 = vsub.s32 %v3874, %v3876
  %v3878 = vrot.slane %v3864, %v3877
  %v3879 = vcombine.low %v3871, %v3878
  %v3880 = vcombine.low %v3824, %v3825
  %v3881 = vcombine.low %v3826, %v3827
  %v3882 = vcombine.low %v3828, %v3829
  %v3884 = vunpack.c.l.s4 1966171168
  %v3885 = vunpack.c.0.s8 %v3884
  %v3886 = vlaneseq
  %v3887 = vshrl.u32 %v3886, 7
  %v3888 = vsub.s32 %v3885, %v3887
  %v3889 = vrot.slane %v3880, %v3888
  %v3891 = vunpack.c.l.s4 1966171168
  %v3892 = vunpack.c.0.s8 %v3891
  %v3893 = vlaneseq
  %v3894 = vshrl.u32 %v3893, 7
  %v3895 = vsub.s32 %v3892, %v3894
  %v3896 = vrot.slane %v3881, %v3895
  %v3898 = vunpack.c.l.s4 1966171168
  %v3899 = vunpack.c.0.s8 %v3898
  %v3900 = vlaneseq
  %v3901 = vshrl.u32 %v3900, 7
  %v3902 = vsub.s32 %v3899, %v3901
  %v3903 = vrot.slane %v3882, %v3902
  %v3905 = vunpack.c.l.s4 1966171168
  %v3906 = vunpack.c.0.s8 %v3905
  %v3907 = vlaneseq
  %v3908 = vshrl.u32 %v3907, 7
  %v3909 = vsub.s32 %v3906, %v3908
  %v3910 = vrot.slane %v3830, %v3909
  %v3911 = vcombine.low %v3889, %v3896
  %v3912 = vcombine.low %v3903, %v3910
  %v3914 = vunpack.c.l.s4 1966171168
  %v3915 = vunpack.c.0.s8 %v3914
  %v3916 = vlaneseq
  %v3917 = vshrl.u32 %v3916, 7
  %v3918 = vsub.s32 %v3915, %v3917
  %v3919 = vrot.slane %v3911, %v3918
  %v3921 = vunpack.c.l.s4 1966171168
  %v3922 = vunpack.c.0.s8 %v3921
  %v3923 = vlaneseq
  %v3924 = vshrl.u32 %v3923, 7
  %v3925 = vsub.s32 %v3922, %v3924
  %v3926 = vrot.slane %v3912, %v3925
  %v3927 = vcombine.low %v3919, %v3926
  %v3930 = vunpack.c.l.b16 %v3814
  %v3931 = vunpack.c.l.b16 %v3815
  %v3932 = vpack.c.b16 %v3931, %v3930
  %v3935 = vsel %vm326, %v3879, 0
  %v3938 = vsel %vm326, %v3927, 0
  %3940 = vmatprep.subr.bf16.mxu0 0
  %3941 = vmatpush1.bf16.msra.mxu0 %v3932
  %3942 = vmatprep.subr.bf16.mxu0 0
  %3943 = vmatpush1.bf16.msra.mxu0 0
  %3944 = vmatprep.subr.bf16.mxu0 0
  %3945 = vmatpush1.bf16.msra.mxu0 0
  %3946 = vmatprep.subr.bf16.mxu0 0
  %3947 = vmatpush1.bf16.msra.mxu0 0
  %3948 = vmatprep.subr.bf16.mxu0 0
  %3949 = vmatpush1.bf16.msra.mxu0 0
  %3950 = vmatprep.subr.bf16.mxu0 0
  %3951 = vmatpush1.bf16.msra.mxu0 0
  %3952 = vmatprep.subr.bf16.mxu0 0
  %3953 = vmatpush1.bf16.msra.mxu0 0
  %3954 = vmatprep.subr.bf16.mxu0 0
  %3955 = vmatpush1.bf16.msra.mxu0 0
  %3956 = vmatprep.subr.bf16.mxu0 0
  %3957 = vmatpush1.bf16.msra.mxu0 0
  %3958 = vmatprep.subr.bf16.mxu0 0
  %3959 = vmatpush1.bf16.msra.mxu0 0
  %3960 = vmatprep.subr.bf16.mxu0 0
  %3961 = vmatpush1.bf16.msra.mxu0 0
  %3962 = vmatprep.subr.bf16.mxu0 0
  %3963 = vmatpush1.bf16.msra.mxu0 0
  %3964 = vmatprep.subr.bf16.mxu0 0
  %3965 = vmatpush1.bf16.msra.mxu0 0
  %3966 = vmatprep.subr.bf16.mxu0 0
  %3967 = vmatpush1.bf16.msra.mxu0 0
  %3968 = vmatprep.subr.bf16.mxu0 0
  %3969 = vmatpush1.bf16.msra.mxu0 0
  %3970 = vmatprep.subr.bf16.mxu0 0
  %3971 = vmatpush1.bf16.msra.mxu0 0
  %3972 = vmatprep.mubr.bf16.mxu0 0
  %3973 = vmatmul.mubr.bf16.gmra.mrb[0].mxu0 %v3935
  %v3974 = vpop.f32.mrb[0].mxu0
  %v3975 = vadd.f32 0.0, %v3974
  %v3976 = vpop.f32.mrb[0].mxu0
  %v3977 = vpop.f32.mrb[0].mxu0
  %v3978 = vadd.f32 0.0, %v3977
  %v3979 = vpop.f32.mrb[0].mxu0
  %3980 = vmatprep.mubr.bf16.mxu0 0
  %3981 = vmatmul.mubr.bf16.gmra.mrb[0].mxu0 %v3938
  %v3982 = vpop.f32.mrb[0].mxu0
  %v3983 = vadd.f32 0.0, %v3982
  %v3984 = vpop.f32.mrb[0].mxu0
  %v3985 = vpop.f32.mrb[0].mxu0
  %v3986 = vadd.f32 0.0, %v3985
  %v3987 = vpop.f32.mrb[0].mxu0
  %3988 = vdwg.mxu0
  %v3989 = vpack.i.b16 %v3775, %v3774
  %v3990 = vpack.i.b16 %v3777, %v3776
  %v3991 = vpack.i.b16 %v3779, %v3778
  %v3992 = vpack.i.b16 %v3781, %v3780
  %v3993 = vpack.i.b16 %v3783, %v3782
  %v3994 = vpack.i.b16 %v3785, %v3784
  %v3995 = vpack.i.b16 %v3787, %v3786
  %v3996 = vpack.i.b16 %v3789, %v3788
  %v3997 = vpack.i.b16 %v3791, %v3790
  %v3998 = vpack.i.b16 %v3793, %v3792
  %v3999 = vpack.i.b16 %v3795, %v3794
  %v4000 = vpack.i.b16 %v3797, %v3796
  %v4001 = vpack.i.b16 %v3799, %v3798
  %v4002 = vpack.i.b16 %v3801, %v3800
  %v4003 = vpack.i.b16 %v3803, %v3802
  %v4004 = vcombine.low %v3989, %v3990
  %v4005 = vcombine.low %v3991, %v3992
  %v4006 = vcombine.low %v3993, %v3994
  %v4007 = vcombine.low %v3995, %v3996
  %v4009 = vunpack.c.l.s4 1966171168
  %v4010 = vunpack.c.0.s8 %v4009
  %v4011 = vlaneseq
  %v4012 = vshrl.u32 %v4011, 7
  %v4013 = vsub.s32 %v4010, %v4012
  %v4014 = vrot.slane %v4004, %v4013
  %v4016 = vunpack.c.l.s4 1966171168
  %v4017 = vunpack.c.0.s8 %v4016
  %v4018 = vlaneseq
  %v4019 = vshrl.u32 %v4018, 7
  %v4020 = vsub.s32 %v4017, %v4019
  %v4021 = vrot.slane %v4005, %v4020
  %v4023 = vunpack.c.l.s4 1966171168
  %v4024 = vunpack.c.0.s8 %v4023
  %v4025 = vlaneseq
  %v4026 = vshrl.u32 %v4025, 7
  %v4027 = vsub.s32 %v4024, %v4026
  %v4028 = vrot.slane %v4006, %v4027
  %v4030 = vunpack.c.l.s4 1966171168
  %v4031 = vunpack.c.0.s8 %v4030
  %v4032 = vlaneseq
  %v4033 = vshrl.u32 %v4032, 7
  %v4034 = vsub.s32 %v4031, %v4033
  %v4035 = vrot.slane %v4007, %v4034
  %v4036 = vcombine.low %v4014, %v4021
  %v4037 = vcombine.low %v4028, %v4035
  %v4039 = vunpack.c.l.s4 1966171168
  %v4040 = vunpack.c.0.s8 %v4039
  %v4041 = vlaneseq
  %v4042 = vshrl.u32 %v4041, 7
  %v4043 = vsub.s32 %v4040, %v4042
  %v4044 = vrot.slane %v4036, %v4043
  %v4046 = vunpack.c.l.s4 1966171168
  %v4047 = vunpack.c.0.s8 %v4046
  %v4048 = vlaneseq
  %v4049 = vshrl.u32 %v4048, 7
  %v4050 = vsub.s32 %v4047, %v4049
  %v4051 = vrot.slane %v4037, %v4050
  %v4052 = vcombine.low %v4044, %v4051
  %v4053 = vcombine.low %v3997, %v3998
  %v4054 = vcombine.low %v3999, %v4000
  %v4055 = vcombine.low %v4001, %v4002
  %v4057 = vunpack.c.l.s4 1966171168
  %v4058 = vunpack.c.0.s8 %v4057
  %v4059 = vlaneseq
  %v4060 = vshrl.u32 %v4059, 7
  %v4061 = vsub.s32 %v4058, %v4060
  %v4062 = vrot.slane %v4053, %v4061
  %v4064 = vunpack.c.l.s4 1966171168
  %v4065 = vunpack.c.0.s8 %v4064
  %v4066 = vlaneseq
  %v4067 = vshrl.u32 %v4066, 7
  %v4068 = vsub.s32 %v4065, %v4067
  %v4069 = vrot.slane %v4054, %v4068
  %v4071 = vunpack.c.l.s4 1966171168
  %v4072 = vunpack.c.0.s8 %v4071
  %v4073 = vlaneseq
  %v4074 = vshrl.u32 %v4073, 7
  %v4075 = vsub.s32 %v4072, %v4074
  %v4076 = vrot.slane %v4055, %v4075
  %v4078 = vunpack.c.l.s4 1966171168
  %v4079 = vunpack.c.0.s8 %v4078
  %v4080 = vlaneseq
  %v4081 = vshrl.u32 %v4080, 7
  %v4082 = vsub.s32 %v4079, %v4081
  %v4083 = vrot.slane %v4003, %v4082
  %v4084 = vcombine.low %v4062, %v4069
  %v4085 = vcombine.low %v4076, %v4083
  %v4087 = vunpack.c.l.s4 1966171168
  %v4088 = vunpack.c.0.s8 %v4087
  %v4089 = vlaneseq
  %v4090 = vshrl.u32 %v4089, 7
  %v4091 = vsub.s32 %v4088, %v4090
  %v4092 = vrot.slane %v4084, %v4091
  %v4094 = vunpack.c.l.s4 1966171168
  %v4095 = vunpack.c.0.s8 %v4094
  %v4096 = vlaneseq
  %v4097 = vshrl.u32 %v4096, 7
  %v4098 = vsub.s32 %v4095, %v4097
  %v4099 = vrot.slane %v4085, %v4098
  %v4100 = vcombine.low %v4092, %v4099
  %v4103 = vunpack.c.l.b16 %v3805
  %v4104 = vunpack.c.l.b16 %v3806
  %v4105 = vpack.c.b16 %v4104, %v4103
  %v4108 = vsel %vm326, %v4052, 0
  %v4111 = vsel %vm326, %v4100, 0
  %4113 = vmatprep.subr.bf16.mxu0 0
  %4114 = vmatpush1.bf16.msra.mxu0 %v4105
  %4115 = vmatprep.subr.bf16.mxu0 0
  %4116 = vmatpush1.bf16.msra.mxu0 0
  %4117 = vmatprep.subr.bf16.mxu0 0
  %4118 = vmatpush1.bf16.msra.mxu0 0
  %4119 = vmatprep.subr.bf16.mxu0 0
  %4120 = vmatpush1.bf16.msra.mxu0 0
  %4121 = vmatprep.subr.bf16.mxu0 0
  %4122 = vmatpush1.bf16.msra.mxu0 0
  %4123 = vmatprep.subr.bf16.mxu0 0
  %4124 = vmatpush1.bf16.msra.mxu0 0
  %4125 = vmatprep.subr.bf16.mxu0 0
  %4126 = vmatpush1.bf16.msra.mxu0 0
  %4127 = vmatprep.subr.bf16.mxu0 0
  %4128 = vmatpush1.bf16.msra.mxu0 0
  %4129 = vmatprep.subr.bf16.mxu0 0
  %4130 = vmatpush1.bf16.msra.mxu0 0
  %4131 = vmatprep.subr.bf16.mxu0 0
  %4132 = vmatpush1.bf16.msra.mxu0 0
  %4133 = vmatprep.subr.bf16.mxu0 0
  %4134 = vmatpush1.bf16.msra.mxu0 0
  %4135 = vmatprep.subr.bf16.mxu0 0
  %4136 = vmatpush1.bf16.msra.mxu0 0
  %4137 = vmatprep.subr.bf16.mxu0 0
  %4138 = vmatpush1.bf16.msra.mxu0 0
  %4139 = vmatprep.subr.bf16.mxu0 0
  %4140 = vmatpush1.bf16.msra.mxu0 0
  %4141 = vmatprep.subr.bf16.mxu0 0
  %4142 = vmatpush1.bf16.msra.mxu0 0
  %4143 = vmatprep.subr.bf16.mxu0 0
  %4144 = vmatpush1.bf16.msra.mxu0 0
  %4145 = vmatprep.mubr.bf16.mxu0 0
  %4146 = vmatmul.mubr.bf16.gmra.mrb[0].mxu0 %v4108
  %v4147 = vpop.f32.mrb[0].mxu0
  %v4148 = vadd.f32 %v3975, %v4147
  %v4149 = vpop.f32.mrb[0].mxu0
  %v4150 = vpop.f32.mrb[0].mxu0
  %v4151 = vadd.f32 %v3978, %v4150
  %v4152 = vpop.f32.mrb[0].mxu0
  %4153 = vmatprep.mubr.bf16.mxu0 0
  %4154 = vmatmul.mubr.bf16.gmra.mrb[0].mxu0 %v4111
  %v4155 = vpop.f32.mrb[0].mxu0
  %v4156 = vadd.f32 %v3983, %v4155
  %v4157 = vpop.f32.mrb[0].mxu0
  %v4158 = vpop.f32.mrb[0].mxu0
  %v4159 = vadd.f32 %v3986, %v4158
  %v4160 = vpop.f32.mrb[0].mxu0
  %4161 = vdwg.mxu0
  %v4162 = vld [vmem:[%s16] sm:$0x7]
  %v4163 = vld [vmem:[%s16 + $0x4] sm:$0x7]
  %v4164 = vld [vmem:[%s16 + $0x8] sm:$0x7]
  %v4165 = vld [vmem:[%s16 + $0x14] sm:$0x7]
  %v4166 = vld [vmem:[%s16 + $0x18] sm:$0x7]
  %v4167 = vld [vmem:[%s16 + $0x1c] sm:$0x7]
  %v4175 = vunpack.c.l.s4 1966171168
  %v4176 = vunpack.c.0.s8 %v4175
  %v4177 = vlaneseq
  %v4178 = vshrl.u32 %v4177, 7
  %v4179 = vsub.s32 %v4176, %v4178
  %v4180 = vrot.slane %v4162, %v4179
  %v4181 = vcombine.high %v4180, %v4180
  %v4183 = vunpack.c.l.s4 1966171168
  %v4184 = vunpack.c.0.s8 %v4183
  %v4185 = vlaneseq
  %v4186 = vshrl.u32 %v4185, 7
  %v4187 = vsub.s32 %v4184, %v4186
  %v4188 = vrot.slane %v4180, %v4187
  %v4190 = vunpack.c.l.s4 1966171168
  %v4191 = vunpack.c.0.s8 %v4190
  %v4192 = vlaneseq
  %v4193 = vshrl.u32 %v4192, 7
  %v4194 = vsub.s32 %v4191, %v4193
  %v4195 = vrot.slane %v4181, %v4194
  %v4196 = vcombine.high %v4188, %v4188
  %v4198 = vunpack.c.l.s4 1966171168
  %v4199 = vunpack.c.0.s8 %v4198
  %v4200 = vlaneseq
  %v4201 = vshrl.u32 %v4200, 7
  %v4202 = vsub.s32 %v4199, %v4201
  %v4203 = vrot.slane %v4163, %v4202
  %v4204 = vcombine.high %v4203, %v4203
  %v4206 = vunpack.c.l.s4 1966171168
  %v4207 = vunpack.c.0.s8 %v4206
  %v4208 = vlaneseq
  %v4209 = vshrl.u32 %v4208, 7
  %v4210 = vsub.s32 %v4207, %v4209
  %v4211 = vrot.slane %v4203, %v4210
  %v4213 = vunpack.c.l.s4 1966171168
  %v4214 = vunpack.c.0.s8 %v4213
  %v4215 = vlaneseq
  %v4216 = vshrl.u32 %v4215, 7
  %v4217 = vsub.s32 %v4214, %v4216
  %v4218 = vrot.slane %v4204, %v4217
  %v4219 = vcombine.high %v4211, %v4211
  %v4221 = vunpack.c.l.s4 1966171168
  %v4222 = vunpack.c.0.s8 %v4221
  %v4223 = vlaneseq
  %v4224 = vshrl.u32 %v4223, 7
  %v4225 = vsub.s32 %v4222, %v4224
  %v4226 = vrot.slane %v4164, %v4225
  %v4227 = vcombine.high %v4226, %v4226
  %v4229 = vunpack.c.l.s4 1966171168
  %v4230 = vunpack.c.0.s8 %v4229
  %v4231 = vlaneseq
  %v4232 = vshrl.u32 %v4231, 7
  %v4233 = vsub.s32 %v4230, %v4232
  %v4234 = vrot.slane %v4226, %v4233
  %v4236 = vunpack.c.l.s4 1966171168
  %v4237 = vunpack.c.0.s8 %v4236
  %v4238 = vlaneseq
  %v4239 = vshrl.u32 %v4238, 7
  %v4240 = vsub.s32 %v4237, %v4239
  %v4241 = vrot.slane %v4227, %v4240
  %v4242 = vcombine.high %v4234, %v4234
  %v4244 = vunpack.c.l.s4 1966171168
  %v4245 = vunpack.c.0.s8 %v4244
  %v4246 = vlaneseq
  %v4247 = vshrl.u32 %v4246, 7
  %v4248 = vsub.s32 %v4245, %v4247
  %v4249 = vrot.slane %v4165, %v4248
  %v4250 = vcombine.high %v4249, %v4249
  %v4252 = vunpack.c.l.s4 1966171168
  %v4253 = vunpack.c.0.s8 %v4252
  %v4254 = vlaneseq
  %v4255 = vshrl.u32 %v4254, 7
  %v4256 = vsub.s32 %v4253, %v4255
  %v4257 = vrot.slane %v4249, %v4256
  %v4259 = vunpack.c.l.s4 1966171168
  %v4260 = vunpack.c.0.s8 %v4259
  %v4261 = vlaneseq
  %v4262 = vshrl.u32 %v4261, 7
  %v4263 = vsub.s32 %v4260, %v4262
  %v4264 = vrot.slane %v4250, %v4263
  %v4265 = vcombine.high %v4257, %v4257
  %v4267 = vunpack.c.l.s4 1966171168
  %v4268 = vunpack.c.0.s8 %v4267
  %v4269 = vlaneseq
  %v4270 = vshrl.u32 %v4269, 7
  %v4271 = vsub.s32 %v4268, %v4270
  %v4272 = vrot.slane %v4166, %v4271
  %v4273 = vcombine.high %v4272, %v4272
  %v4275 = vunpack.c.l.s4 1966171168
  %v4276 = vunpack.c.0.s8 %v4275
  %v4277 = vlaneseq
  %v4278 = vshrl.u32 %v4277, 7
  %v4279 = vsub.s32 %v4276, %v4278
  %v4280 = vrot.slane %v4272, %v4279
  %v4282 = vunpack.c.l.s4 1966171168
  %v4283 = vunpack.c.0.s8 %v4282
  %v4284 = vlaneseq
  %v4285 = vshrl.u32 %v4284, 7
  %v4286 = vsub.s32 %v4283, %v4285
  %v4287 = vrot.slane %v4273, %v4286
  %v4288 = vcombine.high %v4280, %v4280
  %v4290 = vunpack.c.l.s4 1966171168
  %v4291 = vunpack.c.0.s8 %v4290
  %v4292 = vlaneseq
  %v4293 = vshrl.u32 %v4292, 7
  %v4294 = vsub.s32 %v4291, %v4293
  %v4295 = vrot.slane %v4167, %v4294
  %v4296 = vcombine.high %v4295, %v4295
  %v4298 = vunpack.c.l.s4 1966171168
  %v4299 = vunpack.c.0.s8 %v4298
  %v4300 = vlaneseq
  %v4301 = vshrl.u32 %v4300, 7
  %v4302 = vsub.s32 %v4299, %v4301
  %v4303 = vrot.slane %v4295, %v4302
  %v4305 = vunpack.c.l.s4 1966171168
  %v4306 = vunpack.c.0.s8 %v4305
  %v4307 = vlaneseq
  %v4308 = vshrl.u32 %v4307, 7
  %v4309 = vsub.s32 %v4306, %v4308
  %v4310 = vrot.slane %v4296, %v4309
  %v4311 = vcombine.high %v4303, %v4303
  %v4312 = vunpack.i.h.s16 %v4188
  %v4313 = vunpack.i.l.s16 %v4195
  %v4314 = vunpack.i.h.s16 %v4195
  %v4315 = vunpack.i.l.s16 %v4196
  %v4316 = vunpack.i.h.s16 %v4196
  %v4317 = vunpack.i.h.s16 %v4211
  %v4318 = vunpack.i.l.s16 %v4218
  %v4319 = vunpack.i.h.s16 %v4218
  %v4320 = vunpack.i.l.s16 %v4219
  %v4321 = vunpack.i.h.s16 %v4219
  %v4322 = vunpack.i.h.s16 %v4234
  %v4323 = vunpack.i.l.s16 %v4241
  %v4324 = vunpack.i.h.s16 %v4241
  %v4325 = vunpack.i.l.s16 %v4242
  %v4326 = vunpack.i.h.s16 %v4242
  %v4327 = vunpack.i.h.s16 %v4257
  %v4328 = vunpack.i.l.s16 %v4264
  %v4329 = vunpack.i.h.s16 %v4264
  %v4330 = vunpack.i.l.s16 %v4265
  %v4331 = vunpack.i.h.s16 %v4265
  %v4332 = vunpack.i.h.s16 %v4280
  %v4333 = vunpack.i.l.s16 %v4287
  %v4334 = vunpack.i.h.s16 %v4287
  %v4335 = vunpack.i.l.s16 %v4288
  %v4336 = vunpack.i.h.s16 %v4288
  %v4337 = vunpack.i.h.s16 %v4303
  %v4338 = vunpack.i.l.s16 %v4310
  %v4339 = vunpack.i.h.s16 %v4310
  %v4340 = vunpack.i.l.s16 %v4311
  %v4341 = vunpack.i.h.s16 %v4311
  %s4342 = scalar_lea.vmem %s1, 80
  %v4343 = vld [vmem:[%s4342] sm:$0xf]
  %v4344 = vld [vmem:[%s4342 + $0x4] sm:$0xf]
  %v4345 = vpack.i.b16 %v4313, %v4312
  %v4346 = vpack.i.b16 %v4315, %v4314
  %v4347 = vpack.i.b16 %v4317, %v4316
  %v4348 = vpack.i.b16 %v4319, %v4318
  %v4349 = vpack.i.b16 %v4321, %v4320
  %v4350 = vpack.i.b16 %v4323, %v4322
  %v4351 = vpack.i.b16 %v4325, %v4324
  %v4352 = vpack.i.b16 %v4327, %v4326
  %v4353 = vpack.i.b16 %v4329, %v4328
  %v4354 = vpack.i.b16 %v4331, %v4330
  %v4355 = vpack.i.b16 %v4333, %v4332
  %v4356 = vpack.i.b16 %v4335, %v4334
  %v4357 = vpack.i.b16 %v4337, %v4336
  %v4358 = vpack.i.b16 %v4339, %v4338
  %v4359 = vpack.i.b16 %v4341, %v4340
  %v4360 = vcombine.low %v4345, %v4346
  %v4361 = vcombine.low %v4347, %v4348
  %v4362 = vcombine.low %v4349, %v4350
  %v4363 = vcombine.low %v4351, %v4352
  %v4365 = vunpack.c.l.s4 1966171168
  %v4366 = vunpack.c.0.s8 %v4365
  %v4367 = vlaneseq
  %v4368 = vshrl.u32 %v4367, 7
  %v4369 = vsub.s32 %v4366, %v4368
  %v4370 = vrot.slane %v4360, %v4369
  %v4372 = vunpack.c.l.s4 1966171168
  %v4373 = vunpack.c.0.s8 %v4372
  %v4374 = vlaneseq
  %v4375 = vshrl.u32 %v4374, 7
  %v4376 = vsub.s32 %v4373, %v4375
  %v4377 = vrot.slane %v4361, %v4376
  %v4379 = vunpack.c.l.s4 1966171168
  %v4380 = vunpack.c.0.s8 %v4379
  %v4381 = vlaneseq
  %v4382 = vshrl.u32 %v4381, 7
  %v4383 = vsub.s32 %v4380, %v4382
  %v4384 = vrot.slane %v4362, %v4383
  %v4386 = vunpack.c.l.s4 1966171168
  %v4387 = vunpack.c.0.s8 %v4386
  %v4388 = vlaneseq
  %v4389 = vshrl.u32 %v4388, 7
  %v4390 = vsub.s32 %v4387, %v4389
  %v4391 = vrot.slane %v4363, %v4390
  %v4392 = vcombine.low %v4370, %v4377
  %v4393 = vcombine.low %v4384, %v4391
  %v4395 = vunpack.c.l.s4 1966171168
  %v4396 = vunpack.c.0.s8 %v4395
  %v4397 = vlaneseq
  %v4398 = vshrl.u32 %v4397, 7
  %v4399 = vsub.s32 %v4396, %v4398
  %v4400 = vrot.slane %v4392, %v4399
  %v4402 = vunpack.c.l.s4 1966171168
  %v4403 = vunpack.c.0.s8 %v4402
  %v4404 = vlaneseq
  %v4405 = vshrl.u32 %v4404, 7
  %v4406 = vsub.s32 %v4403, %v4405
  %v4407 = vrot.slane %v4393, %v4406
  %v4408 = vcombine.low %v4400, %v4407
  %v4409 = vcombine.low %v4353, %v4354
  %v4410 = vcombine.low %v4355, %v4356
  %v4411 = vcombine.low %v4357, %v4358
  %v4413 = vunpack.c.l.s4 1966171168
  %v4414 = vunpack.c.0.s8 %v4413
  %v4415 = vlaneseq
  %v4416 = vshrl.u32 %v4415, 7
  %v4417 = vsub.s32 %v4414, %v4416
  %v4418 = vrot.slane %v4409, %v4417
  %v4420 = vunpack.c.l.s4 1966171168
  %v4421 = vunpack.c.0.s8 %v4420
  %v4422 = vlaneseq
  %v4423 = vshrl.u32 %v4422, 7
  %v4424 = vsub.s32 %v4421, %v4423
  %v4425 = vrot.slane %v4410, %v4424
  %v4427 = vunpack.c.l.s4 1966171168
  %v4428 = vunpack.c.0.s8 %v4427
  %v4429 = vlaneseq
  %v4430 = vshrl.u32 %v4429, 7
  %v4431 = vsub.s32 %v4428, %v4430
  %v4432 = vrot.slane %v4411, %v4431
  %v4434 = vunpack.c.l.s4 1966171168
  %v4435 = vunpack.c.0.s8 %v4434
  %v4436 = vlaneseq
  %v4437 = vshrl.u32 %v4436, 7
  %v4438 = vsub.s32 %v4435, %v4437
  %v4439 = vrot.slane %v4359, %v4438
  %v4440 = vcombine.low %v4418, %v4425
  %v4441 = vcombine.low %v4432, %v4439
  %v4443 = vunpack.c.l.s4 1966171168
  %v4444 = vunpack.c.0.s8 %v4443
  %v4445 = vlaneseq
  %v4446 = vshrl.u32 %v4445, 7
  %v4447 = vsub.s32 %v4444, %v4446
  %v4448 = vrot.slane %v4440, %v4447
  %v4450 = vunpack.c.l.s4 1966171168
  %v4451 = vunpack.c.0.s8 %v4450
  %v4452 = vlaneseq
  %v4453 = vshrl.u32 %v4452, 7
  %v4454 = vsub.s32 %v4451, %v4453
  %v4455 = vrot.slane %v4441, %v4454
  %v4456 = vcombine.low %v4448, %v4455
  %v4459 = vunpack.c.l.b16 %v4343
  %v4460 = vunpack.c.l.b16 %v4344
  %v4461 = vpack.c.b16 %v4460, %v4459
  %v4464 = vsel %vm326, %v4408, 0
  %v4467 = vsel %vm326, %v4456, 0
  %4469 = vmatprep.subr.bf16.mxu0 0
  %4470 = vmatpush1.bf16.msra.mxu0 %v4461
  %4471 = vmatprep.subr.bf16.mxu0 0
  %4472 = vmatpush1.bf16.msra.mxu0 0
  %4473 = vmatprep.subr.bf16.mxu0 0
  %4474 = vmatpush1.bf16.msra.mxu0 0
  %4475 = vmatprep.subr.bf16.mxu0 0
  %4476 = vmatpush1.bf16.msra.mxu0 0
  %4477 = vmatprep.subr.bf16.mxu0 0
  %4478 = vmatpush1.bf16.msra.mxu0 0
  %4479 = vmatprep.subr.bf16.mxu0 0
  %4480 = vmatpush1.bf16.msra.mxu0 0
  %4481 = vmatprep.subr.bf16.mxu0 0
  %4482 = vmatpush1.bf16.msra.mxu0 0
  %4483 = vmatprep.subr.bf16.mxu0 0
  %4484 = vmatpush1.bf16.msra.mxu0 0
  %4485 = vmatprep.subr.bf16.mxu0 0
  %4486 = vmatpush1.bf16.msra.mxu0 0
  %4487 = vmatprep.subr.bf16.mxu0 0
  %4488 = vmatpush1.bf16.msra.mxu0 0
  %4489 = vmatprep.subr.bf16.mxu0 0
  %4490 = vmatpush1.bf16.msra.mxu0 0
  %4491 = vmatprep.subr.bf16.mxu0 0
  %4492 = vmatpush1.bf16.msra.mxu0 0
  %4493 = vmatprep.subr.bf16.mxu0 0
  %4494 = vmatpush1.bf16.msra.mxu0 0
  %4495 = vmatprep.subr.bf16.mxu0 0
  %4496 = vmatpush1.bf16.msra.mxu0 0
  %4497 = vmatprep.subr.bf16.mxu0 0
  %4498 = vmatpush1.bf16.msra.mxu0 0
  %4499 = vmatprep.subr.bf16.mxu0 0
  %4500 = vmatpush1.bf16.msra.mxu0 0
  %4501 = vmatprep.mubr.bf16.mxu0 0
  %4502 = vmatmul.mubr.bf16.gmra.mrb[0].mxu0 %v4464
  %v4503 = vpop.f32.mrb[0].mxu0
  %v4504 = vadd.f32 0.0, %v4503
  %v4505 = vpop.f32.mrb[0].mxu0
  %v4506 = vpop.f32.mrb[0].mxu0
  %v4507 = vadd.f32 0.0, %v4506
  %v4508 = vpop.f32.mrb[0].mxu0
  %4509 = vmatprep.mubr.bf16.mxu0 0
  %4510 = vmatmul.mubr.bf16.gmra.mrb[0].mxu0 %v4467
  %v4511 = vpop.f32.mrb[0].mxu0
  %v4512 = vadd.f32 0.0, %v4511
  %v4513 = vpop.f32.mrb[0].mxu0
  %v4514 = vpop.f32.mrb[0].mxu0
  %v4515 = vadd.f32 0.0, %v4514
  %v4516 = vpop.f32.mrb[0].mxu0
  %4517 = vdwg.mxu0
  %v4518 = vadd.f32 %v4148, %v4504
  %v4519 = vadd.f32 %v4151, %v4507
  %v4520 = vadd.f32 %v4156, %v4512
  %v4521 = vadd.f32 %v4159, %v4515
  %v4522 = vld [vmem:[%s16] sm:$0x7]
  %v4523 = vld [vmem:[%s16 + $0x4] sm:$0x7]
  %v4524 = vld [vmem:[%s16 + $0x8] sm:$0x7]
  %v4525 = vld [vmem:[%s16 + $0x14] sm:$0x7]
  %v4526 = vld [vmem:[%s16 + $0x18] sm:$0x7]
  %v4527 = vld [vmem:[%s16 + $0x1c] sm:$0x7]
  %v4535 = vunpack.c.l.s4 1966171168
  %v4536 = vunpack.c.0.s8 %v4535
  %v4537 = vlaneseq
  %v4538 = vshrl.u32 %v4537, 7
  %v4539 = vsub.s32 %v4536, %v4538
  %v4540 = vrot.slane %v4522, %v4539
  %v4541 = vcombine.high %v4540, %v4540
  %v4543 = vunpack.c.l.s4 1966171168
  %v4544 = vunpack.c.0.s8 %v4543
  %v4545 = vlaneseq
  %v4546 = vshrl.u32 %v4545, 7
  %v4547 = vsub.s32 %v4544, %v4546
  %v4548 = vrot.slane %v4540, %v4547
  %v4550 = vunpack.c.l.s4 1966171168
  %v4551 = vunpack.c.0.s8 %v4550
  %v4552 = vlaneseq
  %v4553 = vshrl.u32 %v4552, 7
  %v4554 = vsub.s32 %v4551, %v4553
  %v4555 = vrot.slane %v4541, %v4554
  %v4556 = vcombine.high %v4548, %v4548
  %v4558 = vunpack.c.l.s4 1966171168
  %v4559 = vunpack.c.0.s8 %v4558
  %v4560 = vlaneseq
  %v4561 = vshrl.u32 %v4560, 7
  %v4562 = vsub.s32 %v4559, %v4561
  %v4563 = vrot.slane %v4523, %v4562
  %v4564 = vcombine.high %v4563, %v4563
  %v4566 = vunpack.c.l.s4 1966171168
  %v4567 = vunpack.c.0.s8 %v4566
  %v4568 = vlaneseq
  %v4569 = vshrl.u32 %v4568, 7
  %v4570 = vsub.s32 %v4567, %v4569
  %v4571 = vrot.slane %v4563, %v4570
  %v4573 = vunpack.c.l.s4 1966171168
  %v4574 = vunpack.c.0.s8 %v4573
  %v4575 = vlaneseq
  %v4576 = vshrl.u32 %v4575, 7
  %v4577 = vsub.s32 %v4574, %v4576
  %v4578 = vrot.slane %v4564, %v4577
  %v4579 = vcombine.high %v4571, %v4571
  %v4581 = vunpack.c.l.s4 1966171168
  %v4582 = vunpack.c.0.s8 %v4581
  %v4583 = vlaneseq
  %v4584 = vshrl.u32 %v4583, 7
  %v4585 = vsub.s32 %v4582, %v4584
  %v4586 = vrot.slane %v4524, %v4585
  %v4587 = vcombine.high %v4586, %v4586
  %v4589 = vunpack.c.l.s4 1966171168
  %v4590 = vunpack.c.0.s8 %v4589
  %v4591 = vlaneseq
  %v4592 = vshrl.u32 %v4591, 7
  %v4593 = vsub.s32 %v4590, %v4592
  %v4594 = vrot.slane %v4586, %v4593
  %v4596 = vunpack.c.l.s4 1966171168
  %v4597 = vunpack.c.0.s8 %v4596
  %v4598 = vlaneseq
  %v4599 = vshrl.u32 %v4598, 7
  %v4600 = vsub.s32 %v4597, %v4599
  %v4601 = vrot.slane %v4587, %v4600
  %v4602 = vcombine.high %v4594, %v4594
  %v4604 = vunpack.c.l.s4 1966171168
  %v4605 = vunpack.c.0.s8 %v4604
  %v4606 = vlaneseq
  %v4607 = vshrl.u32 %v4606, 7
  %v4608 = vsub.s32 %v4605, %v4607
  %v4609 = vrot.slane %v4525, %v4608
  %v4610 = vcombine.high %v4609, %v4609
  %v4612 = vunpack.c.l.s4 1966171168
  %v4613 = vunpack.c.0.s8 %v4612
  %v4614 = vlaneseq
  %v4615 = vshrl.u32 %v4614, 7
  %v4616 = vsub.s32 %v4613, %v4615
  %v4617 = vrot.slane %v4609, %v4616
  %v4619 = vunpack.c.l.s4 1966171168
  %v4620 = vunpack.c.0.s8 %v4619
  %v4621 = vlaneseq
  %v4622 = vshrl.u32 %v4621, 7
  %v4623 = vsub.s32 %v4620, %v4622
  %v4624 = vrot.slane %v4610, %v4623
  %v4625 = vcombine.high %v4617, %v4617
  %v4627 = vunpack.c.l.s4 1966171168
  %v4628 = vunpack.c.0.s8 %v4627
  %v4629 = vlaneseq
  %v4630 = vshrl.u32 %v4629, 7
  %v4631 = vsub.s32 %v4628, %v4630
  %v4632 = vrot.slane %v4526, %v4631
  %v4633 = vcombine.high %v4632, %v4632
  %v4635 = vunpack.c.l.s4 1966171168
  %v4636 = vunpack.c.0.s8 %v4635
  %v4637 = vlaneseq
  %v4638 = vshrl.u32 %v4637, 7
  %v4639 = vsub.s32 %v4636, %v4638
  %v4640 = vrot.slane %v4632, %v4639
  %v4642 = vunpack.c.l.s4 1966171168
  %v4643 = vunpack.c.0.s8 %v4642
  %v4644 = vlaneseq
  %v4645 = vshrl.u32 %v4644, 7
  %v4646 = vsub.s32 %v4643, %v4645
  %v4647 = vrot.slane %v4633, %v4646
  %v4648 = vcombine.high %v4640, %v4640
  %v4650 = vunpack.c.l.s4 1966171168
  %v4651 = vunpack.c.0.s8 %v4650
  %v4652 = vlaneseq
  %v4653 = vshrl.u32 %v4652, 7
  %v4654 = vsub.s32 %v4651, %v4653
  %v4655 = vrot.slane %v4527, %v4654
  %v4656 = vcombine.high %v4655, %v4655
  %v4658 = vunpack.c.l.s4 1966171168
  %v4659 = vunpack.c.0.s8 %v4658
  %v4660 = vlaneseq
  %v4661 = vshrl.u32 %v4660, 7
  %v4662 = vsub.s32 %v4659, %v4661
  %v4663 = vrot.slane %v4655, %v4662
  %v4665 = vunpack.c.l.s4 1966171168
  %v4666 = vunpack.c.0.s8 %v4665
  %v4667 = vlaneseq
  %v4668 = vshrl.u32 %v4667, 7
  %v4669 = vsub.s32 %v4666, %v4668
  %v4670 = vrot.slane %v4656, %v4669
  %v4671 = vcombine.high %v4663, %v4663
  %v4672 = vunpack.i.l.s16 %v4548
  %v4673 = vunpack.i.h.s16 %v4548
  %v4674 = vunpack.i.l.s16 %v4555
  %v4675 = vunpack.i.h.s16 %v4555
  %v4676 = vunpack.i.l.s16 %v4556
  %v4677 = vunpack.i.l.s16 %v4571
  %v4678 = vunpack.i.h.s16 %v4571
  %v4679 = vunpack.i.l.s16 %v4578
  %v4680 = vunpack.i.h.s16 %v4578
  %v4681 = vunpack.i.l.s16 %v4579
  %v4682 = vunpack.i.l.s16 %v4594
  %v4683 = vunpack.i.h.s16 %v4594
  %v4684 = vunpack.i.l.s16 %v4601
  %v4685 = vunpack.i.h.s16 %v4601
  %v4686 = vunpack.i.l.s16 %v4602
  %v4687 = vunpack.i.l.s16 %v4617
  %v4688 = vunpack.i.h.s16 %v4617
  %v4689 = vunpack.i.l.s16 %v4624
  %v4690 = vunpack.i.h.s16 %v4624
  %v4691 = vunpack.i.l.s16 %v4625
  %v4692 = vunpack.i.l.s16 %v4640
  %v4693 = vunpack.i.h.s16 %v4640
  %v4694 = vunpack.i.l.s16 %v4647
  %v4695 = vunpack.i.h.s16 %v4647
  %v4696 = vunpack.i.l.s16 %v4648
  %v4697 = vunpack.i.l.s16 %v4663
  %v4698 = vunpack.i.h.s16 %v4663
  %v4699 = vunpack.i.l.s16 %v4670
  %v4700 = vunpack.i.h.s16 %v4670
  %v4701 = vunpack.i.l.s16 %v4671
  %s4702 = scalar_lea.vmem %s1, 88
  %v4703 = vld [vmem:[%s4702] sm:$0xf]
  %v4704 = vld [vmem:[%s4702 + $0x4] sm:$0xf]
  %v4705 = vpack.i.b16 %v4673, %v4672
  %v4706 = vpack.i.b16 %v4675, %v4674
  %v4707 = vpack.i.b16 %v4677, %v4676
  %v4708 = vpack.i.b16 %v4679, %v4678
  %v4709 = vpack.i.b16 %v4681, %v4680
  %v4710 = vpack.i.b16 %v4683, %v4682
  %v4711 = vpack.i.b16 %v4685, %v4684
  %v4712 = vpack.i.b16 %v4687, %v4686
  %v4713 = vpack.i.b16 %v4689, %v4688
  %v4714 = vpack.i.b16 %v4691, %v4690
  %v4715 = vpack.i.b16 %v4693, %v4692
  %v4716 = vpack.i.b16 %v4695, %v4694
  %v4717 = vpack.i.b16 %v4697, %v4696
  %v4718 = vpack.i.b16 %v4699, %v4698
  %v4719 = vpack.i.b16 %v4701, %v4700
  %v4720 = vcombine.low %v4705, %v4706
  %v4721 = vcombine.low %v4707, %v4708
  %v4722 = vcombine.low %v4709, %v4710
  %v4723 = vcombine.low %v4711, %v4712
  %v4725 = vunpack.c.l.s4 1966171168
  %v4726 = vunpack.c.0.s8 %v4725
  %v4727 = vlaneseq
  %v4728 = vshrl.u32 %v4727, 7
  %v4729 = vsub.s32 %v4726, %v4728
  %v4730 = vrot.slane %v4720, %v4729
  %v4732 = vunpack.c.l.s4 1966171168
  %v4733 = vunpack.c.0.s8 %v4732
  %v4734 = vlaneseq
  %v4735 = vshrl.u32 %v4734, 7
  %v4736 = vsub.s32 %v4733, %v4735
  %v4737 = vrot.slane %v4721, %v4736
  %v4739 = vunpack.c.l.s4 1966171168
  %v4740 = vunpack.c.0.s8 %v4739
  %v4741 = vlaneseq
  %v4742 = vshrl.u32 %v4741, 7
  %v4743 = vsub.s32 %v4740, %v4742
  %v4744 = vrot.slane %v4722, %v4743
  %v4746 = vunpack.c.l.s4 1966171168
  %v4747 = vunpack.c.0.s8 %v4746
  %v4748 = vlaneseq
  %v4749 = vshrl.u32 %v4748, 7
  %v4750 = vsub.s32 %v4747, %v4749
  %v4751 = vrot.slane %v4723, %v4750
  %v4752 = vcombine.low %v4730, %v4737
  %v4753 = vcombine.low %v4744, %v4751
  %v4755 = vunpack.c.l.s4 1966171168
  %v4756 = vunpack.c.0.s8 %v4755
  %v4757 = vlaneseq
  %v4758 = vshrl.u32 %v4757, 7
  %v4759 = vsub.s32 %v4756, %v4758
  %v4760 = vrot.slane %v4752, %v4759
  %v4762 = vunpack.c.l.s4 1966171168
  %v4763 = vunpack.c.0.s8 %v4762
  %v4764 = vlaneseq
  %v4765 = vshrl.u32 %v4764, 7
  %v4766 = vsub.s32 %v4763, %v4765
  %v4767 = vrot.slane %v4753, %v4766
  %v4768 = vcombine.low %v4760, %v4767
  %v4769 = vcombine.low %v4713, %v4714
  %v4770 = vcombine.low %v4715, %v4716
  %v4771 = vcombine.low %v4717, %v4718
  %v4773 = vunpack.c.l.s4 1966171168
  %v4774 = vunpack.c.0.s8 %v4773
  %v4775 = vlaneseq
  %v4776 = vshrl.u32 %v4775, 7
  %v4777 = vsub.s32 %v4774, %v4776
  %v4778 = vrot.slane %v4769, %v4777
  %v4780 = vunpack.c.l.s4 1966171168
  %v4781 = vunpack.c.0.s8 %v4780
  %v4782 = vlaneseq
  %v4783 = vshrl.u32 %v4782, 7
  %v4784 = vsub.s32 %v4781, %v4783
  %v4785 = vrot.slane %v4770, %v4784
  %v4787 = vunpack.c.l.s4 1966171168
  %v4788 = vunpack.c.0.s8 %v4787
  %v4789 = vlaneseq
  %v4790 = vshrl.u32 %v4789, 7
  %v4791 = vsub.s32 %v4788, %v4790
  %v4792 = vrot.slane %v4771, %v4791
  %v4794 = vunpack.c.l.s4 1966171168
  %v4795 = vunpack.c.0.s8 %v4794
  %v4796 = vlaneseq
  %v4797 = vshrl.u32 %v4796, 7
  %v4798 = vsub.s32 %v4795, %v4797
  %v4799 = vrot.slane %v4719, %v4798
  %v4800 = vcombine.low %v4778, %v4785
  %v4801 = vcombine.low %v4792, %v4799
  %v4803 = vunpack.c.l.s4 1966171168
  %v4804 = vunpack.c.0.s8 %v4803
  %v4805 = vlaneseq
  %v4806 = vshrl.u32 %v4805, 7
  %v4807 = vsub.s32 %v4804, %v4806
  %v4808 = vrot.slane %v4800, %v4807
  %v4810 = vunpack.c.l.s4 1966171168
  %v4811 = vunpack.c.0.s8 %v4810
  %v4812 = vlaneseq
  %v4813 = vshrl.u32 %v4812, 7
  %v4814 = vsub.s32 %v4811, %v4813
  %v4815 = vrot.slane %v4801, %v4814
  %v4816 = vcombine.low %v4808, %v4815
  %v4819 = vunpack.c.l.b16 %v4703
  %v4820 = vunpack.c.l.b16 %v4704
  %v4821 = vpack.c.b16 %v4820, %v4819
  %v4824 = vsel %vm326, %v4768, 0
  %v4827 = vsel %vm326, %v4816, 0
  %4829 = vmatprep.subr.bf16.mxu0 0
  %4830 = vmatpush1.bf16.msra.mxu0 %v4821
  %4831 = vmatprep.subr.bf16.mxu0 0
  %4832 = vmatpush1.bf16.msra.mxu0 0
  %4833 = vmatprep.subr.bf16.mxu0 0
  %4834 = vmatpush1.bf16.msra.mxu0 0
  %4835 = vmatprep.subr.bf16.mxu0 0
  %4836 = vmatpush1.bf16.msra.mxu0 0
  %4837 = vmatprep.subr.bf16.mxu0 0
  %4838 = vmatpush1.bf16.msra.mxu0 0
  %4839 = vmatprep.subr.bf16.mxu0 0
  %4840 = vmatpush1.bf16.msra.mxu0 0
  %4841 = vmatprep.subr.bf16.mxu0 0
  %4842 = vmatpush1.bf16.msra.mxu0 0
  %4843 = vmatprep.subr.bf16.mxu0 0
  %4844 = vmatpush1.bf16.msra.mxu0 0
  %4845 = vmatprep.subr.bf16.mxu0 0
  %4846 = vmatpush1.bf16.msra.mxu0 0
  %4847 = vmatprep.subr.bf16.mxu0 0
  %4848 = vmatpush1.bf16.msra.mxu0 0
  %4849 = vmatprep.subr.bf16.mxu0 0
  %4850 = vmatpush1.bf16.msra.mxu0 0
  %4851 = vmatprep.subr.bf16.mxu0 0
  %4852 = vmatpush1.bf16.msra.mxu0 0
  %4853 = vmatprep.subr.bf16.mxu0 0
  %4854 = vmatpush1.bf16.msra.mxu0 0
  %4855 = vmatprep.subr.bf16.mxu0 0
  %4856 = vmatpush1.bf16.msra.mxu0 0
  %4857 = vmatprep.subr.bf16.mxu0 0
  %4858 = vmatpush1.bf16.msra.mxu0 0
  %4859 = vmatprep.subr.bf16.mxu0 0
  %4860 = vmatpush1.bf16.msra.mxu0 0
  %4861 = vmatprep.mubr.bf16.mxu0 0
  %4862 = vmatmul.mubr.bf16.gmra.mrb[0].mxu0 %v4824
  %v4863 = vpop.f32.mrb[0].mxu0
  %v4864 = vadd.f32 0.0, %v4863
  %v4865 = vpop.f32.mrb[0].mxu0
  %v4866 = vpop.f32.mrb[0].mxu0
  %v4867 = vadd.f32 0.0, %v4866
  %v4868 = vpop.f32.mrb[0].mxu0
  %4869 = vmatprep.mubr.bf16.mxu0 0
  %4870 = vmatmul.mubr.bf16.gmra.mrb[0].mxu0 %v4827
  %v4871 = vpop.f32.mrb[0].mxu0
  %v4872 = vadd.f32 0.0, %v4871
  %v4873 = vpop.f32.mrb[0].mxu0
  %v4874 = vpop.f32.mrb[0].mxu0
  %v4875 = vadd.f32 0.0, %v4874
  %v4876 = vpop.f32.mrb[0].mxu0
  %4877 = vdwg.mxu0
  %v4878 = vadd.f32 %v4518, %v4864
  %v4879 = vadd.f32 %v4519, %v4867
  %v4880 = vadd.f32 %v4520, %v4872
  %v4881 = vadd.f32 %v4521, %v4875
  %v4882 = vadd.f32 %v4878, %v1279
  %v4883 = vadd.f32 %v4879, %v1279
  %v4884 = vadd.f32 %v4880, %v1279
  %v4885 = vadd.f32 %v4881, %v1279
  %v4890 = vcombine.high %v4882, %v4882
  %v4892 = vunpack.c.l.s4 1966171168
  %v4893 = vunpack.c.0.s8 %v4892
  %v4894 = vlaneseq
  %v4895 = vshrl.u32 %v4894, 7
  %v4896 = vsub.s32 %v4893, %v4895
  %v4897 = vrot.slane %v4882, %v4896
  %v4899 = vunpack.c.l.s4 1966171168
  %v4900 = vunpack.c.0.s8 %v4899
  %v4901 = vlaneseq
  %v4902 = vshrl.u32 %v4901, 7
  %v4903 = vsub.s32 %v4900, %v4902
  %v4904 = vrot.slane %v4890, %v4903
  %v4905 = vcombine.high %v4897, %v4897
  %v4906 = vcombine.high %v4904, %v4904
  %v4908 = vunpack.c.l.s4 1966171168
  %v4909 = vunpack.c.0.s8 %v4908
  %v4910 = vlaneseq
  %v4911 = vshrl.u32 %v4910, 7
  %v4912 = vsub.s32 %v4909, %v4911
  %v4913 = vrot.slane %v4897, %v4912
  %v4915 = vunpack.c.l.s4 1966171168
  %v4916 = vunpack.c.0.s8 %v4915
  %v4917 = vlaneseq
  %v4918 = vshrl.u32 %v4917, 7
  %v4919 = vsub.s32 %v4916, %v4918
  %v4920 = vrot.slane %v4904, %v4919
  %v4922 = vunpack.c.l.s4 1966171168
  %v4923 = vunpack.c.0.s8 %v4922
  %v4924 = vlaneseq
  %v4925 = vshrl.u32 %v4924, 7
  %v4926 = vsub.s32 %v4923, %v4925
  %v4927 = vrot.slane %v4905, %v4926
  %v4929 = vunpack.c.l.s4 1966171168
  %v4930 = vunpack.c.0.s8 %v4929
  %v4931 = vlaneseq
  %v4932 = vshrl.u32 %v4931, 7
  %v4933 = vsub.s32 %v4930, %v4932
  %v4934 = vrot.slane %v4906, %v4933
  %v4935 = vcombine.high %v4913, %v4913
  %v4936 = vcombine.high %v4920, %v4920
  %v4937 = vcombine.high %v4927, %v4927
  %v4938 = vcombine.high %v4934, %v4934
  %v4939 = vcombine.high %v4883, %v4883
  %v4941 = vunpack.c.l.s4 1966171168
  %v4942 = vunpack.c.0.s8 %v4941
  %v4943 = vlaneseq
  %v4944 = vshrl.u32 %v4943, 7
  %v4945 = vsub.s32 %v4942, %v4944
  %v4946 = vrot.slane %v4883, %v4945
  %v4948 = vunpack.c.l.s4 1966171168
  %v4949 = vunpack.c.0.s8 %v4948
  %v4950 = vlaneseq
  %v4951 = vshrl.u32 %v4950, 7
  %v4952 = vsub.s32 %v4949, %v4951
  %v4953 = vrot.slane %v4939, %v4952
  %v4954 = vcombine.high %v4946, %v4946
  %v4955 = vcombine.high %v4953, %v4953
  %v4957 = vunpack.c.l.s4 1966171168
  %v4958 = vunpack.c.0.s8 %v4957
  %v4959 = vlaneseq
  %v4960 = vshrl.u32 %v4959, 7
  %v4961 = vsub.s32 %v4958, %v4960
  %v4962 = vrot.slane %v4946, %v4961
  %v4964 = vunpack.c.l.s4 1966171168
  %v4965 = vunpack.c.0.s8 %v4964
  %v4966 = vlaneseq
  %v4967 = vshrl.u32 %v4966, 7
  %v4968 = vsub.s32 %v4965, %v4967
  %v4969 = vrot.slane %v4953, %v4968
  %v4971 = vunpack.c.l.s4 1966171168
  %v4972 = vunpack.c.0.s8 %v4971
  %v4973 = vlaneseq
  %v4974 = vshrl.u32 %v4973, 7
  %v4975 = vsub.s32 %v4972, %v4974
  %v4976 = vrot.slane %v4954, %v4975
  %v4978 = vunpack.c.l.s4 1966171168
  %v4979 = vunpack.c.0.s8 %v4978
  %v4980 = vlaneseq
  %v4981 = vshrl.u32 %v4980, 7
  %v4982 = vsub.s32 %v4979, %v4981
  %v4983 = vrot.slane %v4955, %v4982
  %v4984 = vcombine.high %v4962, %v4962
  %v4985 = vcombine.high %v4969, %v4969
  %v4986 = vcombine.high %v4976, %v4976
  %v4987 = vcombine.high %v4983, %v4983
  %v4988 = vcombine.high %v4884, %v4884
  %v4990 = vunpack.c.l.s4 1966171168
  %v4991 = vunpack.c.0.s8 %v4990
  %v4992 = vlaneseq
  %v4993 = vshrl.u32 %v4992, 7
  %v4994 = vsub.s32 %v4991, %v4993
  %v4995 = vrot.slane %v4884, %v4994
  %v4997 = vunpack.c.l.s4 1966171168
  %v4998 = vunpack.c.0.s8 %v4997
  %v4999 = vlaneseq
  %v5000 = vshrl.u32 %v4999, 7
  %v5001 = vsub.s32 %v4998, %v5000
  %v5002 = vrot.slane %v4988, %v5001
  %v5003 = vcombine.high %v4995, %v4995
  %v5004 = vcombine.high %v5002, %v5002
  %v5006 = vunpack.c.l.s4 1966171168
  %v5007 = vunpack.c.0.s8 %v5006
  %v5008 = vlaneseq
  %v5009 = vshrl.u32 %v5008, 7
  %v5010 = vsub.s32 %v5007, %v5009
  %v5011 = vrot.slane %v4995, %v5010
  %v5013 = vunpack.c.l.s4 1966171168
  %v5014 = vunpack.c.0.s8 %v5013
  %v5015 = vlaneseq
  %v5016 = vshrl.u32 %v5015, 7
  %v5017 = vsub.s32 %v5014, %v5016
  %v5018 = vrot.slane %v5002, %v5017
  %v5020 = vunpack.c.l.s4 1966171168
  %v5021 = vunpack.c.0.s8 %v5020
  %v5022 = vlaneseq
  %v5023 = vshrl.u32 %v5022, 7
  %v5024 = vsub.s32 %v5021, %v5023
  %v5025 = vrot.slane %v5003, %v5024
  %v5027 = vunpack.c.l.s4 1966171168
  %v5028 = vunpack.c.0.s8 %v5027
  %v5029 = vlaneseq
  %v5030 = vshrl.u32 %v5029, 7
  %v5031 = vsub.s32 %v5028, %v5030
  %v5032 = vrot.slane %v5004, %v5031
  %v5033 = vcombine.high %v5011, %v5011
  %v5034 = vcombine.high %v5018, %v5018
  %v5035 = vcombine.high %v5025, %v5025
  %v5036 = vcombine.high %v5032, %v5032
  %v5037 = vcombine.high %v4885, %v4885
  %v5039 = vunpack.c.l.s4 1966171168
  %v5040 = vunpack.c.0.s8 %v5039
  %v5041 = vlaneseq
  %v5042 = vshrl.u32 %v5041, 7
  %v5043 = vsub.s32 %v5040, %v5042
  %v5044 = vrot.slane %v4885, %v5043
  %v5046 = vunpack.c.l.s4 1966171168
  %v5047 = vunpack.c.0.s8 %v5046
  %v5048 = vlaneseq
  %v5049 = vshrl.u32 %v5048, 7
  %v5050 = vsub.s32 %v5047, %v5049
  %v5051 = vrot.slane %v5037, %v5050
  %v5052 = vcombine.high %v5044, %v5044
  %v5053 = vcombine.high %v5051, %v5051
  %v5055 = vunpack.c.l.s4 1966171168
  %v5056 = vunpack.c.0.s8 %v5055
  %v5057 = vlaneseq
  %v5058 = vshrl.u32 %v5057, 7
  %v5059 = vsub.s32 %v5056, %v5058
  %v5060 = vrot.slane %v5044, %v5059
  %v5062 = vunpack.c.l.s4 1966171168
  %v5063 = vunpack.c.0.s8 %v5062
  %v5064 = vlaneseq
  %v5065 = vshrl.u32 %v5064, 7
  %v5066 = vsub.s32 %v5063, %v5065
  %v5067 = vrot.slane %v5051, %v5066
  %v5069 = vunpack.c.l.s4 1966171168
  %v5070 = vunpack.c.0.s8 %v5069
  %v5071 = vlaneseq
  %v5072 = vshrl.u32 %v5071, 7
  %v5073 = vsub.s32 %v5070, %v5072
  %v5074 = vrot.slane %v5052, %v5073
  %v5076 = vunpack.c.l.s4 1966171168
  %v5077 = vunpack.c.0.s8 %v5076
  %v5078 = vlaneseq
  %v5079 = vshrl.u32 %v5078, 7
  %v5080 = vsub.s32 %v5077, %v5079
  %v5081 = vrot.slane %v5053, %v5080
  %v5082 = vcombine.high %v5060, %v5060
  %v5083 = vcombine.high %v5074, %v5074
  %v5084 = vcombine.low %v4913, %v4927
  %v5085 = vcombine.low %v4935, %v4937
  %v5087 = vunpack.c.l.s4 1966171168
  %v5088 = vunpack.c.0.s8 %v5087
  %v5089 = vlaneseq
  %v5090 = vshrl.u32 %v5089, 7
  %v5091 = vsub.s32 %v5088, %v5090
  %v5092 = vrot.slane %v5084, %v5091
  %v5094 = vunpack.c.l.s4 1966171168
  %v5095 = vunpack.c.0.s8 %v5094
  %v5096 = vlaneseq
  %v5097 = vshrl.u32 %v5096, 7
  %v5098 = vsub.s32 %v5095, %v5097
  %v5099 = vrot.slane %v5085, %v5098
  %v5101 = vunpack.c.l.s4 1966171168
  %v5102 = vunpack.c.0.s8 %v5101
  %v5103 = vlaneseq
  %v5104 = vshrl.u32 %v5103, 7
  %v5105 = vsub.s32 %v5102, %v5104
  %v5106 = vrot.slane %v4920, %v5105
  %v5107 = vcombine.low %v5092, %v5099
  %v5109 = vunpack.c.l.s4 1966171168
  %v5110 = vunpack.c.0.s8 %v5109
  %v5111 = vlaneseq
  %v5112 = vshrl.u32 %v5111, 7
  %v5113 = vsub.s32 %v5110, %v5112
  %v5114 = vrot.slane %v5107, %v5113
  %v5116 = vunpack.c.l.s4 1966171168
  %v5117 = vunpack.c.0.s8 %v5116
  %v5118 = vlaneseq
  %v5119 = vshrl.u32 %v5118, 7
  %v5120 = vsub.s32 %v5117, %v5119
  %v5121 = vrot.slane %v5106, %v5120
  %v5122 = vcombine.low %v5114, %v5121
  %v5123 = vcombine.low %v4934, %v4936
  %v5124 = vcombine.low %v4938, %v4962
  %v5126 = vunpack.c.l.s4 1966171168
  %v5127 = vunpack.c.0.s8 %v5126
  %v5128 = vlaneseq
  %v5129 = vshrl.u32 %v5128, 7
  %v5130 = vsub.s32 %v5127, %v5129
  %v5131 = vrot.slane %v5123, %v5130
  %v5133 = vunpack.c.l.s4 1966171168
  %v5134 = vunpack.c.0.s8 %v5133
  %v5135 = vlaneseq
  %v5136 = vshrl.u32 %v5135, 7
  %v5137 = vsub.s32 %v5134, %v5136
  %v5138 = vrot.slane %v5124, %v5137
  %v5140 = vunpack.c.l.s4 1966171168
  %v5141 = vunpack.c.0.s8 %v5140
  %v5142 = vlaneseq
  %v5143 = vshrl.u32 %v5142, 7
  %v5144 = vsub.s32 %v5141, %v5143
  %v5145 = vrot.slane %v4976, %v5144
  %v5146 = vcombine.low %v5131, %v5138
  %v5148 = vunpack.c.l.s4 1966171168
  %v5149 = vunpack.c.0.s8 %v5148
  %v5150 = vlaneseq
  %v5151 = vshrl.u32 %v5150, 7
  %v5152 = vsub.s32 %v5149, %v5151
  %v5153 = vrot.slane %v5146, %v5152
  %v5155 = vunpack.c.l.s4 1966171168
  %v5156 = vunpack.c.0.s8 %v5155
  %v5157 = vlaneseq
  %v5158 = vshrl.u32 %v5157, 7
  %v5159 = vsub.s32 %v5156, %v5158
  %v5160 = vrot.slane %v5145, %v5159
  %v5161 = vcombine.low %v5153, %v5160
  %v5162 = vcombine.low %v4984, %v4986
  %v5163 = vcombine.low %v4969, %v4983
  %v5165 = vunpack.c.l.s4 1966171168
  %v5166 = vunpack.c.0.s8 %v5165
  %v5167 = vlaneseq
  %v5168 = vshrl.u32 %v5167, 7
  %v5169 = vsub.s32 %v5166, %v5168
  %v5170 = vrot.slane %v5162, %v5169
  %v5172 = vunpack.c.l.s4 1966171168
  %v5173 = vunpack.c.0.s8 %v5172
  %v5174 = vlaneseq
  %v5175 = vshrl.u32 %v5174, 7
  %v5176 = vsub.s32 %v5173, %v5175
  %v5177 = vrot.slane %v5163, %v5176
  %v5179 = vunpack.c.l.s4 1966171168
  %v5180 = vunpack.c.0.s8 %v5179
  %v5181 = vlaneseq
  %v5182 = vshrl.u32 %v5181, 7
  %v5183 = vsub.s32 %v5180, %v5182
  %v5184 = vrot.slane %v4985, %v5183
  %v5185 = vcombine.low %v5170, %v5177
  %v5187 = vunpack.c.l.s4 1966171168
  %v5188 = vunpack.c.0.s8 %v5187
  %v5189 = vlaneseq
  %v5190 = vshrl.u32 %v5189, 7
  %v5191 = vsub.s32 %v5188, %v5190
  %v5192 = vrot.slane %v5185, %v5191
  %v5194 = vunpack.c.l.s4 1966171168
  %v5195 = vunpack.c.0.s8 %v5194
  %v5196 = vlaneseq
  %v5197 = vshrl.u32 %v5196, 7
  %v5198 = vsub.s32 %v5195, %v5197
  %v5199 = vrot.slane %v5184, %v5198
  %v5200 = vcombine.low %v5192, %v5199
  %v5201 = vcombine.low %v4987, %v5011
  %v5202 = vcombine.low %v5025, %v5033
  %v5204 = vunpack.c.l.s4 1966171168
  %v5205 = vunpack.c.0.s8 %v5204
  %v5206 = vlaneseq
  %v5207 = vshrl.u32 %v5206, 7
  %v5208 = vsub.s32 %v5205, %v5207
  %v5209 = vrot.slane %v5201, %v5208
  %v5211 = vunpack.c.l.s4 1966171168
  %v5212 = vunpack.c.0.s8 %v5211
  %v5213 = vlaneseq
  %v5214 = vshrl.u32 %v5213, 7
  %v5215 = vsub.s32 %v5212, %v5214
  %v5216 = vrot.slane %v5202, %v5215
  %v5218 = vunpack.c.l.s4 1966171168
  %v5219 = vunpack.c.0.s8 %v5218
  %v5220 = vlaneseq
  %v5221 = vshrl.u32 %v5220, 7
  %v5222 = vsub.s32 %v5219, %v5221
  %v5223 = vrot.slane %v5035, %v5222
  %v5224 = vcombine.low %v5209, %v5216
  %v5226 = vunpack.c.l.s4 1966171168
  %v5227 = vunpack.c.0.s8 %v5226
  %v5228 = vlaneseq
  %v5229 = vshrl.u32 %v5228, 7
  %v5230 = vsub.s32 %v5227, %v5229
  %v5231 = vrot.slane %v5224, %v5230
  %v5233 = vunpack.c.l.s4 1966171168
  %v5234 = vunpack.c.0.s8 %v5233
  %v5235 = vlaneseq
  %v5236 = vshrl.u32 %v5235, 7
  %v5237 = vsub.s32 %v5234, %v5236
  %v5238 = vrot.slane %v5223, %v5237
  %v5239 = vcombine.low %v5231, %v5238
  %v5240 = vcombine.low %v5018, %v5032
  %v5241 = vcombine.low %v5034, %v5036
  %v5243 = vunpack.c.l.s4 1966171168
  %v5244 = vunpack.c.0.s8 %v5243
  %v5245 = vlaneseq
  %v5246 = vshrl.u32 %v5245, 7
  %v5247 = vsub.s32 %v5244, %v5246
  %v5248 = vrot.slane %v5240, %v5247
  %v5250 = vunpack.c.l.s4 1966171168
  %v5251 = vunpack.c.0.s8 %v5250
  %v5252 = vlaneseq
  %v5253 = vshrl.u32 %v5252, 7
  %v5254 = vsub.s32 %v5251, %v5253
  %v5255 = vrot.slane %v5241, %v5254
  %v5257 = vunpack.c.l.s4 1966171168
  %v5258 = vunpack.c.0.s8 %v5257
  %v5259 = vlaneseq
  %v5260 = vshrl.u32 %v5259, 7
  %v5261 = vsub.s32 %v5258, %v5260
  %v5262 = vrot.slane %v5060, %v5261
  %v5263 = vcombine.low %v5248, %v5255
  %v5265 = vunpack.c.l.s4 1966171168
  %v5266 = vunpack.c.0.s8 %v5265
  %v5267 = vlaneseq
  %v5268 = vshrl.u32 %v5267, 7
  %v5269 = vsub.s32 %v5266, %v5268
  %v5270 = vrot.slane %v5263, %v5269
  %v5272 = vunpack.c.l.s4 1966171168
  %v5273 = vunpack.c.0.s8 %v5272
  %v5274 = vlaneseq
  %v5275 = vshrl.u32 %v5274, 7
  %v5276 = vsub.s32 %v5273, %v5275
  %v5277 = vrot.slane %v5262, %v5276
  %v5278 = vcombine.low %v5270, %v5277
  %v5279 = vcombine.low %v5074, %v5082
  %v5280 = vcombine.low %v5083, %v5067
  %v5282 = vunpack.c.l.s4 1966171168
  %v5283 = vunpack.c.0.s8 %v5282
  %v5284 = vlaneseq
  %v5285 = vshrl.u32 %v5284, 7
  %v5286 = vsub.s32 %v5283, %v5285
  %v5287 = vrot.slane %v5279, %v5286
  %v5289 = vunpack.c.l.s4 1966171168
  %v5290 = vunpack.c.0.s8 %v5289
  %v5291 = vlaneseq
  %v5292 = vshrl.u32 %v5291, 7
  %v5293 = vsub.s32 %v5290, %v5292
  %v5294 = vrot.slane %v5280, %v5293
  %v5296 = vunpack.c.l.s4 1966171168
  %v5297 = vunpack.c.0.s8 %v5296
  %v5298 = vlaneseq
  %v5299 = vshrl.u32 %v5298, 7
  %v5300 = vsub.s32 %v5297, %v5299
  %v5301 = vrot.slane %v5081, %v5300
  %v5302 = vcombine.low %v5287, %v5294
  %v5304 = vunpack.c.l.s4 1966171168
  %v5305 = vunpack.c.0.s8 %v5304
  %v5306 = vlaneseq
  %v5307 = vshrl.u32 %v5306, 7
  %v5308 = vsub.s32 %v5305, %v5307
  %v5309 = vrot.slane %v5302, %v5308
  %v5311 = vunpack.c.l.s4 1966171168
  %v5312 = vunpack.c.0.s8 %v5311
  %v5313 = vlaneseq
  %v5314 = vshrl.u32 %v5313, 7
  %v5315 = vsub.s32 %v5312, %v5314
  %v5316 = vrot.slane %v5301, %v5315
  %v5317 = vcombine.low %v5309, %v5316
  %s5324 = scalar_lea.vmem %s3, 96
  %5325 = vst.msk [vmem:[%s5324] sm:$0x1f] %vm1723, %v5122
  %5326 = vst.msk [vmem:[%s5324 + $0x8] sm:$0x1f] %vm1723, %v5161
  %5327 = vst.msk [vmem:[%s5324 + $0x10] sm:$0x1f] %vm1723, %v5200
  %5328 = vst.msk [vmem:[%s5324 + $0x18] sm:$0x1f] %vm1723, %v5239
  %5329 = vst.msk [vmem:[%s5324 + $0x20] sm:$0x1f] %vm1723, %v5278
  %5330 = vst.msk [vmem:[%s5324 + $0x28] sm:$0x1f] %vm1723, %v5317
  %v5331 = vld [vmem:[%s3623] sm:$0xe]
  %v5332 = vld [vmem:[%s3623 + $0x4] sm:$0xe]
  %v5333 = vld [vmem:[%s3623 + $0x8] sm:$0xe]
  %v5334 = vld [vmem:[%s3623 + $0x14] sm:$0xe]
  %v5335 = vld [vmem:[%s3623 + $0x18] sm:$0xe]
  %v5336 = vld [vmem:[%s3623 + $0x1c] sm:$0xe]
  %v5344 = vunpack.c.l.s4 1966171168
  %v5345 = vunpack.c.0.s8 %v5344
  %v5346 = vlaneseq
  %v5347 = vshrl.u32 %v5346, 7
  %v5348 = vsub.s32 %v5345, %v5347
  %v5349 = vrot.slane %v5331, %v5348
  %v5350 = vcombine.high %v5349, %v5349
  %v5352 = vunpack.c.l.s4 1966171168
  %v5353 = vunpack.c.0.s8 %v5352
  %v5354 = vlaneseq
  %v5355 = vshrl.u32 %v5354, 7
  %v5356 = vsub.s32 %v5353, %v5355
  %v5357 = vrot.slane %v5349, %v5356
  %v5359 = vunpack.c.l.s4 1966171168
  %v5360 = vunpack.c.0.s8 %v5359
  %v5361 = vlaneseq
  %v5362 = vshrl.u32 %v5361, 7
  %v5363 = vsub.s32 %v5360, %v5362
  %v5364 = vrot.slane %v5350, %v5363
  %v5365 = vcombine.high %v5357, %v5357
  %v5366 = vcombine.high %v5364, %v5364
  %v5368 = vunpack.c.l.s4 1966171168
  %v5369 = vunpack.c.0.s8 %v5368
  %v5370 = vlaneseq
  %v5371 = vshrl.u32 %v5370, 7
  %v5372 = vsub.s32 %v5369, %v5371
  %v5373 = vrot.slane %v5332, %v5372
  %v5374 = vcombine.high %v5373, %v5373
  %v5376 = vunpack.c.l.s4 1966171168
  %v5377 = vunpack.c.0.s8 %v5376
  %v5378 = vlaneseq
  %v5379 = vshrl.u32 %v5378, 7
  %v5380 = vsub.s32 %v5377, %v5379
  %v5381 = vrot.slane %v5373, %v5380
  %v5383 = vunpack.c.l.s4 1966171168
  %v5384 = vunpack.c.0.s8 %v5383
  %v5385 = vlaneseq
  %v5386 = vshrl.u32 %v5385, 7
  %v5387 = vsub.s32 %v5384, %v5386
  %v5388 = vrot.slane %v5374, %v5387
  %v5389 = vcombine.high %v5381, %v5381
  %v5390 = vcombine.high %v5388, %v5388
  %v5392 = vunpack.c.l.s4 1966171168
  %v5393 = vunpack.c.0.s8 %v5392
  %v5394 = vlaneseq
  %v5395 = vshrl.u32 %v5394, 7
  %v5396 = vsub.s32 %v5393, %v5395
  %v5397 = vrot.slane %v5333, %v5396
  %v5398 = vcombine.high %v5397, %v5397
  %v5400 = vunpack.c.l.s4 1966171168
  %v5401 = vunpack.c.0.s8 %v5400
  %v5402 = vlaneseq
  %v5403 = vshrl.u32 %v5402, 7
  %v5404 = vsub.s32 %v5401, %v5403
  %v5405 = vrot.slane %v5397, %v5404
  %v5407 = vunpack.c.l.s4 1966171168
  %v5408 = vunpack.c.0.s8 %v5407
  %v5409 = vlaneseq
  %v5410 = vshrl.u32 %v5409, 7
  %v5411 = vsub.s32 %v5408, %v5410
  %v5412 = vrot.slane %v5398, %v5411
  %v5413 = vcombine.high %v5405, %v5405
  %v5414 = vcombine.high %v5412, %v5412
  %v5416 = vunpack.c.l.s4 1966171168
  %v5417 = vunpack.c.0.s8 %v5416
  %v5418 = vlaneseq
  %v5419 = vshrl.u32 %v5418, 7
  %v5420 = vsub.s32 %v5417, %v5419
  %v5421 = vrot.slane %v5334, %v5420
  %v5422 = vcombine.high %v5421, %v5421
  %v5424 = vunpack.c.l.s4 1966171168
  %v5425 = vunpack.c.0.s8 %v5424
  %v5426 = vlaneseq
  %v5427 = vshrl.u32 %v5426, 7
  %v5428 = vsub.s32 %v5425, %v5427
  %v5429 = vrot.slane %v5421, %v5428
  %v5431 = vunpack.c.l.s4 1966171168
  %v5432 = vunpack.c.0.s8 %v5431
  %v5433 = vlaneseq
  %v5434 = vshrl.u32 %v5433, 7
  %v5435 = vsub.s32 %v5432, %v5434
  %v5436 = vrot.slane %v5422, %v5435
  %v5437 = vcombine.high %v5429, %v5429
  %v5438 = vcombine.high %v5436, %v5436
  %v5440 = vunpack.c.l.s4 1966171168
  %v5441 = vunpack.c.0.s8 %v5440
  %v5442 = vlaneseq
  %v5443 = vshrl.u32 %v5442, 7
  %v5444 = vsub.s32 %v5441, %v5443
  %v5445 = vrot.slane %v5335, %v5444
  %v5446 = vcombine.high %v5445, %v5445
  %v5448 = vunpack.c.l.s4 1966171168
  %v5449 = vunpack.c.0.s8 %v5448
  %v5450 = vlaneseq
  %v5451 = vshrl.u32 %v5450, 7
  %v5452 = vsub.s32 %v5449, %v5451
  %v5453 = vrot.slane %v5445, %v5452
  %v5455 = vunpack.c.l.s4 1966171168
  %v5456 = vunpack.c.0.s8 %v5455
  %v5457 = vlaneseq
  %v5458 = vshrl.u32 %v5457, 7
  %v5459 = vsub.s32 %v5456, %v5458
  %v5460 = vrot.slane %v5446, %v5459
  %v5461 = vcombine.high %v5453, %v5453
  %v5462 = vcombine.high %v5460, %v5460
  %v5464 = vunpack.c.l.s4 1966171168
  %v5465 = vunpack.c.0.s8 %v5464
  %v5466 = vlaneseq
  %v5467 = vshrl.u32 %v5466, 7
  %v5468 = vsub.s32 %v5465, %v5467
  %v5469 = vrot.slane %v5336, %v5468
  %v5470 = vcombine.high %v5469, %v5469
  %v5472 = vunpack.c.l.s4 1966171168
  %v5473 = vunpack.c.0.s8 %v5472
  %v5474 = vlaneseq
  %v5475 = vshrl.u32 %v5474, 7
  %v5476 = vsub.s32 %v5473, %v5475
  %v5477 = vrot.slane %v5469, %v5476
  %v5479 = vunpack.c.l.s4 1966171168
  %v5480 = vunpack.c.0.s8 %v5479
  %v5481 = vlaneseq
  %v5482 = vshrl.u32 %v5481, 7
  %v5483 = vsub.s32 %v5480, %v5482
  %v5484 = vrot.slane %v5470, %v5483
  %v5485 = vcombine.high %v5477, %v5477
  %v5486 = vcombine.high %v5484, %v5484
  %v5487 = vunpack.i.l.s16 %v5364
  %v5488 = vunpack.i.h.s16 %v5364
  %v5489 = vunpack.i.l.s16 %v5365
  %v5490 = vunpack.i.h.s16 %v5365
  %v5491 = vunpack.i.l.s16 %v5366
  %v5492 = vunpack.i.l.s16 %v5388
  %v5493 = vunpack.i.h.s16 %v5388
  %v5494 = vunpack.i.l.s16 %v5389
  %v5495 = vunpack.i.h.s16 %v5389
  %v5496 = vunpack.i.l.s16 %v5390
  %v5497 = vunpack.i.l.s16 %v5412
  %v5498 = vunpack.i.h.s16 %v5412
  %v5499 = vunpack.i.l.s16 %v5413
  %v5500 = vunpack.i.h.s16 %v5413
  %v5501 = vunpack.i.l.s16 %v5414
  %v5502 = vunpack.i.l.s16 %v5436
  %v5503 = vunpack.i.h.s16 %v5436
  %v5504 = vunpack.i.l.s16 %v5437
  %v5505 = vunpack.i.h.s16 %v5437
  %v5506 = vunpack.i.l.s16 %v5438
  %v5507 = vunpack.i.l.s16 %v5460
  %v5508 = vunpack.i.h.s16 %v5460
  %v5509 = vunpack.i.l.s16 %v5461
  %v5510 = vunpack.i.h.s16 %v5461
  %v5511 = vunpack.i.l.s16 %v5462
  %v5512 = vunpack.i.l.s16 %v5484
  %v5513 = vunpack.i.h.s16 %v5484
  %v5514 = vunpack.i.l.s16 %v5485
  %v5515 = vunpack.i.h.s16 %v5485
  %v5516 = vunpack.i.l.s16 %v5486
  %s5517 = scalar_lea.vmem %s1, 96
  %v5518 = vld [vmem:[%s5517] sm:$0xf]
  %v5519 = vld [vmem:[%s5517 + $0x4] sm:$0xf]
  %v5520 = vld [vmem:[%s3623] sm:$0x7]
  %v5521 = vld [vmem:[%s3623 + $0x4] sm:$0x7]
  %v5522 = vld [vmem:[%s3623 + $0x8] sm:$0x7]
  %v5523 = vld [vmem:[%s3623 + $0x14] sm:$0x7]
  %v5524 = vld [vmem:[%s3623 + $0x18] sm:$0x7]
  %v5525 = vld [vmem:[%s3623 + $0x1c] sm:$0x7]
  %v5533 = vunpack.c.l.s4 1966171168
  %v5534 = vunpack.c.0.s8 %v5533
  %v5535 = vlaneseq
  %v5536 = vshrl.u32 %v5535, 7
  %v5537 = vsub.s32 %v5534, %v5536
  %v5538 = vrot.slane %v5520, %v5537
  %v5539 = vcombine.high %v5538, %v5538
  %v5541 = vunpack.c.l.s4 1966171168
  %v5542 = vunpack.c.0.s8 %v5541
  %v5543 = vlaneseq
  %v5544 = vshrl.u32 %v5543, 7
  %v5545 = vsub.s32 %v5542, %v5544
  %v5546 = vrot.slane %v5538, %v5545
  %v5548 = vunpack.c.l.s4 1966171168
  %v5549 = vunpack.c.0.s8 %v5548
  %v5550 = vlaneseq
  %v5551 = vshrl.u32 %v5550, 7
  %v5552 = vsub.s32 %v5549, %v5551
  %v5553 = vrot.slane %v5539, %v5552
  %v5554 = vcombine.high %v5546, %v5546
  %v5556 = vunpack.c.l.s4 1966171168
  %v5557 = vunpack.c.0.s8 %v5556
  %v5558 = vlaneseq
  %v5559 = vshrl.u32 %v5558, 7
  %v5560 = vsub.s32 %v5557, %v5559
  %v5561 = vrot.slane %v5521, %v5560
  %v5562 = vcombine.high %v5561, %v5561
  %v5564 = vunpack.c.l.s4 1966171168
  %v5565 = vunpack.c.0.s8 %v5564
  %v5566 = vlaneseq
  %v5567 = vshrl.u32 %v5566, 7
  %v5568 = vsub.s32 %v5565, %v5567
  %v5569 = vrot.slane %v5561, %v5568
  %v5571 = vunpack.c.l.s4 1966171168
  %v5572 = vunpack.c.0.s8 %v5571
  %v5573 = vlaneseq
  %v5574 = vshrl.u32 %v5573, 7
  %v5575 = vsub.s32 %v5572, %v5574
  %v5576 = vrot.slane %v5562, %v5575
  %v5577 = vcombine.high %v5569, %v5569
  %v5579 = vunpack.c.l.s4 1966171168
  %v5580 = vunpack.c.0.s8 %v5579
  %v5581 = vlaneseq
  %v5582 = vshrl.u32 %v5581, 7
  %v5583 = vsub.s32 %v5580, %v5582
  %v5584 = vrot.slane %v5522, %v5583
  %v5585 = vcombine.high %v5584, %v5584
  %v5587 = vunpack.c.l.s4 1966171168
  %v5588 = vunpack.c.0.s8 %v5587
  %v5589 = vlaneseq
  %v5590 = vshrl.u32 %v5589, 7
  %v5591 = vsub.s32 %v5588, %v5590
  %v5592 = vrot.slane %v5584, %v5591
  %v5594 = vunpack.c.l.s4 1966171168
  %v5595 = vunpack.c.0.s8 %v5594
  %v5596 = vlaneseq
  %v5597 = vshrl.u32 %v5596, 7
  %v5598 = vsub.s32 %v5595, %v5597
  %v5599 = vrot.slane %v5585, %v5598
  %v5600 = vcombine.high %v5592, %v5592
  %v5602 = vunpack.c.l.s4 1966171168
  %v5603 = vunpack.c.0.s8 %v5602
  %v5604 = vlaneseq
  %v5605 = vshrl.u32 %v5604, 7
  %v5606 = vsub.s32 %v5603, %v5605
  %v5607 = vrot.slane %v5523, %v5606
  %v5608 = vcombine.high %v5607, %v5607
  %v5610 = vunpack.c.l.s4 1966171168
  %v5611 = vunpack.c.0.s8 %v5610
  %v5612 = vlaneseq
  %v5613 = vshrl.u32 %v5612, 7
  %v5614 = vsub.s32 %v5611, %v5613
  %v5615 = vrot.slane %v5607, %v5614
  %v5617 = vunpack.c.l.s4 1966171168
  %v5618 = vunpack.c.0.s8 %v5617
  %v5619 = vlaneseq
  %v5620 = vshrl.u32 %v5619, 7
  %v5621 = vsub.s32 %v5618, %v5620
  %v5622 = vrot.slane %v5608, %v5621
  %v5623 = vcombine.high %v5615, %v5615
  %v5625 = vunpack.c.l.s4 1966171168
  %v5626 = vunpack.c.0.s8 %v5625
  %v5627 = vlaneseq
  %v5628 = vshrl.u32 %v5627, 7
  %v5629 = vsub.s32 %v5626, %v5628
  %v5630 = vrot.slane %v5524, %v5629
  %v5631 = vcombine.high %v5630, %v5630
  %v5633 = vunpack.c.l.s4 1966171168
  %v5634 = vunpack.c.0.s8 %v5633
  %v5635 = vlaneseq
  %v5636 = vshrl.u32 %v5635, 7
  %v5637 = vsub.s32 %v5634, %v5636
  %v5638 = vrot.slane %v5630, %v5637
  %v5640 = vunpack.c.l.s4 1966171168
  %v5641 = vunpack.c.0.s8 %v5640
  %v5642 = vlaneseq
  %v5643 = vshrl.u32 %v5642, 7
  %v5644 = vsub.s32 %v5641, %v5643
  %v5645 = vrot.slane %v5631, %v5644
  %v5646 = vcombine.high %v5638, %v5638
  %v5648 = vunpack.c.l.s4 1966171168
  %v5649 = vunpack.c.0.s8 %v5648
  %v5650 = vlaneseq
  %v5651 = vshrl.u32 %v5650, 7
  %v5652 = vsub.s32 %v5649, %v5651
  %v5653 = vrot.slane %v5525, %v5652
  %v5654 = vcombine.high %v5653, %v5653
  %v5656 = vunpack.c.l.s4 1966171168
  %v5657 = vunpack.c.0.s8 %v5656
  %v5658 = vlaneseq
  %v5659 = vshrl.u32 %v5658, 7
  %v5660 = vsub.s32 %v5657, %v5659
  %v5661 = vrot.slane %v5653, %v5660
  %v5663 = vunpack.c.l.s4 1966171168
  %v5664 = vunpack.c.0.s8 %v5663
  %v5665 = vlaneseq
  %v5666 = vshrl.u32 %v5665, 7
  %v5667 = vsub.s32 %v5664, %v5666
  %v5668 = vrot.slane %v5654, %v5667
  %v5669 = vcombine.high %v5661, %v5661
  %v5670 = vunpack.i.h.s16 %v5546
  %v5671 = vunpack.i.l.s16 %v5553
  %v5672 = vunpack.i.h.s16 %v5553
  %v5673 = vunpack.i.l.s16 %v5554
  %v5674 = vunpack.i.h.s16 %v5554
  %v5675 = vunpack.i.h.s16 %v5569
  %v5676 = vunpack.i.l.s16 %v5576
  %v5677 = vunpack.i.h.s16 %v5576
  %v5678 = vunpack.i.l.s16 %v5577
  %v5679 = vunpack.i.h.s16 %v5577
  %v5680 = vunpack.i.h.s16 %v5592
  %v5681 = vunpack.i.l.s16 %v5599
  %v5682 = vunpack.i.h.s16 %v5599
  %v5683 = vunpack.i.l.s16 %v5600
  %v5684 = vunpack.i.h.s16 %v5600
  %v5685 = vunpack.i.h.s16 %v5615
  %v5686 = vunpack.i.l.s16 %v5622
  %v5687 = vunpack.i.h.s16 %v5622
  %v5688 = vunpack.i.l.s16 %v5623
  %v5689 = vunpack.i.h.s16 %v5623
  %v5690 = vunpack.i.h.s16 %v5638
  %v5691 = vunpack.i.l.s16 %v5645
  %v5692 = vunpack.i.h.s16 %v5645
  %v5693 = vunpack.i.l.s16 %v5646
  %v5694 = vunpack.i.h.s16 %v5646
  %v5695 = vunpack.i.h.s16 %v5661
  %v5696 = vunpack.i.l.s16 %v5668
  %v5697 = vunpack.i.h.s16 %v5668
  %v5698 = vunpack.i.l.s16 %v5669
  %v5699 = vunpack.i.h.s16 %v5669
  %s5700 = scalar_lea.vmem %s1, 104
  %v5701 = vld [vmem:[%s5700] sm:$0xf]
  %v5702 = vld [vmem:[%s5700 + $0x4] sm:$0xf]
  %v5703 = vpack.i.b16 %v5671, %v5670
  %v5704 = vpack.i.b16 %v5673, %v5672
  %v5705 = vpack.i.b16 %v5675, %v5674
  %v5706 = vpack.i.b16 %v5677, %v5676
  %v5707 = vpack.i.b16 %v5679, %v5678
  %v5708 = vpack.i.b16 %v5681, %v5680
  %v5709 = vpack.i.b16 %v5683, %v5682
  %v5710 = vpack.i.b16 %v5685, %v5684
  %v5711 = vpack.i.b16 %v5687, %v5686
  %v5712 = vpack.i.b16 %v5689, %v5688
  %v5713 = vpack.i.b16 %v5691, %v5690
  %v5714 = vpack.i.b16 %v5693, %v5692
  %v5715 = vpack.i.b16 %v5695, %v5694
  %v5716 = vpack.i.b16 %v5697, %v5696
  %v5717 = vpack.i.b16 %v5699, %v5698
  %v5718 = vcombine.low %v5703, %v5704
  %v5719 = vcombine.low %v5705, %v5706
  %v5720 = vcombine.low %v5707, %v5708
  %v5721 = vcombine.low %v5709, %v5710
  %v5723 = vunpack.c.l.s4 1966171168
  %v5724 = vunpack.c.0.s8 %v5723
  %v5725 = vlaneseq
  %v5726 = vshrl.u32 %v5725, 7
  %v5727 = vsub.s32 %v5724, %v5726
  %v5728 = vrot.slane %v5718, %v5727
  %v5730 = vunpack.c.l.s4 1966171168
  %v5731 = vunpack.c.0.s8 %v5730
  %v5732 = vlaneseq
  %v5733 = vshrl.u32 %v5732, 7
  %v5734 = vsub.s32 %v5731, %v5733
  %v5735 = vrot.slane %v5719, %v5734
  %v5737 = vunpack.c.l.s4 1966171168
  %v5738 = vunpack.c.0.s8 %v5737
  %v5739 = vlaneseq
  %v5740 = vshrl.u32 %v5739, 7
  %v5741 = vsub.s32 %v5738, %v5740
  %v5742 = vrot.slane %v5720, %v5741
  %v5744 = vunpack.c.l.s4 1966171168
  %v5745 = vunpack.c.0.s8 %v5744
  %v5746 = vlaneseq
  %v5747 = vshrl.u32 %v5746, 7
  %v5748 = vsub.s32 %v5745, %v5747
  %v5749 = vrot.slane %v5721, %v5748
  %v5750 = vcombine.low %v5728, %v5735
  %v5751 = vcombine.low %v5742, %v5749
  %v5753 = vunpack.c.l.s4 1966171168
  %v5754 = vunpack.c.0.s8 %v5753
  %v5755 = vlaneseq
  %v5756 = vshrl.u32 %v5755, 7
  %v5757 = vsub.s32 %v5754, %v5756
  %v5758 = vrot.slane %v5750, %v5757
  %v5760 = vunpack.c.l.s4 1966171168
  %v5761 = vunpack.c.0.s8 %v5760
  %v5762 = vlaneseq
  %v5763 = vshrl.u32 %v5762, 7
  %v5764 = vsub.s32 %v5761, %v5763
  %v5765 = vrot.slane %v5751, %v5764
  %v5766 = vcombine.low %v5758, %v5765
  %v5767 = vcombine.low %v5711, %v5712
  %v5768 = vcombine.low %v5713, %v5714
  %v5769 = vcombine.low %v5715, %v5716
  %v5771 = vunpack.c.l.s4 1966171168
  %v5772 = vunpack.c.0.s8 %v5771
  %v5773 = vlaneseq
  %v5774 = vshrl.u32 %v5773, 7
  %v5775 = vsub.s32 %v5772, %v5774
  %v5776 = vrot.slane %v5767, %v5775
  %v5778 = vunpack.c.l.s4 1966171168
  %v5779 = vunpack.c.0.s8 %v5778
  %v5780 = vlaneseq
  %v5781 = vshrl.u32 %v5780, 7
  %v5782 = vsub.s32 %v5779, %v5781
  %v5783 = vrot.slane %v5768, %v5782
  %v5785 = vunpack.c.l.s4 1966171168
  %v5786 = vunpack.c.0.s8 %v5785
  %v5787 = vlaneseq
  %v5788 = vshrl.u32 %v5787, 7
  %v5789 = vsub.s32 %v5786, %v5788
  %v5790 = vrot.slane %v5769, %v5789
  %v5792 = vunpack.c.l.s4 1966171168
  %v5793 = vunpack.c.0.s8 %v5792
  %v5794 = vlaneseq
  %v5795 = vshrl.u32 %v5794, 7
  %v5796 = vsub.s32 %v5793, %v5795
  %v5797 = vrot.slane %v5717, %v5796
  %v5798 = vcombine.low %v5776, %v5783
  %v5799 = vcombine.low %v5790, %v5797
  %v5801 = vunpack.c.l.s4 1966171168
  %v5802 = vunpack.c.0.s8 %v5801
  %v5803 = vlaneseq
  %v5804 = vshrl.u32 %v5803, 7
  %v5805 = vsub.s32 %v5802, %v5804
  %v5806 = vrot.slane %v5798, %v5805
  %v5808 = vunpack.c.l.s4 1966171168
  %v5809 = vunpack.c.0.s8 %v5808
  %v5810 = vlaneseq
  %v5811 = vshrl.u32 %v5810, 7
  %v5812 = vsub.s32 %v5809, %v5811
  %v5813 = vrot.slane %v5799, %v5812
  %v5814 = vcombine.low %v5806, %v5813
  %v5817 = vunpack.c.l.b16 %v5701
  %v5818 = vunpack.c.l.b16 %v5702
  %v5819 = vpack.c.b16 %v5818, %v5817
  %v5822 = vsel %vm326, %v5766, 0
  %v5825 = vsel %vm326, %v5814, 0
  %5827 = vmatprep.subr.bf16.mxu0 0
  %5828 = vmatpush1.bf16.msra.mxu0 %v5819
  %5829 = vmatprep.subr.bf16.mxu0 0
  %5830 = vmatpush1.bf16.msra.mxu0 0
  %5831 = vmatprep.subr.bf16.mxu0 0
  %5832 = vmatpush1.bf16.msra.mxu0 0
  %5833 = vmatprep.subr.bf16.mxu0 0
  %5834 = vmatpush1.bf16.msra.mxu0 0
  %5835 = vmatprep.subr.bf16.mxu0 0
  %5836 = vmatpush1.bf16.msra.mxu0 0
  %5837 = vmatprep.subr.bf16.mxu0 0
  %5838 = vmatpush1.bf16.msra.mxu0 0
  %5839 = vmatprep.subr.bf16.mxu0 0
  %5840 = vmatpush1.bf16.msra.mxu0 0
  %5841 = vmatprep.subr.bf16.mxu0 0
  %5842 = vmatpush1.bf16.msra.mxu0 0
  %5843 = vmatprep.subr.bf16.mxu0 0
  %5844 = vmatpush1.bf16.msra.mxu0 0
  %5845 = vmatprep.subr.bf16.mxu0 0
  %5846 = vmatpush1.bf16.msra.mxu0 0
  %5847 = vmatprep.subr.bf16.mxu0 0
  %5848 = vmatpush1.bf16.msra.mxu0 0
  %5849 = vmatprep.subr.bf16.mxu0 0
  %5850 = vmatpush1.bf16.msra.mxu0 0
  %5851 = vmatprep.subr.bf16.mxu0 0
  %5852 = vmatpush1.bf16.msra.mxu0 0
  %5853 = vmatprep.subr.bf16.mxu0 0
  %5854 = vmatpush1.bf16.msra.mxu0 0
  %5855 = vmatprep.subr.bf16.mxu0 0
  %5856 = vmatpush1.bf16.msra.mxu0 0
  %5857 = vmatprep.subr.bf16.mxu0 0
  %5858 = vmatpush1.bf16.msra.mxu0 0
  %5859 = vmatprep.mubr.bf16.mxu0 0
  %5860 = vmatmul.mubr.bf16.gmra.mrb[0].mxu0 %v5822
  %v5861 = vpop.f32.mrb[0].mxu0
  %v5862 = vadd.f32 0.0, %v5861
  %v5863 = vpop.f32.mrb[0].mxu0
  %v5864 = vpop.f32.mrb[0].mxu0
  %v5865 = vadd.f32 0.0, %v5864
  %v5866 = vpop.f32.mrb[0].mxu0
  %5867 = vmatprep.mubr.bf16.mxu0 0
  %5868 = vmatmul.mubr.bf16.gmra.mrb[0].mxu0 %v5825
  %v5869 = vpop.f32.mrb[0].mxu0
  %v5870 = vadd.f32 0.0, %v5869
  %v5871 = vpop.f32.mrb[0].mxu0
  %v5872 = vpop.f32.mrb[0].mxu0
  %v5873 = vadd.f32 0.0, %v5872
  %v5874 = vpop.f32.mrb[0].mxu0
  %5875 = vdwg.mxu0
  %v5876 = vpack.i.b16 %v5488, %v5487
  %v5877 = vpack.i.b16 %v5490, %v5489
  %v5878 = vpack.i.b16 %v5492, %v5491
  %v5879 = vpack.i.b16 %v5494, %v5493
  %v5880 = vpack.i.b16 %v5496, %v5495
  %v5881 = vpack.i.b16 %v5498, %v5497
  %v5882 = vpack.i.b16 %v5500, %v5499
  %v5883 = vpack.i.b16 %v5502, %v5501
  %v5884 = vpack.i.b16 %v5504, %v5503
  %v5885 = vpack.i.b16 %v5506, %v5505
  %v5886 = vpack.i.b16 %v5508, %v5507
  %v5887 = vpack.i.b16 %v5510, %v5509
  %v5888 = vpack.i.b16 %v5512, %v5511
  %v5889 = vpack.i.b16 %v5514, %v5513
  %v5890 = vpack.i.b16 %v5516, %v5515
  %v5891 = vcombine.low %v5876, %v5877
  %v5892 = vcombine.low %v5878, %v5879
  %v5893 = vcombine.low %v5880, %v5881
  %v5894 = vcombine.low %v5882, %v5883
  %v5896 = vunpack.c.l.s4 1966171168
  %v5897 = vunpack.c.0.s8 %v5896
  %v5898 = vlaneseq
  %v5899 = vshrl.u32 %v5898, 7
  %v5900 = vsub.s32 %v5897, %v5899
  %v5901 = vrot.slane %v5891, %v5900
  %v5903 = vunpack.c.l.s4 1966171168
  %v5904 = vunpack.c.0.s8 %v5903
  %v5905 = vlaneseq
  %v5906 = vshrl.u32 %v5905, 7
  %v5907 = vsub.s32 %v5904, %v5906
  %v5908 = vrot.slane %v5892, %v5907
  %v5910 = vunpack.c.l.s4 1966171168
  %v5911 = vunpack.c.0.s8 %v5910
  %v5912 = vlaneseq
  %v5913 = vshrl.u32 %v5912, 7
  %v5914 = vsub.s32 %v5911, %v5913
  %v5915 = vrot.slane %v5893, %v5914
  %v5917 = vunpack.c.l.s4 1966171168
  %v5918 = vunpack.c.0.s8 %v5917
  %v5919 = vlaneseq
  %v5920 = vshrl.u32 %v5919, 7
  %v5921 = vsub.s32 %v5918, %v5920
  %v5922 = vrot.slane %v5894, %v5921
  %v5923 = vcombine.low %v5901, %v5908
  %v5924 = vcombine.low %v5915, %v5922
  %v5926 = vunpack.c.l.s4 1966171168
  %v5927 = vunpack.c.0.s8 %v5926
  %v5928 = vlaneseq
  %v5929 = vshrl.u32 %v5928, 7
  %v5930 = vsub.s32 %v5927, %v5929
  %v5931 = vrot.slane %v5923, %v5930
  %v5933 = vunpack.c.l.s4 1966171168
  %v5934 = vunpack.c.0.s8 %v5933
  %v5935 = vlaneseq
  %v5936 = vshrl.u32 %v5935, 7
  %v5937 = vsub.s32 %v5934, %v5936
  %v5938 = vrot.slane %v5924, %v5937
  %v5939 = vcombine.low %v5931, %v5938
  %v5940 = vcombine.low %v5884, %v5885
  %v5941 = vcombine.low %v5886, %v5887
  %v5942 = vcombine.low %v5888, %v5889
  %v5944 = vunpack.c.l.s4 1966171168
  %v5945 = vunpack.c.0.s8 %v5944
  %v5946 = vlaneseq
  %v5947 = vshrl.u32 %v5946, 7
  %v5948 = vsub.s32 %v5945, %v5947
  %v5949 = vrot.slane %v5940, %v5948
  %v5951 = vunpack.c.l.s4 1966171168
  %v5952 = vunpack.c.0.s8 %v5951
  %v5953 = vlaneseq
  %v5954 = vshrl.u32 %v5953, 7
  %v5955 = vsub.s32 %v5952, %v5954
  %v5956 = vrot.slane %v5941, %v5955
  %v5958 = vunpack.c.l.s4 1966171168
  %v5959 = vunpack.c.0.s8 %v5958
  %v5960 = vlaneseq
  %v5961 = vshrl.u32 %v5960, 7
  %v5962 = vsub.s32 %v5959, %v5961
  %v5963 = vrot.slane %v5942, %v5962
  %v5965 = vunpack.c.l.s4 1966171168
  %v5966 = vunpack.c.0.s8 %v5965
  %v5967 = vlaneseq
  %v5968 = vshrl.u32 %v5967, 7
  %v5969 = vsub.s32 %v5966, %v5968
  %v5970 = vrot.slane %v5890, %v5969
  %v5971 = vcombine.low %v5949, %v5956
  %v5972 = vcombine.low %v5963, %v5970
  %v5974 = vunpack.c.l.s4 1966171168
  %v5975 = vunpack.c.0.s8 %v5974
  %v5976 = vlaneseq
  %v5977 = vshrl.u32 %v5976, 7
  %v5978 = vsub.s32 %v5975, %v5977
  %v5979 = vrot.slane %v5971, %v5978
  %v5981 = vunpack.c.l.s4 1966171168
  %v5982 = vunpack.c.0.s8 %v5981
  %v5983 = vlaneseq
  %v5984 = vshrl.u32 %v5983, 7
  %v5985 = vsub.s32 %v5982, %v5984
  %v5986 = vrot.slane %v5972, %v5985
  %v5987 = vcombine.low %v5979, %v5986
  %v5990 = vunpack.c.l.b16 %v5518
  %v5991 = vunpack.c.l.b16 %v5519
  %v5992 = vpack.c.b16 %v5991, %v5990
  %v5995 = vsel %vm326, %v5939, 0
  %v5998 = vsel %vm326, %v5987, 0
  %6000 = vmatprep.subr.bf16.mxu0 0
  %6001 = vmatpush1.bf16.msra.mxu0 %v5992
  %6002 = vmatprep.subr.bf16.mxu0 0
  %6003 = vmatpush1.bf16.msra.mxu0 0
  %6004 = vmatprep.subr.bf16.mxu0 0
  %6005 = vmatpush1.bf16.msra.mxu0 0
  %6006 = vmatprep.subr.bf16.mxu0 0
  %6007 = vmatpush1.bf16.msra.mxu0 0
  %6008 = vmatprep.subr.bf16.mxu0 0
  %6009 = vmatpush1.bf16.msra.mxu0 0
  %6010 = vmatprep.subr.bf16.mxu0 0
  %6011 = vmatpush1.bf16.msra.mxu0 0
  %6012 = vmatprep.subr.bf16.mxu0 0
  %6013 = vmatpush1.bf16.msra.mxu0 0
  %6014 = vmatprep.subr.bf16.mxu0 0
  %6015 = vmatpush1.bf16.msra.mxu0 0
  %6016 = vmatprep.subr.bf16.mxu0 0
  %6017 = vmatpush1.bf16.msra.mxu0 0
  %6018 = vmatprep.subr.bf16.mxu0 0
  %6019 = vmatpush1.bf16.msra.mxu0 0
  %6020 = vmatprep.subr.bf16.mxu0 0
  %6021 = vmatpush1.bf16.msra.mxu0 0
  %6022 = vmatprep.subr.bf16.mxu0 0
  %6023 = vmatpush1.bf16.msra.mxu0 0
  %6024 = vmatprep.subr.bf16.mxu0 0
  %6025 = vmatpush1.bf16.msra.mxu0 0
  %6026 = vmatprep.subr.bf16.mxu0 0
  %6027 = vmatpush1.bf16.msra.mxu0 0
  %6028 = vmatprep.subr.bf16.mxu0 0
  %6029 = vmatpush1.bf16.msra.mxu0 0
  %6030 = vmatprep.subr.bf16.mxu0 0
  %6031 = vmatpush1.bf16.msra.mxu0 0
  %6032 = vmatprep.mubr.bf16.mxu0 0
  %6033 = vmatmul.mubr.bf16.gmra.mrb[0].mxu0 %v5995
  %v6034 = vpop.f32.mrb[0].mxu0
  %v6035 = vadd.f32 %v5862, %v6034
  %v6036 = vpop.f32.mrb[0].mxu0
  %v6037 = vpop.f32.mrb[0].mxu0
  %v6038 = vadd.f32 %v5865, %v6037
  %v6039 = vpop.f32.mrb[0].mxu0
  %6040 = vmatprep.mubr.bf16.mxu0 0
  %6041 = vmatmul.mubr.bf16.gmra.mrb[0].mxu0 %v5998
  %v6042 = vpop.f32.mrb[0].mxu0
  %v6043 = vadd.f32 %v5870, %v6042
  %v6044 = vpop.f32.mrb[0].mxu0
  %v6045 = vpop.f32.mrb[0].mxu0
  %v6046 = vadd.f32 %v5873, %v6045
  %v6047 = vpop.f32.mrb[0].mxu0
  %6048 = vdwg.mxu0
  %v6049 = vld [vmem:[%s16] sm:$0xe]
  %v6050 = vld [vmem:[%s16 + $0x4] sm:$0xe]
  %v6051 = vld [vmem:[%s16 + $0x8] sm:$0xe]
  %v6052 = vld [vmem:[%s16 + $0x14] sm:$0xe]
  %v6053 = vld [vmem:[%s16 + $0x18] sm:$0xe]
  %v6054 = vld [vmem:[%s16 + $0x1c] sm:$0xe]
  %v6062 = vunpack.c.l.s4 1966171168
  %v6063 = vunpack.c.0.s8 %v6062
  %v6064 = vlaneseq
  %v6065 = vshrl.u32 %v6064, 7
  %v6066 = vsub.s32 %v6063, %v6065
  %v6067 = vrot.slane %v6049, %v6066
  %v6068 = vcombine.high %v6067, %v6067
  %v6070 = vunpack.c.l.s4 1966171168
  %v6071 = vunpack.c.0.s8 %v6070
  %v6072 = vlaneseq
  %v6073 = vshrl.u32 %v6072, 7
  %v6074 = vsub.s32 %v6071, %v6073
  %v6075 = vrot.slane %v6067, %v6074
  %v6077 = vunpack.c.l.s4 1966171168
  %v6078 = vunpack.c.0.s8 %v6077
  %v6079 = vlaneseq
  %v6080 = vshrl.u32 %v6079, 7
  %v6081 = vsub.s32 %v6078, %v6080
  %v6082 = vrot.slane %v6068, %v6081
  %v6083 = vcombine.high %v6075, %v6075
  %v6084 = vcombine.high %v6082, %v6082
  %v6086 = vunpack.c.l.s4 1966171168
  %v6087 = vunpack.c.0.s8 %v6086
  %v6088 = vlaneseq
  %v6089 = vshrl.u32 %v6088, 7
  %v6090 = vsub.s32 %v6087, %v6089
  %v6091 = vrot.slane %v6050, %v6090
  %v6092 = vcombine.high %v6091, %v6091
  %v6094 = vunpack.c.l.s4 1966171168
  %v6095 = vunpack.c.0.s8 %v6094
  %v6096 = vlaneseq
  %v6097 = vshrl.u32 %v6096, 7
  %v6098 = vsub.s32 %v6095, %v6097
  %v6099 = vrot.slane %v6091, %v6098
  %v6101 = vunpack.c.l.s4 1966171168
  %v6102 = vunpack.c.0.s8 %v6101
  %v6103 = vlaneseq
  %v6104 = vshrl.u32 %v6103, 7
  %v6105 = vsub.s32 %v6102, %v6104
  %v6106 = vrot.slane %v6092, %v6105
  %v6107 = vcombine.high %v6099, %v6099
  %v6108 = vcombine.high %v6106, %v6106
  %v6110 = vunpack.c.l.s4 1966171168
  %v6111 = vunpack.c.0.s8 %v6110
  %v6112 = vlaneseq
  %v6113 = vshrl.u32 %v6112, 7
  %v6114 = vsub.s32 %v6111, %v6113
  %v6115 = vrot.slane %v6051, %v6114
  %v6116 = vcombine.high %v6115, %v6115
  %v6118 = vunpack.c.l.s4 1966171168
  %v6119 = vunpack.c.0.s8 %v6118
  %v6120 = vlaneseq
  %v6121 = vshrl.u32 %v6120, 7
  %v6122 = vsub.s32 %v6119, %v6121
  %v6123 = vrot.slane %v6115, %v6122
  %v6125 = vunpack.c.l.s4 1966171168
  %v6126 = vunpack.c.0.s8 %v6125
  %v6127 = vlaneseq
  %v6128 = vshrl.u32 %v6127, 7
  %v6129 = vsub.s32 %v6126, %v6128
  %v6130 = vrot.slane %v6116, %v6129
  %v6131 = vcombine.high %v6123, %v6123
  %v6132 = vcombine.high %v6130, %v6130
  %v6134 = vunpack.c.l.s4 1966171168
  %v6135 = vunpack.c.0.s8 %v6134
  %v6136 = vlaneseq
  %v6137 = vshrl.u32 %v6136, 7
  %v6138 = vsub.s32 %v6135, %v6137
  %v6139 = vrot.slane %v6052, %v6138
  %v6140 = vcombine.high %v6139, %v6139
  %v6142 = vunpack.c.l.s4 1966171168
  %v6143 = vunpack.c.0.s8 %v6142
  %v6144 = vlaneseq
  %v6145 = vshrl.u32 %v6144, 7
  %v6146 = vsub.s32 %v6143, %v6145
  %v6147 = vrot.slane %v6139, %v6146
  %v6149 = vunpack.c.l.s4 1966171168
  %v6150 = vunpack.c.0.s8 %v6149
  %v6151 = vlaneseq
  %v6152 = vshrl.u32 %v6151, 7
  %v6153 = vsub.s32 %v6150, %v6152
  %v6154 = vrot.slane %v6140, %v6153
  %v6155 = vcombine.high %v6147, %v6147
  %v6156 = vcombine.high %v6154, %v6154
  %v6158 = vunpack.c.l.s4 1966171168
  %v6159 = vunpack.c.0.s8 %v6158
  %v6160 = vlaneseq
  %v6161 = vshrl.u32 %v6160, 7
  %v6162 = vsub.s32 %v6159, %v6161
  %v6163 = vrot.slane %v6053, %v6162
  %v6164 = vcombine.high %v6163, %v6163
  %v6166 = vunpack.c.l.s4 1966171168
  %v6167 = vunpack.c.0.s8 %v6166
  %v6168 = vlaneseq
  %v6169 = vshrl.u32 %v6168, 7
  %v6170 = vsub.s32 %v6167, %v6169
  %v6171 = vrot.slane %v6163, %v6170
  %v6173 = vunpack.c.l.s4 1966171168
  %v6174 = vunpack.c.0.s8 %v6173
  %v6175 = vlaneseq
  %v6176 = vshrl.u32 %v6175, 7
  %v6177 = vsub.s32 %v6174, %v6176
  %v6178 = vrot.slane %v6164, %v6177
  %v6179 = vcombine.high %v6171, %v6171
  %v6180 = vcombine.high %v6178, %v6178
  %v6182 = vunpack.c.l.s4 1966171168
  %v6183 = vunpack.c.0.s8 %v6182
  %v6184 = vlaneseq
  %v6185 = vshrl.u32 %v6184, 7
  %v6186 = vsub.s32 %v6183, %v6185
  %v6187 = vrot.slane %v6054, %v6186
  %v6188 = vcombine.high %v6187, %v6187
  %v6190 = vunpack.c.l.s4 1966171168
  %v6191 = vunpack.c.0.s8 %v6190
  %v6192 = vlaneseq
  %v6193 = vshrl.u32 %v6192, 7
  %v6194 = vsub.s32 %v6191, %v6193
  %v6195 = vrot.slane %v6187, %v6194
  %v6197 = vunpack.c.l.s4 1966171168
  %v6198 = vunpack.c.0.s8 %v6197
  %v6199 = vlaneseq
  %v6200 = vshrl.u32 %v6199, 7
  %v6201 = vsub.s32 %v6198, %v6200
  %v6202 = vrot.slane %v6188, %v6201
  %v6203 = vcombine.high %v6195, %v6195
  %v6204 = vcombine.high %v6202, %v6202
  %v6205 = vunpack.i.l.s16 %v6082
  %v6206 = vunpack.i.h.s16 %v6082
  %v6207 = vunpack.i.l.s16 %v6083
  %v6208 = vunpack.i.h.s16 %v6083
  %v6209 = vunpack.i.l.s16 %v6084
  %v6210 = vunpack.i.l.s16 %v6106
  %v6211 = vunpack.i.h.s16 %v6106
  %v6212 = vunpack.i.l.s16 %v6107
  %v6213 = vunpack.i.h.s16 %v6107
  %v6214 = vunpack.i.l.s16 %v6108
  %v6215 = vunpack.i.l.s16 %v6130
  %v6216 = vunpack.i.h.s16 %v6130
  %v6217 = vunpack.i.l.s16 %v6131
  %v6218 = vunpack.i.h.s16 %v6131
  %v6219 = vunpack.i.l.s16 %v6132
  %v6220 = vunpack.i.l.s16 %v6154
  %v6221 = vunpack.i.h.s16 %v6154
  %v6222 = vunpack.i.l.s16 %v6155
  %v6223 = vunpack.i.h.s16 %v6155
  %v6224 = vunpack.i.l.s16 %v6156
  %v6225 = vunpack.i.l.s16 %v6178
  %v6226 = vunpack.i.h.s16 %v6178
  %v6227 = vunpack.i.l.s16 %v6179
  %v6228 = vunpack.i.h.s16 %v6179
  %v6229 = vunpack.i.l.s16 %v6180
  %v6230 = vunpack.i.l.s16 %v6202
  %v6231 = vunpack.i.h.s16 %v6202
  %v6232 = vunpack.i.l.s16 %v6203
  %v6233 = vunpack.i.h.s16 %v6203
  %v6234 = vunpack.i.l.s16 %v6204
  %s6235 = scalar_lea.vmem %s1, 112
  %v6236 = vld [vmem:[%s6235] sm:$0xf]
  %v6237 = vld [vmem:[%s6235 + $0x4] sm:$0xf]
  %v6238 = vpack.i.b16 %v6206, %v6205
  %v6239 = vpack.i.b16 %v6208, %v6207
  %v6240 = vpack.i.b16 %v6210, %v6209
  %v6241 = vpack.i.b16 %v6212, %v6211
  %v6242 = vpack.i.b16 %v6214, %v6213
  %v6243 = vpack.i.b16 %v6216, %v6215
  %v6244 = vpack.i.b16 %v6218, %v6217
  %v6245 = vpack.i.b16 %v6220, %v6219
  %v6246 = vpack.i.b16 %v6222, %v6221
  %v6247 = vpack.i.b16 %v6224, %v6223
  %v6248 = vpack.i.b16 %v6226, %v6225
  %v6249 = vpack.i.b16 %v6228, %v6227
  %v6250 = vpack.i.b16 %v6230, %v6229
  %v6251 = vpack.i.b16 %v6232, %v6231
  %v6252 = vpack.i.b16 %v6234, %v6233
  %v6253 = vcombine.low %v6238, %v6239
  %v6254 = vcombine.low %v6240, %v6241
  %v6255 = vcombine.low %v6242, %v6243
  %v6256 = vcombine.low %v6244, %v6245
  %v6258 = vunpack.c.l.s4 1966171168
  %v6259 = vunpack.c.0.s8 %v6258
  %v6260 = vlaneseq
  %v6261 = vshrl.u32 %v6260, 7
  %v6262 = vsub.s32 %v6259, %v6261
  %v6263 = vrot.slane %v6253, %v6262
  %v6265 = vunpack.c.l.s4 1966171168
  %v6266 = vunpack.c.0.s8 %v6265
  %v6267 = vlaneseq
  %v6268 = vshrl.u32 %v6267, 7
  %v6269 = vsub.s32 %v6266, %v6268
  %v6270 = vrot.slane %v6254, %v6269
  %v6272 = vunpack.c.l.s4 1966171168
  %v6273 = vunpack.c.0.s8 %v6272
  %v6274 = vlaneseq
  %v6275 = vshrl.u32 %v6274, 7
  %v6276 = vsub.s32 %v6273, %v6275
  %v6277 = vrot.slane %v6255, %v6276
  %v6279 = vunpack.c.l.s4 1966171168
  %v6280 = vunpack.c.0.s8 %v6279
  %v6281 = vlaneseq
  %v6282 = vshrl.u32 %v6281, 7
  %v6283 = vsub.s32 %v6280, %v6282
  %v6284 = vrot.slane %v6256, %v6283
  %v6285 = vcombine.low %v6263, %v6270
  %v6286 = vcombine.low %v6277, %v6284
  %v6288 = vunpack.c.l.s4 1966171168
  %v6289 = vunpack.c.0.s8 %v6288
  %v6290 = vlaneseq
  %v6291 = vshrl.u32 %v6290, 7
  %v6292 = vsub.s32 %v6289, %v6291
  %v6293 = vrot.slane %v6285, %v6292
  %v6295 = vunpack.c.l.s4 1966171168
  %v6296 = vunpack.c.0.s8 %v6295
  %v6297 = vlaneseq
  %v6298 = vshrl.u32 %v6297, 7
  %v6299 = vsub.s32 %v6296, %v6298
  %v6300 = vrot.slane %v6286, %v6299
  %v6301 = vcombine.low %v6293, %v6300
  %v6302 = vcombine.low %v6246, %v6247
  %v6303 = vcombine.low %v6248, %v6249
  %v6304 = vcombine.low %v6250, %v6251
  %v6306 = vunpack.c.l.s4 1966171168
  %v6307 = vunpack.c.0.s8 %v6306
  %v6308 = vlaneseq
  %v6309 = vshrl.u32 %v6308, 7
  %v6310 = vsub.s32 %v6307, %v6309
  %v6311 = vrot.slane %v6302, %v6310
  %v6313 = vunpack.c.l.s4 1966171168
  %v6314 = vunpack.c.0.s8 %v6313
  %v6315 = vlaneseq
  %v6316 = vshrl.u32 %v6315, 7
  %v6317 = vsub.s32 %v6314, %v6316
  %v6318 = vrot.slane %v6303, %v6317
  %v6320 = vunpack.c.l.s4 1966171168
  %v6321 = vunpack.c.0.s8 %v6320
  %v6322 = vlaneseq
  %v6323 = vshrl.u32 %v6322, 7
  %v6324 = vsub.s32 %v6321, %v6323
  %v6325 = vrot.slane %v6304, %v6324
  %v6327 = vunpack.c.l.s4 1966171168
  %v6328 = vunpack.c.0.s8 %v6327
  %v6329 = vlaneseq
  %v6330 = vshrl.u32 %v6329, 7
  %v6331 = vsub.s32 %v6328, %v6330
  %v6332 = vrot.slane %v6252, %v6331
  %v6333 = vcombine.low %v6311, %v6318
  %v6334 = vcombine.low %v6325, %v6332
  %v6336 = vunpack.c.l.s4 1966171168
  %v6337 = vunpack.c.0.s8 %v6336
  %v6338 = vlaneseq
  %v6339 = vshrl.u32 %v6338, 7
  %v6340 = vsub.s32 %v6337, %v6339
  %v6341 = vrot.slane %v6333, %v6340
  %v6343 = vunpack.c.l.s4 1966171168
  %v6344 = vunpack.c.0.s8 %v6343
  %v6345 = vlaneseq
  %v6346 = vshrl.u32 %v6345, 7
  %v6347 = vsub.s32 %v6344, %v6346
  %v6348 = vrot.slane %v6334, %v6347
  %v6349 = vcombine.low %v6341, %v6348
  %v6352 = vunpack.c.l.b16 %v6236
  %v6353 = vunpack.c.l.b16 %v6237
  %v6354 = vpack.c.b16 %v6353, %v6352
  %v6357 = vsel %vm326, %v6301, 0
  %v6360 = vsel %vm326, %v6349, 0
  %6362 = vmatprep.subr.bf16.mxu0 0
  %6363 = vmatpush1.bf16.msra.mxu0 %v6354
  %6364 = vmatprep.subr.bf16.mxu0 0
  %6365 = vmatpush1.bf16.msra.mxu0 0
  %6366 = vmatprep.subr.bf16.mxu0 0
  %6367 = vmatpush1.bf16.msra.mxu0 0
  %6368 = vmatprep.subr.bf16.mxu0 0
  %6369 = vmatpush1.bf16.msra.mxu0 0
  %6370 = vmatprep.subr.bf16.mxu0 0
  %6371 = vmatpush1.bf16.msra.mxu0 0
  %6372 = vmatprep.subr.bf16.mxu0 0
  %6373 = vmatpush1.bf16.msra.mxu0 0
  %6374 = vmatprep.subr.bf16.mxu0 0
  %6375 = vmatpush1.bf16.msra.mxu0 0
  %6376 = vmatprep.subr.bf16.mxu0 0
  %6377 = vmatpush1.bf16.msra.mxu0 0
  %6378 = vmatprep.subr.bf16.mxu0 0
  %6379 = vmatpush1.bf16.msra.mxu0 0
  %6380 = vmatprep.subr.bf16.mxu0 0
  %6381 = vmatpush1.bf16.msra.mxu0 0
  %6382 = vmatprep.subr.bf16.mxu0 0
  %6383 = vmatpush1.bf16.msra.mxu0 0
  %6384 = vmatprep.subr.bf16.mxu0 0
  %6385 = vmatpush1.bf16.msra.mxu0 0
  %6386 = vmatprep.subr.bf16.mxu0 0
  %6387 = vmatpush1.bf16.msra.mxu0 0
  %6388 = vmatprep.subr.bf16.mxu0 0
  %6389 = vmatpush1.bf16.msra.mxu0 0
  %6390 = vmatprep.subr.bf16.mxu0 0
  %6391 = vmatpush1.bf16.msra.mxu0 0
  %6392 = vmatprep.subr.bf16.mxu0 0
  %6393 = vmatpush1.bf16.msra.mxu0 0
  %6394 = vmatprep.mubr.bf16.mxu0 0
  %6395 = vmatmul.mubr.bf16.gmra.mrb[0].mxu0 %v6357
  %v6396 = vpop.f32.mrb[0].mxu0
  %v6397 = vadd.f32 0.0, %v6396
  %v6398 = vpop.f32.mrb[0].mxu0
  %v6399 = vpop.f32.mrb[0].mxu0
  %v6400 = vadd.f32 0.0, %v6399
  %v6401 = vpop.f32.mrb[0].mxu0
  %6402 = vmatprep.mubr.bf16.mxu0 0
  %6403 = vmatmul.mubr.bf16.gmra.mrb[0].mxu0 %v6360
  %v6404 = vpop.f32.mrb[0].mxu0
  %v6405 = vadd.f32 0.0, %v6404
  %v6406 = vpop.f32.mrb[0].mxu0
  %v6407 = vpop.f32.mrb[0].mxu0
  %v6408 = vadd.f32 0.0, %v6407
  %v6409 = vpop.f32.mrb[0].mxu0
  %6410 = vdwg.mxu0
  %v6411 = vadd.f32 %v6035, %v6397
  %v6412 = vadd.f32 %v6038, %v6400
  %v6413 = vadd.f32 %v6043, %v6405
  %v6414 = vadd.f32 %v6046, %v6408
  %v6415 = vld [vmem:[%s16] sm:$0x7]
  %v6416 = vld [vmem:[%s16 + $0x4] sm:$0x7]
  %v6417 = vld [vmem:[%s16 + $0x8] sm:$0x7]
  %v6418 = vld [vmem:[%s16 + $0x14] sm:$0x7]
  %v6419 = vld [vmem:[%s16 + $0x18] sm:$0x7]
  %v6420 = vld [vmem:[%s16 + $0x1c] sm:$0x7]
  %v6428 = vunpack.c.l.s4 1966171168
  %v6429 = vunpack.c.0.s8 %v6428
  %v6430 = vlaneseq
  %v6431 = vshrl.u32 %v6430, 7
  %v6432 = vsub.s32 %v6429, %v6431
  %v6433 = vrot.slane %v6415, %v6432
  %v6434 = vcombine.high %v6433, %v6433
  %v6436 = vunpack.c.l.s4 1966171168
  %v6437 = vunpack.c.0.s8 %v6436
  %v6438 = vlaneseq
  %v6439 = vshrl.u32 %v6438, 7
  %v6440 = vsub.s32 %v6437, %v6439
  %v6441 = vrot.slane %v6433, %v6440
  %v6443 = vunpack.c.l.s4 1966171168
  %v6444 = vunpack.c.0.s8 %v6443
  %v6445 = vlaneseq
  %v6446 = vshrl.u32 %v6445, 7
  %v6447 = vsub.s32 %v6444, %v6446
  %v6448 = vrot.slane %v6434, %v6447
  %v6449 = vcombine.high %v6441, %v6441
  %v6451 = vunpack.c.l.s4 1966171168
  %v6452 = vunpack.c.0.s8 %v6451
  %v6453 = vlaneseq
  %v6454 = vshrl.u32 %v6453, 7
  %v6455 = vsub.s32 %v6452, %v6454
  %v6456 = vrot.slane %v6416, %v6455
  %v6457 = vcombine.high %v6456, %v6456
  %v6459 = vunpack.c.l.s4 1966171168
  %v6460 = vunpack.c.0.s8 %v6459
  %v6461 = vlaneseq
  %v6462 = vshrl.u32 %v6461, 7
  %v6463 = vsub.s32 %v6460, %v6462
  %v6464 = vrot.slane %v6456, %v6463
  %v6466 = vunpack.c.l.s4 1966171168
  %v6467 = vunpack.c.0.s8 %v6466
  %v6468 = vlaneseq
  %v6469 = vshrl.u32 %v6468, 7
  %v6470 = vsub.s32 %v6467, %v6469
  %v6471 = vrot.slane %v6457, %v6470
  %v6472 = vcombine.high %v6464, %v6464
  %v6474 = vunpack.c.l.s4 1966171168
  %v6475 = vunpack.c.0.s8 %v6474
  %v6476 = vlaneseq
  %v6477 = vshrl.u32 %v6476, 7
  %v6478 = vsub.s32 %v6475, %v6477
  %v6479 = vrot.slane %v6417, %v6478
  %v6480 = vcombine.high %v6479, %v6479
  %v6482 = vunpack.c.l.s4 1966171168
  %v6483 = vunpack.c.0.s8 %v6482
  %v6484 = vlaneseq
  %v6485 = vshrl.u32 %v6484, 7
  %v6486 = vsub.s32 %v6483, %v6485
  %v6487 = vrot.slane %v6479, %v6486
  %v6489 = vunpack.c.l.s4 1966171168
  %v6490 = vunpack.c.0.s8 %v6489
  %v6491 = vlaneseq
  %v6492 = vshrl.u32 %v6491, 7
  %v6493 = vsub.s32 %v6490, %v6492
  %v6494 = vrot.slane %v6480, %v6493
  %v6495 = vcombine.high %v6487, %v6487
  %v6497 = vunpack.c.l.s4 1966171168
  %v6498 = vunpack.c.0.s8 %v6497
  %v6499 = vlaneseq
  %v6500 = vshrl.u32 %v6499, 7
  %v6501 = vsub.s32 %v6498, %v6500
  %v6502 = vrot.slane %v6418, %v6501
  %v6503 = vcombine.high %v6502, %v6502
  %v6505 = vunpack.c.l.s4 1966171168
  %v6506 = vunpack.c.0.s8 %v6505
  %v6507 = vlaneseq
  %v6508 = vshrl.u32 %v6507, 7
  %v6509 = vsub.s32 %v6506, %v6508
  %v6510 = vrot.slane %v6502, %v6509
  %v6512 = vunpack.c.l.s4 1966171168
  %v6513 = vunpack.c.0.s8 %v6512
  %v6514 = vlaneseq
  %v6515 = vshrl.u32 %v6514, 7
  %v6516 = vsub.s32 %v6513, %v6515
  %v6517 = vrot.slane %v6503, %v6516
  %v6518 = vcombine.high %v6510, %v6510
  %v6520 = vunpack.c.l.s4 1966171168
  %v6521 = vunpack.c.0.s8 %v6520
  %v6522 = vlaneseq
  %v6523 = vshrl.u32 %v6522, 7
  %v6524 = vsub.s32 %v6521, %v6523
  %v6525 = vrot.slane %v6419, %v6524
  %v6526 = vcombine.high %v6525, %v6525
  %v6528 = vunpack.c.l.s4 1966171168
  %v6529 = vunpack.c.0.s8 %v6528
  %v6530 = vlaneseq
  %v6531 = vshrl.u32 %v6530, 7
  %v6532 = vsub.s32 %v6529, %v6531
  %v6533 = vrot.slane %v6525, %v6532
  %v6535 = vunpack.c.l.s4 1966171168
  %v6536 = vunpack.c.0.s8 %v6535
  %v6537 = vlaneseq
  %v6538 = vshrl.u32 %v6537, 7
  %v6539 = vsub.s32 %v6536, %v6538
  %v6540 = vrot.slane %v6526, %v6539
  %v6541 = vcombine.high %v6533, %v6533
  %v6543 = vunpack.c.l.s4 1966171168
  %v6544 = vunpack.c.0.s8 %v6543
  %v6545 = vlaneseq
  %v6546 = vshrl.u32 %v6545, 7
  %v6547 = vsub.s32 %v6544, %v6546
  %v6548 = vrot.slane %v6420, %v6547
  %v6549 = vcombine.high %v6548, %v6548
  %v6551 = vunpack.c.l.s4 1966171168
  %v6552 = vunpack.c.0.s8 %v6551
  %v6553 = vlaneseq
  %v6554 = vshrl.u32 %v6553, 7
  %v6555 = vsub.s32 %v6552, %v6554
  %v6556 = vrot.slane %v6548, %v6555
  %v6558 = vunpack.c.l.s4 1966171168
  %v6559 = vunpack.c.0.s8 %v6558
  %v6560 = vlaneseq
  %v6561 = vshrl.u32 %v6560, 7
  %v6562 = vsub.s32 %v6559, %v6561
  %v6563 = vrot.slane %v6549, %v6562
  %v6564 = vcombine.high %v6556, %v6556
  %v6565 = vunpack.i.h.s16 %v6441
  %v6566 = vunpack.i.l.s16 %v6448
  %v6567 = vunpack.i.h.s16 %v6448
  %v6568 = vunpack.i.l.s16 %v6449
  %v6569 = vunpack.i.h.s16 %v6449
  %v6570 = vunpack.i.h.s16 %v6464
  %v6571 = vunpack.i.l.s16 %v6471
  %v6572 = vunpack.i.h.s16 %v6471
  %v6573 = vunpack.i.l.s16 %v6472
  %v6574 = vunpack.i.h.s16 %v6472
  %v6575 = vunpack.i.h.s16 %v6487
  %v6576 = vunpack.i.l.s16 %v6494
  %v6577 = vunpack.i.h.s16 %v6494
  %v6578 = vunpack.i.l.s16 %v6495
  %v6579 = vunpack.i.h.s16 %v6495
  %v6580 = vunpack.i.h.s16 %v6510
  %v6581 = vunpack.i.l.s16 %v6517
  %v6582 = vunpack.i.h.s16 %v6517
  %v6583 = vunpack.i.l.s16 %v6518
  %v6584 = vunpack.i.h.s16 %v6518
  %v6585 = vunpack.i.h.s16 %v6533
  %v6586 = vunpack.i.l.s16 %v6540
  %v6587 = vunpack.i.h.s16 %v6540
  %v6588 = vunpack.i.l.s16 %v6541
  %v6589 = vunpack.i.h.s16 %v6541
  %v6590 = vunpack.i.h.s16 %v6556
  %v6591 = vunpack.i.l.s16 %v6563
  %v6592 = vunpack.i.h.s16 %v6563
  %v6593 = vunpack.i.l.s16 %v6564
  %v6594 = vunpack.i.h.s16 %v6564
  %s6595 = scalar_lea.vmem %s1, 120
  %v6596 = vld [vmem:[%s6595] sm:$0xf]
  %v6597 = vld [vmem:[%s6595 + $0x4] sm:$0xf]
  %v6598 = vpack.i.b16 %v6566, %v6565
  %v6599 = vpack.i.b16 %v6568, %v6567
  %v6600 = vpack.i.b16 %v6570, %v6569
  %v6601 = vpack.i.b16 %v6572, %v6571
  %v6602 = vpack.i.b16 %v6574, %v6573
  %v6603 = vpack.i.b16 %v6576, %v6575
  %v6604 = vpack.i.b16 %v6578, %v6577
  %v6605 = vpack.i.b16 %v6580, %v6579
  %v6606 = vpack.i.b16 %v6582, %v6581
  %v6607 = vpack.i.b16 %v6584, %v6583
  %v6608 = vpack.i.b16 %v6586, %v6585
  %v6609 = vpack.i.b16 %v6588, %v6587
  %v6610 = vpack.i.b16 %v6590, %v6589
  %v6611 = vpack.i.b16 %v6592, %v6591
  %v6612 = vpack.i.b16 %v6594, %v6593
  %v6613 = vcombine.low %v6598, %v6599
  %v6614 = vcombine.low %v6600, %v6601
  %v6615 = vcombine.low %v6602, %v6603
  %v6616 = vcombine.low %v6604, %v6605
  %v6618 = vunpack.c.l.s4 1966171168
  %v6619 = vunpack.c.0.s8 %v6618
  %v6620 = vlaneseq
  %v6621 = vshrl.u32 %v6620, 7
  %v6622 = vsub.s32 %v6619, %v6621
  %v6623 = vrot.slane %v6613, %v6622
  %v6625 = vunpack.c.l.s4 1966171168
  %v6626 = vunpack.c.0.s8 %v6625
  %v6627 = vlaneseq
  %v6628 = vshrl.u32 %v6627, 7
  %v6629 = vsub.s32 %v6626, %v6628
  %v6630 = vrot.slane %v6614, %v6629
  %v6632 = vunpack.c.l.s4 1966171168
  %v6633 = vunpack.c.0.s8 %v6632
  %v6634 = vlaneseq
  %v6635 = vshrl.u32 %v6634, 7
  %v6636 = vsub.s32 %v6633, %v6635
  %v6637 = vrot.slane %v6615, %v6636
  %v6639 = vunpack.c.l.s4 1966171168
  %v6640 = vunpack.c.0.s8 %v6639
  %v6641 = vlaneseq
  %v6642 = vshrl.u32 %v6641, 7
  %v6643 = vsub.s32 %v6640, %v6642
  %v6644 = vrot.slane %v6616, %v6643
  %v6645 = vcombine.low %v6623, %v6630
  %v6646 = vcombine.low %v6637, %v6644
  %v6648 = vunpack.c.l.s4 1966171168
  %v6649 = vunpack.c.0.s8 %v6648
  %v6650 = vlaneseq
  %v6651 = vshrl.u32 %v6650, 7
  %v6652 = vsub.s32 %v6649, %v6651
  %v6653 = vrot.slane %v6645, %v6652
  %v6655 = vunpack.c.l.s4 1966171168
  %v6656 = vunpack.c.0.s8 %v6655
  %v6657 = vlaneseq
  %v6658 = vshrl.u32 %v6657, 7
  %v6659 = vsub.s32 %v6656, %v6658
  %v6660 = vrot.slane %v6646, %v6659
  %v6661 = vcombine.low %v6653, %v6660
  %v6662 = vcombine.low %v6606, %v6607
  %v6663 = vcombine.low %v6608, %v6609
  %v6664 = vcombine.low %v6610, %v6611
  %v6666 = vunpack.c.l.s4 1966171168
  %v6667 = vunpack.c.0.s8 %v6666
  %v6668 = vlaneseq
  %v6669 = vshrl.u32 %v6668, 7
  %v6670 = vsub.s32 %v6667, %v6669
  %v6671 = vrot.slane %v6662, %v6670
  %v6673 = vunpack.c.l.s4 1966171168
  %v6674 = vunpack.c.0.s8 %v6673
  %v6675 = vlaneseq
  %v6676 = vshrl.u32 %v6675, 7
  %v6677 = vsub.s32 %v6674, %v6676
  %v6678 = vrot.slane %v6663, %v6677
  %v6680 = vunpack.c.l.s4 1966171168
  %v6681 = vunpack.c.0.s8 %v6680
  %v6682 = vlaneseq
  %v6683 = vshrl.u32 %v6682, 7
  %v6684 = vsub.s32 %v6681, %v6683
  %v6685 = vrot.slane %v6664, %v6684
  %v6687 = vunpack.c.l.s4 1966171168
  %v6688 = vunpack.c.0.s8 %v6687
  %v6689 = vlaneseq
  %v6690 = vshrl.u32 %v6689, 7
  %v6691 = vsub.s32 %v6688, %v6690
  %v6692 = vrot.slane %v6612, %v6691
  %v6693 = vcombine.low %v6671, %v6678
  %v6694 = vcombine.low %v6685, %v6692
  %v6696 = vunpack.c.l.s4 1966171168
  %v6697 = vunpack.c.0.s8 %v6696
  %v6698 = vlaneseq
  %v6699 = vshrl.u32 %v6698, 7
  %v6700 = vsub.s32 %v6697, %v6699
  %v6701 = vrot.slane %v6693, %v6700
  %v6703 = vunpack.c.l.s4 1966171168
  %v6704 = vunpack.c.0.s8 %v6703
  %v6705 = vlaneseq
  %v6706 = vshrl.u32 %v6705, 7
  %v6707 = vsub.s32 %v6704, %v6706
  %v6708 = vrot.slane %v6694, %v6707
  %v6709 = vcombine.low %v6701, %v6708
  %v6712 = vunpack.c.l.b16 %v6596
  %v6713 = vunpack.c.l.b16 %v6597
  %v6714 = vpack.c.b16 %v6713, %v6712
  %v6717 = vsel %vm326, %v6661, 0
  %v6720 = vsel %vm326, %v6709, 0
  %6722 = vmatprep.subr.bf16.mxu0 0
  %6723 = vmatpush1.bf16.msra.mxu0 %v6714
  %6724 = vmatprep.subr.bf16.mxu0 0
  %6725 = vmatpush1.bf16.msra.mxu0 0
  %6726 = vmatprep.subr.bf16.mxu0 0
  %6727 = vmatpush1.bf16.msra.mxu0 0
  %6728 = vmatprep.subr.bf16.mxu0 0
  %6729 = vmatpush1.bf16.msra.mxu0 0
  %6730 = vmatprep.subr.bf16.mxu0 0
  %6731 = vmatpush1.bf16.msra.mxu0 0
  %6732 = vmatprep.subr.bf16.mxu0 0
  %6733 = vmatpush1.bf16.msra.mxu0 0
  %6734 = vmatprep.subr.bf16.mxu0 0
  %6735 = vmatpush1.bf16.msra.mxu0 0
  %6736 = vmatprep.subr.bf16.mxu0 0
  %6737 = vmatpush1.bf16.msra.mxu0 0
  %6738 = vmatprep.subr.bf16.mxu0 0
  %6739 = vmatpush1.bf16.msra.mxu0 0
  %6740 = vmatprep.subr.bf16.mxu0 0
  %6741 = vmatpush1.bf16.msra.mxu0 0
  %6742 = vmatprep.subr.bf16.mxu0 0
  %6743 = vmatpush1.bf16.msra.mxu0 0
  %6744 = vmatprep.subr.bf16.mxu0 0
  %6745 = vmatpush1.bf16.msra.mxu0 0
  %6746 = vmatprep.subr.bf16.mxu0 0
  %6747 = vmatpush1.bf16.msra.mxu0 0
  %6748 = vmatprep.subr.bf16.mxu0 0
  %6749 = vmatpush1.bf16.msra.mxu0 0
  %6750 = vmatprep.subr.bf16.mxu0 0
  %6751 = vmatpush1.bf16.msra.mxu0 0
  %6752 = vmatprep.subr.bf16.mxu0 0
  %6753 = vmatpush1.bf16.msra.mxu0 0
  %6754 = vmatprep.mubr.bf16.mxu0 0
  %6755 = vmatmul.mubr.bf16.gmra.mrb[0].mxu0 %v6717
  %v6756 = vpop.f32.mrb[0].mxu0
  %v6757 = vadd.f32 0.0, %v6756
  %v6758 = vpop.f32.mrb[0].mxu0
  %v6759 = vpop.f32.mrb[0].mxu0
  %v6760 = vadd.f32 0.0, %v6759
  %v6761 = vpop.f32.mrb[0].mxu0
  %6762 = vmatprep.mubr.bf16.mxu0 0
  %6763 = vmatmul.mubr.bf16.gmra.mrb[0].mxu0 %v6720
  %v6764 = vpop.f32.mrb[0].mxu0
  %v6765 = vadd.f32 0.0, %v6764
  %v6766 = vpop.f32.mrb[0].mxu0
  %v6767 = vpop.f32.mrb[0].mxu0
  %v6768 = vadd.f32 0.0, %v6767
  %v6769 = vpop.f32.mrb[0].mxu0
  %6770 = vdwg.mxu0
  %v6771 = vadd.f32 %v6411, %v6757
  %v6772 = vadd.f32 %v6412, %v6760
  %v6773 = vadd.f32 %v6413, %v6765
  %v6774 = vadd.f32 %v6414, %v6768
  %v6775 = vadd.f32 %v6771, %v1279
  %v6776 = vadd.f32 %v6772, %v1279
  %v6777 = vadd.f32 %v6773, %v1279
  %v6778 = vadd.f32 %v6774, %v1279
  %v6783 = vcombine.high %v6775, %v6775
  %v6785 = vunpack.c.l.s4 1966171168
  %v6786 = vunpack.c.0.s8 %v6785
  %v6787 = vlaneseq
  %v6788 = vshrl.u32 %v6787, 7
  %v6789 = vsub.s32 %v6786, %v6788
  %v6790 = vrot.slane %v6775, %v6789
  %v6792 = vunpack.c.l.s4 1966171168
  %v6793 = vunpack.c.0.s8 %v6792
  %v6794 = vlaneseq
  %v6795 = vshrl.u32 %v6794, 7
  %v6796 = vsub.s32 %v6793, %v6795
  %v6797 = vrot.slane %v6783, %v6796
  %v6798 = vcombine.high %v6790, %v6790
  %v6799 = vcombine.high %v6797, %v6797
  %v6801 = vunpack.c.l.s4 1966171168
  %v6802 = vunpack.c.0.s8 %v6801
  %v6803 = vlaneseq
  %v6804 = vshrl.u32 %v6803, 7
  %v6805 = vsub.s32 %v6802, %v6804
  %v6806 = vrot.slane %v6790, %v6805
  %v6808 = vunpack.c.l.s4 1966171168
  %v6809 = vunpack.c.0.s8 %v6808
  %v6810 = vlaneseq
  %v6811 = vshrl.u32 %v6810, 7
  %v6812 = vsub.s32 %v6809, %v6811
  %v6813 = vrot.slane %v6797, %v6812
  %v6815 = vunpack.c.l.s4 1966171168
  %v6816 = vunpack.c.0.s8 %v6815
  %v6817 = vlaneseq
  %v6818 = vshrl.u32 %v6817, 7
  %v6819 = vsub.s32 %v6816, %v6818
  %v6820 = vrot.slane %v6798, %v6819
  %v6822 = vunpack.c.l.s4 1966171168
  %v6823 = vunpack.c.0.s8 %v6822
  %v6824 = vlaneseq
  %v6825 = vshrl.u32 %v6824, 7
  %v6826 = vsub.s32 %v6823, %v6825
  %v6827 = vrot.slane %v6799, %v6826
  %v6828 = vcombine.high %v6806, %v6806
  %v6829 = vcombine.high %v6813, %v6813
  %v6830 = vcombine.high %v6820, %v6820
  %v6831 = vcombine.high %v6827, %v6827
  %v6832 = vcombine.high %v6776, %v6776
  %v6834 = vunpack.c.l.s4 1966171168
  %v6835 = vunpack.c.0.s8 %v6834
  %v6836 = vlaneseq
  %v6837 = vshrl.u32 %v6836, 7
  %v6838 = vsub.s32 %v6835, %v6837
  %v6839 = vrot.slane %v6776, %v6838
  %v6841 = vunpack.c.l.s4 1966171168
  %v6842 = vunpack.c.0.s8 %v6841
  %v6843 = vlaneseq
  %v6844 = vshrl.u32 %v6843, 7
  %v6845 = vsub.s32 %v6842, %v6844
  %v6846 = vrot.slane %v6832, %v6845
  %v6847 = vcombine.high %v6839, %v6839
  %v6848 = vcombine.high %v6846, %v6846
  %v6850 = vunpack.c.l.s4 1966171168
  %v6851 = vunpack.c.0.s8 %v6850
  %v6852 = vlaneseq
  %v6853 = vshrl.u32 %v6852, 7
  %v6854 = vsub.s32 %v6851, %v6853
  %v6855 = vrot.slane %v6839, %v6854
  %v6857 = vunpack.c.l.s4 1966171168
  %v6858 = vunpack.c.0.s8 %v6857
  %v6859 = vlaneseq
  %v6860 = vshrl.u32 %v6859, 7
  %v6861 = vsub.s32 %v6858, %v6860
  %v6862 = vrot.slane %v6846, %v6861
  %v6864 = vunpack.c.l.s4 1966171168
  %v6865 = vunpack.c.0.s8 %v6864
  %v6866 = vlaneseq
  %v6867 = vshrl.u32 %v6866, 7
  %v6868 = vsub.s32 %v6865, %v6867
  %v6869 = vrot.slane %v6847, %v6868
  %v6871 = vunpack.c.l.s4 1966171168
  %v6872 = vunpack.c.0.s8 %v6871
  %v6873 = vlaneseq
  %v6874 = vshrl.u32 %v6873, 7
  %v6875 = vsub.s32 %v6872, %v6874
  %v6876 = vrot.slane %v6848, %v6875
  %v6877 = vcombine.high %v6855, %v6855
  %v6878 = vcombine.high %v6862, %v6862
  %v6879 = vcombine.high %v6869, %v6869
  %v6880 = vcombine.high %v6876, %v6876
  %v6881 = vcombine.high %v6777, %v6777
  %v6883 = vunpack.c.l.s4 1966171168
  %v6884 = vunpack.c.0.s8 %v6883
  %v6885 = vlaneseq
  %v6886 = vshrl.u32 %v6885, 7
  %v6887 = vsub.s32 %v6884, %v6886
  %v6888 = vrot.slane %v6777, %v6887
  %v6890 = vunpack.c.l.s4 1966171168
  %v6891 = vunpack.c.0.s8 %v6890
  %v6892 = vlaneseq
  %v6893 = vshrl.u32 %v6892, 7
  %v6894 = vsub.s32 %v6891, %v6893
  %v6895 = vrot.slane %v6881, %v6894
  %v6896 = vcombine.high %v6888, %v6888
  %v6897 = vcombine.high %v6895, %v6895
  %v6899 = vunpack.c.l.s4 1966171168
  %v6900 = vunpack.c.0.s8 %v6899
  %v6901 = vlaneseq
  %v6902 = vshrl.u32 %v6901, 7
  %v6903 = vsub.s32 %v6900, %v6902
  %v6904 = vrot.slane %v6888, %v6903
  %v6906 = vunpack.c.l.s4 1966171168
  %v6907 = vunpack.c.0.s8 %v6906
  %v6908 = vlaneseq
  %v6909 = vshrl.u32 %v6908, 7
  %v6910 = vsub.s32 %v6907, %v6909
  %v6911 = vrot.slane %v6895, %v6910
  %v6913 = vunpack.c.l.s4 1966171168
  %v6914 = vunpack.c.0.s8 %v6913
  %v6915 = vlaneseq
  %v6916 = vshrl.u32 %v6915, 7
  %v6917 = vsub.s32 %v6914, %v6916
  %v6918 = vrot.slane %v6896, %v6917
  %v6920 = vunpack.c.l.s4 1966171168
  %v6921 = vunpack.c.0.s8 %v6920
  %v6922 = vlaneseq
  %v6923 = vshrl.u32 %v6922, 7
  %v6924 = vsub.s32 %v6921, %v6923
  %v6925 = vrot.slane %v6897, %v6924
  %v6926 = vcombine.high %v6904, %v6904
  %v6927 = vcombine.high %v6911, %v6911
  %v6928 = vcombine.high %v6918, %v6918
  %v6929 = vcombine.high %v6925, %v6925
  %v6930 = vcombine.high %v6778, %v6778
  %v6932 = vunpack.c.l.s4 1966171168
  %v6933 = vunpack.c.0.s8 %v6932
  %v6934 = vlaneseq
  %v6935 = vshrl.u32 %v6934, 7
  %v6936 = vsub.s32 %v6933, %v6935
  %v6937 = vrot.slane %v6778, %v6936
  %v6939 = vunpack.c.l.s4 1966171168
  %v6940 = vunpack.c.0.s8 %v6939
  %v6941 = vlaneseq
  %v6942 = vshrl.u32 %v6941, 7
  %v6943 = vsub.s32 %v6940, %v6942
  %v6944 = vrot.slane %v6930, %v6943
  %v6945 = vcombine.high %v6937, %v6937
  %v6946 = vcombine.high %v6944, %v6944
  %v6948 = vunpack.c.l.s4 1966171168
  %v6949 = vunpack.c.0.s8 %v6948
  %v6950 = vlaneseq
  %v6951 = vshrl.u32 %v6950, 7
  %v6952 = vsub.s32 %v6949, %v6951
  %v6953 = vrot.slane %v6937, %v6952
  %v6955 = vunpack.c.l.s4 1966171168
  %v6956 = vunpack.c.0.s8 %v6955
  %v6957 = vlaneseq
  %v6958 = vshrl.u32 %v6957, 7
  %v6959 = vsub.s32 %v6956, %v6958
  %v6960 = vrot.slane %v6944, %v6959
  %v6962 = vunpack.c.l.s4 1966171168
  %v6963 = vunpack.c.0.s8 %v6962
  %v6964 = vlaneseq
  %v6965 = vshrl.u32 %v6964, 7
  %v6966 = vsub.s32 %v6963, %v6965
  %v6967 = vrot.slane %v6945, %v6966
  %v6969 = vunpack.c.l.s4 1966171168
  %v6970 = vunpack.c.0.s8 %v6969
  %v6971 = vlaneseq
  %v6972 = vshrl.u32 %v6971, 7
  %v6973 = vsub.s32 %v6970, %v6972
  %v6974 = vrot.slane %v6946, %v6973
  %v6975 = vcombine.high %v6953, %v6953
  %v6976 = vcombine.high %v6967, %v6967
  %v6977 = vcombine.low %v6806, %v6820
  %v6978 = vcombine.low %v6828, %v6830
  %v6980 = vunpack.c.l.s4 1966171168
  %v6981 = vunpack.c.0.s8 %v6980
  %v6982 = vlaneseq
  %v6983 = vshrl.u32 %v6982, 7
  %v6984 = vsub.s32 %v6981, %v6983
  %v6985 = vrot.slane %v6977, %v6984
  %v6987 = vunpack.c.l.s4 1966171168
  %v6988 = vunpack.c.0.s8 %v6987
  %v6989 = vlaneseq
  %v6990 = vshrl.u32 %v6989, 7
  %v6991 = vsub.s32 %v6988, %v6990
  %v6992 = vrot.slane %v6978, %v6991
  %v6994 = vunpack.c.l.s4 1966171168
  %v6995 = vunpack.c.0.s8 %v6994
  %v6996 = vlaneseq
  %v6997 = vshrl.u32 %v6996, 7
  %v6998 = vsub.s32 %v6995, %v6997
  %v6999 = vrot.slane %v6813, %v6998
  %v7000 = vcombine.low %v6985, %v6992
  %v7002 = vunpack.c.l.s4 1966171168
  %v7003 = vunpack.c.0.s8 %v7002
  %v7004 = vlaneseq
  %v7005 = vshrl.u32 %v7004, 7
  %v7006 = vsub.s32 %v7003, %v7005
  %v7007 = vrot.slane %v7000, %v7006
  %v7009 = vunpack.c.l.s4 1966171168
  %v7010 = vunpack.c.0.s8 %v7009
  %v7011 = vlaneseq
  %v7012 = vshrl.u32 %v7011, 7
  %v7013 = vsub.s32 %v7010, %v7012
  %v7014 = vrot.slane %v6999, %v7013
  %v7015 = vcombine.low %v7007, %v7014
  %v7016 = vcombine.low %v6827, %v6829
  %v7017 = vcombine.low %v6831, %v6855
  %v7019 = vunpack.c.l.s4 1966171168
  %v7020 = vunpack.c.0.s8 %v7019
  %v7021 = vlaneseq
  %v7022 = vshrl.u32 %v7021, 7
  %v7023 = vsub.s32 %v7020, %v7022
  %v7024 = vrot.slane %v7016, %v7023
  %v7026 = vunpack.c.l.s4 1966171168
  %v7027 = vunpack.c.0.s8 %v7026
  %v7028 = vlaneseq
  %v7029 = vshrl.u32 %v7028, 7
  %v7030 = vsub.s32 %v7027, %v7029
  %v7031 = vrot.slane %v7017, %v7030
  %v7033 = vunpack.c.l.s4 1966171168
  %v7034 = vunpack.c.0.s8 %v7033
  %v7035 = vlaneseq
  %v7036 = vshrl.u32 %v7035, 7
  %v7037 = vsub.s32 %v7034, %v7036
  %v7038 = vrot.slane %v6869, %v7037
  %v7039 = vcombine.low %v7024, %v7031
  %v7041 = vunpack.c.l.s4 1966171168
  %v7042 = vunpack.c.0.s8 %v7041
  %v7043 = vlaneseq
  %v7044 = vshrl.u32 %v7043, 7
  %v7045 = vsub.s32 %v7042, %v7044
  %v7046 = vrot.slane %v7039, %v7045
  %v7048 = vunpack.c.l.s4 1966171168
  %v7049 = vunpack.c.0.s8 %v7048
  %v7050 = vlaneseq
  %v7051 = vshrl.u32 %v7050, 7
  %v7052 = vsub.s32 %v7049, %v7051
  %v7053 = vrot.slane %v7038, %v7052
  %v7054 = vcombine.low %v7046, %v7053
  %v7055 = vcombine.low %v6877, %v6879
  %v7056 = vcombine.low %v6862, %v6876
  %v7058 = vunpack.c.l.s4 1966171168
  %v7059 = vunpack.c.0.s8 %v7058
  %v7060 = vlaneseq
  %v7061 = vshrl.u32 %v7060, 7
  %v7062 = vsub.s32 %v7059, %v7061
  %v7063 = vrot.slane %v7055, %v7062
  %v7065 = vunpack.c.l.s4 1966171168
  %v7066 = vunpack.c.0.s8 %v7065
  %v7067 = vlaneseq
  %v7068 = vshrl.u32 %v7067, 7
  %v7069 = vsub.s32 %v7066, %v7068
  %v7070 = vrot.slane %v7056, %v7069
  %v7072 = vunpack.c.l.s4 1966171168
  %v7073 = vunpack.c.0.s8 %v7072
  %v7074 = vlaneseq
  %v7075 = vshrl.u32 %v7074, 7
  %v7076 = vsub.s32 %v7073, %v7075
  %v7077 = vrot.slane %v6878, %v7076
  %v7078 = vcombine.low %v7063, %v7070
  %v7080 = vunpack.c.l.s4 1966171168
  %v7081 = vunpack.c.0.s8 %v7080
  %v7082 = vlaneseq
  %v7083 = vshrl.u32 %v7082, 7
  %v7084 = vsub.s32 %v7081, %v7083
  %v7085 = vrot.slane %v7078, %v7084
  %v7087 = vunpack.c.l.s4 1966171168
  %v7088 = vunpack.c.0.s8 %v7087
  %v7089 = vlaneseq
  %v7090 = vshrl.u32 %v7089, 7
  %v7091 = vsub.s32 %v7088, %v7090
  %v7092 = vrot.slane %v7077, %v7091
  %v7093 = vcombine.low %v7085, %v7092
  %v7094 = vcombine.low %v6880, %v6904
  %v7095 = vcombine.low %v6918, %v6926
  %v7097 = vunpack.c.l.s4 1966171168
  %v7098 = vunpack.c.0.s8 %v7097
  %v7099 = vlaneseq
  %v7100 = vshrl.u32 %v7099, 7
  %v7101 = vsub.s32 %v7098, %v7100
  %v7102 = vrot.slane %v7094, %v7101
  %v7104 = vunpack.c.l.s4 1966171168
  %v7105 = vunpack.c.0.s8 %v7104
  %v7106 = vlaneseq
  %v7107 = vshrl.u32 %v7106, 7
  %v7108 = vsub.s32 %v7105, %v7107
  %v7109 = vrot.slane %v7095, %v7108
  %v7111 = vunpack.c.l.s4 1966171168
  %v7112 = vunpack.c.0.s8 %v7111
  %v7113 = vlaneseq
  %v7114 = vshrl.u32 %v7113, 7
  %v7115 = vsub.s32 %v7112, %v7114
  %v7116 = vrot.slane %v6928, %v7115
  %v7117 = vcombine.low %v7102, %v7109
  %v7119 = vunpack.c.l.s4 1966171168
  %v7120 = vunpack.c.0.s8 %v7119
  %v7121 = vlaneseq
  %v7122 = vshrl.u32 %v7121, 7
  %v7123 = vsub.s32 %v7120, %v7122
  %v7124 = vrot.slane %v7117, %v7123
  %v7126 = vunpack.c.l.s4 1966171168
  %v7127 = vunpack.c.0.s8 %v7126
  %v7128 = vlaneseq
  %v7129 = vshrl.u32 %v7128, 7
  %v7130 = vsub.s32 %v7127, %v7129
  %v7131 = vrot.slane %v7116, %v7130
  %v7132 = vcombine.low %v7124, %v7131
  %v7133 = vcombine.low %v6911, %v6925
  %v7134 = vcombine.low %v6927, %v6929
  %v7136 = vunpack.c.l.s4 1966171168
  %v7137 = vunpack.c.0.s8 %v7136
  %v7138 = vlaneseq
  %v7139 = vshrl.u32 %v7138, 7
  %v7140 = vsub.s32 %v7137, %v7139
  %v7141 = vrot.slane %v7133, %v7140
  %v7143 = vunpack.c.l.s4 1966171168
  %v7144 = vunpack.c.0.s8 %v7143
  %v7145 = vlaneseq
  %v7146 = vshrl.u32 %v7145, 7
  %v7147 = vsub.s32 %v7144, %v7146
  %v7148 = vrot.slane %v7134, %v7147
  %v7150 = vunpack.c.l.s4 1966171168
  %v7151 = vunpack.c.0.s8 %v7150
  %v7152 = vlaneseq
  %v7153 = vshrl.u32 %v7152, 7
  %v7154 = vsub.s32 %v7151, %v7153
  %v7155 = vrot.slane %v6953, %v7154
  %v7156 = vcombine.low %v7141, %v7148
  %v7158 = vunpack.c.l.s4 1966171168
  %v7159 = vunpack.c.0.s8 %v7158
  %v7160 = vlaneseq
  %v7161 = vshrl.u32 %v7160, 7
  %v7162 = vsub.s32 %v7159, %v7161
  %v7163 = vrot.slane %v7156, %v7162
  %v7165 = vunpack.c.l.s4 1966171168
  %v7166 = vunpack.c.0.s8 %v7165
  %v7167 = vlaneseq
  %v7168 = vshrl.u32 %v7167, 7
  %v7169 = vsub.s32 %v7166, %v7168
  %v7170 = vrot.slane %v7155, %v7169
  %v7171 = vcombine.low %v7163, %v7170
  %v7172 = vcombine.low %v6967, %v6975
  %v7173 = vcombine.low %v6976, %v6960
  %v7175 = vunpack.c.l.s4 1966171168
  %v7176 = vunpack.c.0.s8 %v7175
  %v7177 = vlaneseq
  %v7178 = vshrl.u32 %v7177, 7
  %v7179 = vsub.s32 %v7176, %v7178
  %v7180 = vrot.slane %v7172, %v7179
  %v7182 = vunpack.c.l.s4 1966171168
  %v7183 = vunpack.c.0.s8 %v7182
  %v7184 = vlaneseq
  %v7185 = vshrl.u32 %v7184, 7
  %v7186 = vsub.s32 %v7183, %v7185
  %v7187 = vrot.slane %v7173, %v7186
  %v7189 = vunpack.c.l.s4 1966171168
  %v7190 = vunpack.c.0.s8 %v7189
  %v7191 = vlaneseq
  %v7192 = vshrl.u32 %v7191, 7
  %v7193 = vsub.s32 %v7190, %v7192
  %v7194 = vrot.slane %v6974, %v7193
  %v7195 = vcombine.low %v7180, %v7187
  %v7197 = vunpack.c.l.s4 1966171168
  %v7198 = vunpack.c.0.s8 %v7197
  %v7199 = vlaneseq
  %v7200 = vshrl.u32 %v7199, 7
  %v7201 = vsub.s32 %v7198, %v7200
  %v7202 = vrot.slane %v7195, %v7201
  %v7204 = vunpack.c.l.s4 1966171168
  %v7205 = vunpack.c.0.s8 %v7204
  %v7206 = vlaneseq
  %v7207 = vshrl.u32 %v7206, 7
  %v7208 = vsub.s32 %v7205, %v7207
  %v7209 = vrot.slane %v7194, %v7208
  %v7210 = vcombine.low %v7202, %v7209
  %s7217 = scalar_lea.vmem %s3, 144
  %7218 = vst.msk [vmem:[%s7217] sm:$0x1f] %vm1723, %v7015
  %7219 = vst.msk [vmem:[%s7217 + $0x8] sm:$0x1f] %vm1723, %v7054
  %7220 = vst.msk [vmem:[%s7217 + $0x10] sm:$0x1f] %vm1723, %v7093
  %7221 = vst.msk [vmem:[%s7217 + $0x18] sm:$0x1f] %vm1723, %v7132
  %7222 = vst.msk [vmem:[%s7217 + $0x20] sm:$0x1f] %vm1723, %v7171
  %7223 = vst.msk [vmem:[%s7217 + $0x28] sm:$0x1f] %vm1723, %v7210
  // Predicated region
  $region14: #{_phase_ct.1} parent=0 // pred_check
    _
  $region15: #{_phase_ct.1} parent=0 // pred_check_branch
    %7225 = sbr.rel (0) target = $region17
  $region16: #{_phase_ct.1} parent=0 // pred_region
    _
  $region17: #{_phase_ct.1} parent=0 // pred_fallthru
    _
  // Predicated region
  $region18: #{_phase_ct.1} parent=0 // pred_check
    _
  $region19: #{_phase_ct.1} parent=0 // pred_check_branch
    %7227 = sbr.rel (0) target = $region21
  $region20: #{_phase_ct.1} parent=0 // pred_region
    _
  $region21: #{_phase_ct.1} parent=0 // pred_fallthru
    _

</llo_original>
